<compile_context>
chip_gen: v5e
topology: v5e:2x2
jax: 0.10.0
libtpu: 0.0.40
codegen_flags: <defaults>
</compile_context>

<pallas_src>
import functools

import jax
import jax.numpy as jnp
from jax.experimental import pallas as pl
from jax.experimental.pallas import tpu as pltpu

IN_DIM = 32 * 32 * 3   # 3072
HID = 512
OUT_DIM = 10
OUT_PAD = 128          # lane-dense padded output width
DROP_P = 0.5


def _round_up(x, m):
    return ((x + m - 1) // m) * m


def _mlp_kernel(*refs, training: bool):
    if training:
        (x_ref, m1_ref, m2_ref,
         w1_ref, b1_ref, w2_ref, b2_ref, w3_ref, b3_ref, o_ref) = refs
    else:
        (x_ref,
         w1_ref, b1_ref, w2_ref, b2_ref, w3_ref, b3_ref, o_ref) = refs
        m1_ref = m2_ref = None

    # ---- Linear(3072, 512) + ReLU (+ Dropout) ----  bf16 in, f32 accumulate
    h1 = jnp.dot(x_ref[...], w1_ref[...],
                 preferred_element_type=jnp.float32) + b1_ref[...]
    h1 = jnp.maximum(h1, 0.0)
    if training:
        # mask values are {0.0, 2.0} == keep * 1/(1-p); single VPU multiply
        h1 = h1 * m1_ref[...].astype(jnp.float32)
    h1 = h1.astype(jnp.bfloat16)

    # ---- Linear(512, 512) + ReLU (+ Dropout) ----
    h2 = jnp.dot(h1, w2_ref[...],
                 preferred_element_type=jnp.float32) + b2_ref[...]
    h2 = jnp.maximum(h2, 0.0)
    if training:
        h2 = h2 * m2_ref[...].astype(jnp.float32)
    h2 = h2.astype(jnp.bfloat16)

    # ---- Linear(512, 10) (padded to 128 lanes) ----
    o_ref[...] = (jnp.dot(h2, w3_ref[...],
                          preferred_element_type=jnp.float32)
                  + b3_ref[...]).astype(o_ref.dtype)


def mlp_forward(x_nchw, params, *, training: bool = False, rng_key=None):
    """x_nchw: [B, 3, 32, 32] float32 -> logits [B, 10] float32."""
    B = x_nchw.shape[0]
    x_flat = x_nchw.reshape(B, -1).astype(jnp.float32)   # nn.Flatten order

    w1, b1, w2, b2, w3, b3 = params   # w*: bf16 (in,out); b*: f32 (1,out); w3/b3 padded

    # Batch tile: 256 rows for big batches (saturates MXU M dim), otherwise
    # the smallest multiple of 8 covering B.
    TB = min(256, _round_up(B, 8))
    B_pad = _round_up(B, TB)
    if B_pad != B:
        x_flat = jnp.pad(x_flat, ((0, B_pad - B), (0, 0)))
    x_bf = x_flat.astype(jnp.bfloat16)

    grid = (B_pad // TB,)

    x_spec = pl.BlockSpec((TB, IN_DIM), lambda i: (i, 0))
    mask_spec = pl.BlockSpec((TB, HID), lambda i: (i, 0))
    out_spec = pl.BlockSpec((TB, OUT_PAD), lambda i: (i, 0))

    def resident(shape):  # weights/biases: same block every grid step
        return pl.BlockSpec(shape, lambda i: (0, 0))

    w_specs = [resident(w1.shape), resident(b1.shape),
               resident(w2.shape), resident(b2.shape),
               resident(w3.shape), resident(b3.shape)]

    args = [x_bf]
    in_specs = [x_spec]
    if training:
        # TODO(synk): on-chip pltpu.prng_* has no CPU-interpret lowering, so
        # dropout masks are generated host-side; pass a fresh rng_key per step.
        if rng_key is None:
            rng_key = jax.random.PRNGKey(0)
        k1, k2 = jax.random.split(rng_key)
        keep1 = jax.random.bernoulli(k1, 1.0 - DROP_P, (B_pad, HID))
        keep2 = jax.random.bernoulli(k2, 1.0 - DROP_P, (B_pad, HID))
        scale = jnp.bfloat16(1.0 / (1.0 - DROP_P))
        m1 = keep1.astype(jnp.bfloat16) * scale
        m2 = keep2.astype(jnp.bfloat16) * scale
        args += [m1, m2]
        in_specs += [mask_spec, mask_spec]
    args += [w1, b1, w2, b2, w3, b3]
    in_specs += w_specs

    kernel = functools.partial(_mlp_kernel, training=training)

    out_pad = pl.pallas_call(
        kernel,
        out_shape=jax.ShapeDtypeStruct((B_pad, OUT_PAD), jnp.float32),
        grid=grid,
        in_specs=in_specs,
        out_specs=out_spec,
        compiler_params=pltpu.CompilerParams(
            dimension_semantics=("parallel",),
            vmem_limit_bytes=32 << 20,
        ),
    )(*args)

    return out_pad[:B, :OUT_DIM]


def init_params(key):
    """Deterministic init mimicking nn.Linear's uniform(-1/sqrt(fan_in), ...).

    Weights are stored as (in, out) bf16 (kernel computes x @ W); biases are
    f32 (1, out).  The last layer is zero-padded to OUT_PAD columns.
    """
    def linear(k, fan_in, fan_out, pad_to=None):
        kw, kb = jax.random.split(k)
        bound = 1.0 / jnp.sqrt(fan_in)
        w = jax.random.uniform(kw, (fan_in, fan_out), jnp.float32, -bound, bound)
        b = jax.random.uniform(kb, (1, fan_out), jnp.float32, -bound, bound)
        if pad_to is not None and pad_to > fan_out:
            w = jnp.pad(w, ((0, 0), (0, pad_to - fan_out)))
            b = jnp.pad(b, ((0, 0), (0, pad_to - fan_out)))
        return w.astype(jnp.bfloat16), b.astype(jnp.float32)

    k1, k2, k3 = jax.random.split(key, 3)
    w1, b1 = linear(k1, IN_DIM, HID)
    w2, b2 = linear(k2, HID, HID)
    w3, b3 = linear(k3, HID, OUT_DIM, pad_to=OUT_PAD)
    return (w1, b1, w2, b2, w3, b3)


if __name__ == "__main__":
    key = jax.random.PRNGKey(0)
    k_x, k_p, k_d = jax.random.split(key, 3)

    # Small batch of CIFAR-like NCHW inputs.
    x = jax.random.normal(k_x, (2, 3, 32, 32), dtype=jnp.float32)
    params = init_params(k_p)

    # Eval mode (dropout = identity, matches module.eval()).
    logits_eval = mlp_forward(x, params, training=False)
    # Train mode (dropout active, matches module.train()).
    logits_train = mlp_forward(x, params, training=True, rng_key=k_d)

    jax.block_until_ready(logits_eval)
    jax.block_until_ready(logits_train)

    assert logits_eval.shape == (2, 10)
    assert logits_train.shape == (2, 10)
    print("KERNEL_OK")
</pallas_src>

<mosaic_0001>
module attributes {stable_mosaic.version = 11 : i64} {
  func.func @_mlp_kernel(%arg0: i32, %arg1: memref<8x3072xbf16, #tpu.memory_space<vmem>>, %arg2: memref<3072x512xbf16, #tpu.memory_space<vmem>>, %arg3: memref<1x512xf32, #tpu.memory_space<vmem>>, %arg4: memref<512x512xbf16, #tpu.memory_space<vmem>>, %arg5: memref<1x512xf32, #tpu.memory_space<vmem>>, %arg6: memref<512x128xbf16, #tpu.memory_space<vmem>>, %arg7: memref<1x128xf32, #tpu.memory_space<vmem>>, %arg8: memref<8x128xf32, #tpu.memory_space<vmem>>) attributes {dimension_semantics = [#tpu.dimension_semantics<parallel>], iteration_bounds = array<i64: 1>, scalar_prefetch = 0 : i64, scratch_operands = 0 : i64, tpu.core_type = #tpu.core_type<tc>, window_params = [{transform_indices = @transform_0, window_bounds = array<i64: 8, 3072>}, {pipeline_mode = #tpu.pipeline_mode<synchronous>, transform_indices = @transform_1, window_bounds = array<i64: 3072, 512>}, {pipeline_mode = #tpu.pipeline_mode<synchronous>, transform_indices = @transform_2, window_bounds = array<i64: 1, 512>}, {pipeline_mode = #tpu.pipeline_mode<synchronous>, transform_indices = @transform_3, window_bounds = array<i64: 512, 512>}, {pipeline_mode = #tpu.pipeline_mode<synchronous>, transform_indices = @transform_4, window_bounds = array<i64: 1, 512>}, {pipeline_mode = #tpu.pipeline_mode<synchronous>, transform_indices = @transform_5, window_bounds = array<i64: 512, 128>}, {pipeline_mode = #tpu.pipeline_mode<synchronous>, transform_indices = @transform_6, window_bounds = array<i64: 1, 128>}, {transform_indices = @transform_7, window_bounds = array<i64: 8, 128>}]} {
    %c0 = arith.constant 0 : index
    %c0_0 = arith.constant 0 : index
    %0 = vector.load %arg1[%c0, %c0_0] : memref<8x3072xbf16, #tpu.memory_space<vmem>>, vector<8x3072xbf16>
    %c0_1 = arith.constant 0 : index
    %c0_2 = arith.constant 0 : index
    %1 = vector.load %arg2[%c0_1, %c0_2] : memref<3072x512xbf16, #tpu.memory_space<vmem>>, vector<3072x512xbf16>
    %cst = arith.constant dense<0.000000e+00> : vector<8x512xf32>
    %2 = tpu.matmul %0, %1, %cst {dimension_numbers = #tpu.dot_dimension_numbers<[1], [0], [0], [1], [0, 0, 1, 1], [], []>} : vector<8x3072xbf16>, vector<3072x512xbf16>, vector<8x512xf32> -> vector<8x512xf32>
    %c0_3 = arith.constant 0 : index
    %c0_4 = arith.constant 0 : index
    %3 = vector.load %arg3[%c0_3, %c0_4] : memref<1x512xf32, #tpu.memory_space<vmem>>, vector<1x512xf32>
    %4 = vector.broadcast %3 : vector<1x512xf32> to vector<8x512xf32>
    %5 = arith.addf %2, %4 : vector<8x512xf32>
    %cst_5 = arith.constant 0.000000e+00 : f32
    %6 = vector.broadcast %cst_5 : f32 to vector<8x512xf32>
    %7 = arith.maximumf %5, %6 : vector<8x512xf32>
    %8 = arith.truncf %7 : vector<8x512xf32> to vector<8x512xbf16>
    %c0_6 = arith.constant 0 : index
    %c0_7 = arith.constant 0 : index
    %9 = vector.load %arg4[%c0_6, %c0_7] : memref<512x512xbf16, #tpu.memory_space<vmem>>, vector<512x512xbf16>
    %cst_8 = arith.constant dense<0.000000e+00> : vector<8x512xf32>
    %10 = tpu.matmul %8, %9, %cst_8 {dimension_numbers = #tpu.dot_dimension_numbers<[1], [0], [0], [1], [0, 0, 1, 1], [], []>} : vector<8x512xbf16>, vector<512x512xbf16>, vector<8x512xf32> -> vector<8x512xf32>
    %c0_9 = arith.constant 0 : index
    %c0_10 = arith.constant 0 : index
    %11 = vector.load %arg5[%c0_9, %c0_10] : memref<1x512xf32, #tpu.memory_space<vmem>>, vector<1x512xf32>
    %12 = vector.broadcast %11 : vector<1x512xf32> to vector<8x512xf32>
    %13 = arith.addf %10, %12 : vector<8x512xf32>
    %cst_11 = arith.constant 0.000000e+00 : f32
    %14 = vector.broadcast %cst_11 : f32 to vector<8x512xf32>
    %15 = arith.maximumf %13, %14 : vector<8x512xf32>
    %16 = arith.truncf %15 : vector<8x512xf32> to vector<8x512xbf16>
    %c0_12 = arith.constant 0 : index
    %c0_13 = arith.constant 0 : index
    %17 = vector.load %arg6[%c0_12, %c0_13] : memref<512x128xbf16, #tpu.memory_space<vmem>>, vector<512x128xbf16>
    %cst_14 = arith.constant dense<0.000000e+00> : vector<8x128xf32>
    %18 = tpu.matmul %16, %17, %cst_14 {dimension_numbers = #tpu.dot_dimension_numbers<[1], [0], [0], [1], [0, 0, 1, 1], [], []>} : vector<8x512xbf16>, vector<512x128xbf16>, vector<8x128xf32> -> vector<8x128xf32>
    %c0_15 = arith.constant 0 : index
    %c0_16 = arith.constant 0 : index
    %19 = vector.load %arg7[%c0_15, %c0_16] : memref<1x128xf32, #tpu.memory_space<vmem>>, vector<1x128xf32>
    %20 = vector.broadcast %19 : vector<1x128xf32> to vector<8x128xf32>
    %21 = arith.addf %18, %20 : vector<8x128xf32>
    %c0_17 = arith.constant 0 : index
    %c0_18 = arith.constant 0 : index
    %22 = vector.load %arg8[%c0_17, %c0_18] : memref<8x128xf32, #tpu.memory_space<vmem>>, vector<8x128xf32>
    tpu.vector_store %arg8[%c0_17, %c0_18], %21 {strides = array<i32>} : memref<8x128xf32, #tpu.memory_space<vmem>>, vector<8x128xf32>,
    return
  }
  func.func @transform_0(%arg0: i32) -> (i32, i32) {
    %c0_i32 = arith.constant 0 : i32
    %c0_i32_0 = arith.constant 0 : i32
    return %arg0, %c0_i32 : i32, i32
  }
  func.func @transform_1(%arg0: i32) -> (i32, i32) {
    %c0_i32 = arith.constant 0 : i32
    %c0_i32_0 = arith.constant 0 : i32
    %c0_i32_1 = arith.constant 0 : i32
    return %c0_i32, %c0_i32_0 : i32, i32
  }
  func.func @transform_2(%arg0: i32) -> (i32, i32) {
    %c0_i32 = arith.constant 0 : i32
    %c0_i32_0 = arith.constant 0 : i32
    %c0_i32_1 = arith.constant 0 : i32
    return %c0_i32, %c0_i32_0 : i32, i32
  }
  func.func @transform_3(%arg0: i32) -> (i32, i32) {
    %c0_i32 = arith.constant 0 : i32
    %c0_i32_0 = arith.constant 0 : i32
    %c0_i32_1 = arith.constant 0 : i32
    return %c0_i32, %c0_i32_0 : i32, i32
  }
  func.func @transform_4(%arg0: i32) -> (i32, i32) {
    %c0_i32 = arith.constant 0 : i32
    %c0_i32_0 = arith.constant 0 : i32
    %c0_i32_1 = arith.constant 0 : i32
    return %c0_i32, %c0_i32_0 : i32, i32
  }
  func.func @transform_5(%arg0: i32) -> (i32, i32) {
    %c0_i32 = arith.constant 0 : i32
    %c0_i32_0 = arith.constant 0 : i32
    %c0_i32_1 = arith.constant 0 : i32
    return %c0_i32, %c0_i32_0 : i32, i32
  }
  func.func @transform_6(%arg0: i32) -> (i32, i32) {
    %c0_i32 = arith.constant 0 : i32
    %c0_i32_0 = arith.constant 0 : i32
    %c0_i32_1 = arith.constant 0 : i32
    return %c0_i32, %c0_i32_0 : i32, i32
  }
  func.func @transform_7(%arg0: i32) -> (i32, i32) {
    %c0_i32 = arith.constant 0 : i32
    %c0_i32_0 = arith.constant 0 : i32
    return %arg0, %c0_i32 : i32, i32
  }
}

</mosaic_0001>

<llo_original>
// kernel: tpu_custom_call.1
$region0: #{tpu_custom_call.1}
  #allocation0 [shape = 'u32[]', space=smem, size = 0x4, offset = 0x4, fixed_abs, tag = 'smem constant byte address 0x4 - core index']
  #allocation1 [shape = 'u32[72,128]{1,0:T(1,128)}', space=vmem, size = 0x9000, scoped, tag = 'internal scratch']
  %s0 = inlined_call_operand.hbm [shape: bf16[8,3072], index: 0, kind: input, shape index: {}]
  %s1 = inlined_call_operand.hbm [shape: bf16[3072,512], index: 1, kind: input, shape index: {}]
  %s2 = inlined_call_operand.hbm [shape: f32[1,512], index: 2, kind: input, shape index: {}]
  %s3 = inlined_call_operand.hbm [shape: bf16[512,512], index: 3, kind: input, shape index: {}]
  %s4 = inlined_call_operand.hbm [shape: f32[1,512], index: 4, kind: input, shape index: {}]
  %s5 = inlined_call_operand.hbm [shape: bf16[512,128], index: 5, kind: input, shape index: {}]
  %s6 = inlined_call_operand.hbm [shape: f32[1,128], index: 6, kind: input, shape index: {}]
  %s7 = inlined_call_operand.hbm [shape: f32[8,128], index: 7, kind: output, shape index: {}]
  %s8 = sld [smem:[#allocation0]]
  $region66: #{tpu_custom_call.1} parent=0
    _
  %s10 = ssub.s32 1, %s8
  %s11 = scalar_select 0, %s10, %s8
  $region1: #{tpu_custom_call.1} parent=0
    #allocation2 [shape = 'u8[49152]{0}', space=vmem, size = 0xc000, scoped, tag = 'input window, operand 0, single buffered']
    #allocation3 [shape = 's32[1]{0}', space=sflag, size = 0x4, scoped, tag = 'scoped memory for tpu_custom_call.1']
    #allocation4 [shape = 's32[1]{0}', space=sflag, size = 0x4, scoped, tag = 'scoped memory for tpu_custom_call.1']
    #allocation5 [shape = 'u8[3145728]{0}', space=vmem, size = 0x300000, scoped, tag = 'input window, operand 1, single buffered']
    #allocation6 [shape = 's32[1]{0}', space=sflag, size = 0x4, scoped, tag = 'scoped memory for tpu_custom_call.1']
    #allocation7 [shape = 'u8[2048]{0}', space=vmem, size = 0x800, scoped, tag = 'input window, operand 2, single buffered']
    #allocation8 [shape = 'u8[524288]{0}', space=vmem, size = 0x80000, scoped, tag = 'input window, operand 3, single buffered']
    #allocation9 [shape = 's32[1]{0}', space=sflag, size = 0x4, scoped, tag = 'scoped memory for tpu_custom_call.1']
    #allocation10 [shape = 'u8[2048]{0}', space=vmem, size = 0x800, scoped, tag = 'input window, operand 4, single buffered']
    #allocation11 [shape = 'u8[131072]{0}', space=vmem, size = 0x20000, scoped, tag = 'input window, operand 5, single buffered']
    #allocation12 [shape = 's32[1]{0}', space=sflag, size = 0x4, scoped, tag = 'scoped memory for tpu_custom_call.1']
    #allocation13 [shape = 'u8[512]{0}', space=vmem, size = 0x400, scoped, tag = 'input window, operand 6, single buffered']
    #allocation14 [shape = 'u8[4096]{0}', space=vmem, size = 0x1000, scoped, tag = 'output window, operand 0, single buffered']
    %12 = vsyncpa [#allocation3], 0
    %13 = vsyncpa [#allocation6], 0
    %14 = vsyncpa [#allocation9], 0
    %15 = vsyncpa [#allocation12], 0
    %16 = vsyncpa [#allocation4], 0
    // Predicated region
    $region2: #{tpu_custom_call.1} parent=1 // pred_check
      _
    $region3: #{tpu_custom_call.1} parent=1 // pred_check_branch
      %18 = sbr.rel (0) target = $region5
    $region4: #{tpu_custom_call.1} parent=1 // pred_region
      %20 = vsyncadd [#allocation3], 0
      %s22 = sshll.u32 %s0, 4
      %s23 = int_to_ptr.hbm [resolvable:$true] %s22
      %s24 = sshll.u32 [#allocation2], 4
      %s25 = int_to_ptr.vmem [resolvable:$true] %s24
      %27 = dma.hbm_to_vmem [thread:$0]  %s23, 1536, %s25, [#allocation3]
    $region5: #{tpu_custom_call.1} parent=1 // pred_fallthru
      _
    // Predicated region
    $region6: #{tpu_custom_call.1} parent=1 // pred_check
      _
    $region7: #{tpu_custom_call.1} parent=1 // pred_check_branch
      %29 = sbr.rel (0) target = $region9
    $region8: #{tpu_custom_call.1} parent=1 // pred_region
      %31 = vsyncadd [#allocation6], 0
      %s32 = sshll.u32 %s1, 4
      %s33 = int_to_ptr.hbm [resolvable:$true] %s32
      %s34 = sshll.u32 [#allocation5], 4
      %s35 = int_to_ptr.vmem [resolvable:$true] %s34
      %40 = dma.hbm_to_vmem [thread:$0]  %s33, 98304, %s35, [#allocation6], 256, 256, 16
    $region9: #{tpu_custom_call.1} parent=1 // pred_fallthru
      _
    // Predicated region
    $region10: #{tpu_custom_call.1} parent=1 // pred_check
      _
    $region11: #{tpu_custom_call.1} parent=1 // pred_check_branch
      %42 = sbr.rel (0) target = $region13
    $region12: #{tpu_custom_call.1} parent=1 // pred_region
      %44 = vsyncadd [#allocation6], 0
      %s46 = sshll.u32 %s2, 4
      %s47 = int_to_ptr.hbm [resolvable:$true] %s46
      %s48 = sshll.u32 [#allocation7], 4
      %s49 = int_to_ptr.vmem [resolvable:$true] %s48
      %51 = dma.hbm_to_vmem [thread:$0]  %s47, 64, %s49, [#allocation6]
    $region13: #{tpu_custom_call.1} parent=1 // pred_fallthru
      _
    // Predicated region
    $region14: #{tpu_custom_call.1} parent=1 // pred_check
      _
    $region15: #{tpu_custom_call.1} parent=1 // pred_check_branch
      %53 = sbr.rel (0) target = $region17
    $region16: #{tpu_custom_call.1} parent=1 // pred_region
      %55 = vsyncadd [#allocation9], 0
      %s56 = sshll.u32 %s3, 4
      %s57 = int_to_ptr.hbm [resolvable:$true] %s56
      %s58 = sshll.u32 [#allocation8], 4
      %s59 = int_to_ptr.vmem [resolvable:$true] %s58
      %64 = dma.hbm_to_vmem [thread:$0]  %s57, 16384, %s59, [#allocation9], 256, 256, 16
    $region17: #{tpu_custom_call.1} parent=1 // pred_fallthru
      _
    // Predicated region
    $region18: #{tpu_custom_call.1} parent=1 // pred_check
      _
    $region19: #{tpu_custom_call.1} parent=1 // pred_check_branch
      %66 = sbr.rel (0) target = $region21
    $region20: #{tpu_custom_call.1} parent=1 // pred_region
      %68 = vsyncadd [#allocation9], 0
      %s70 = sshll.u32 %s4, 4
      %s71 = int_to_ptr.hbm [resolvable:$true] %s70
      %s72 = sshll.u32 [#allocation10], 4
      %s73 = int_to_ptr.vmem [resolvable:$true] %s72
      %75 = dma.hbm_to_vmem [thread:$0]  %s71, 64, %s73, [#allocation9]
    $region21: #{tpu_custom_call.1} parent=1 // pred_fallthru
      _
    // Predicated region
    $region22: #{tpu_custom_call.1} parent=1 // pred_check
      _
    $region23: #{tpu_custom_call.1} parent=1 // pred_check_branch
      %77 = sbr.rel (0) target = $region25
    $region24: #{tpu_custom_call.1} parent=1 // pred_region
      %79 = vsyncadd [#allocation12], 0
      %s80 = sshll.u32 %s5, 4
      %s81 = int_to_ptr.hbm [resolvable:$true] %s80
      %s82 = sshll.u32 [#allocation11], 4
      %s83 = int_to_ptr.vmem [resolvable:$true] %s82
      %88 = dma.hbm_to_vmem [thread:$0]  %s81, 4096, %s83, [#allocation12], 64, 64, 4
    $region25: #{tpu_custom_call.1} parent=1 // pred_fallthru
      _
    // Predicated region
    $region26: #{tpu_custom_call.1} parent=1 // pred_check
      _
    $region27: #{tpu_custom_call.1} parent=1 // pred_check_branch
      %90 = sbr.rel (0) target = $region29
    $region28: #{tpu_custom_call.1} parent=1 // pred_region
      %92 = vsyncadd [#allocation12], 0
      %s94 = sshll.u32 %s6, 4
      %s95 = int_to_ptr.hbm [resolvable:$true] %s94
      %s96 = sshll.u32 [#allocation13], 4
      %s97 = int_to_ptr.vmem [resolvable:$true] %s96
      %99 = dma.hbm_to_vmem [thread:$0]  %s95, 16, %s97, [#allocation12]
    $region29: #{tpu_custom_call.1} parent=1 // pred_fallthru
      _
    // Predicated region
    $region30: #{tpu_custom_call.1} parent=1 // pred_check
      _
    $region31: #{tpu_custom_call.1} parent=1 // pred_check_branch
      %101 = sbr.rel (0) target = $region33
    $region32: #{tpu_custom_call.1} parent=1 // pred_region
      %103 = dma.done [#allocation3], 1536
    $region33: #{tpu_custom_call.1} parent=1 // pred_fallthru
      _
    // Predicated region
    $region34: #{tpu_custom_call.1} parent=1 // pred_check
      _
    $region35: #{tpu_custom_call.1} parent=1 // pred_check_branch
      %105 = sbr.rel (0) target = $region37
    $region36: #{tpu_custom_call.1} parent=1 // pred_region
      %107 = dma.done [#allocation6], 98304
    $region37: #{tpu_custom_call.1} parent=1 // pred_fallthru
      _
    // Predicated region
    $region38: #{tpu_custom_call.1} parent=1 // pred_check
      _
    $region39: #{tpu_custom_call.1} parent=1 // pred_check_branch
      %109 = sbr.rel (0) target = $region41
    $region40: #{tpu_custom_call.1} parent=1 // pred_region
      %111 = dma.done [#allocation6], 64
    $region41: #{tpu_custom_call.1} parent=1 // pred_fallthru
      _
    // Predicated region
    $region42: #{tpu_custom_call.1} parent=1 // pred_check
      _
    $region43: #{tpu_custom_call.1} parent=1 // pred_check_branch
      %113 = sbr.rel (0) target = $region45
    $region44: #{tpu_custom_call.1} parent=1 // pred_region
      %115 = dma.done [#allocation9], 16384
    $region45: #{tpu_custom_call.1} parent=1 // pred_fallthru
      _
    // Predicated region
    $region46: #{tpu_custom_call.1} parent=1 // pred_check
      _
    $region47: #{tpu_custom_call.1} parent=1 // pred_check_branch
      %117 = sbr.rel (0) target = $region49
    $region48: #{tpu_custom_call.1} parent=1 // pred_region
      %119 = dma.done [#allocation9], 64
    $region49: #{tpu_custom_call.1} parent=1 // pred_fallthru
      _
    // Predicated region
    $region50: #{tpu_custom_call.1} parent=1 // pred_check
      _
    $region51: #{tpu_custom_call.1} parent=1 // pred_check_branch
      %121 = sbr.rel (0) target = $region53
    $region52: #{tpu_custom_call.1} parent=1 // pred_region
      %123 = dma.done [#allocation12], 4096
    $region53: #{tpu_custom_call.1} parent=1 // pred_fallthru
      _
    // Predicated region
    $region54: #{tpu_custom_call.1} parent=1 // pred_check
      _
    $region55: #{tpu_custom_call.1} parent=1 // pred_check_branch
      %125 = sbr.rel (0) target = $region57
    $region56: #{tpu_custom_call.1} parent=1 // pred_region
      %127 = dma.done [#allocation12], 16
    $region57: #{tpu_custom_call.1} parent=1 // pred_fallthru
      _
    %v128 = vld [vmem:[#allocation2] sm:$0xff]
    %v129 = vld [vmem:[#allocation2 + $0x8] sm:$0xff]
    %v130 = vld [vmem:[#allocation2 + $0x10] sm:$0xff]
    %v131 = vld [vmem:[#allocation2 + $0x18] sm:$0xff]
    %v132 = vld [vmem:[#allocation2 + $0x20] sm:$0xff]
    %v133 = vld [vmem:[#allocation2 + $0x28] sm:$0xff]
    %v134 = vld [vmem:[#allocation2 + $0x30] sm:$0xff]
    %v135 = vld [vmem:[#allocation2 + $0x38] sm:$0xff]
    %v136 = vld [vmem:[#allocation2 + $0x40] sm:$0xff]
    %v137 = vld [vmem:[#allocation2 + $0x48] sm:$0xff]
    %v138 = vld [vmem:[#allocation2 + $0x50] sm:$0xff]
    %v139 = vld [vmem:[#allocation2 + $0x58] sm:$0xff]
    %v140 = vld [vmem:[#allocation5] sm:$0xff]
    %v141 = vld [vmem:[#allocation5 + $0x8] sm:$0xff]
    %v142 = vld [vmem:[#allocation5 + $0x10] sm:$0xff]
    %v143 = vld [vmem:[#allocation5 + $0x18] sm:$0xff]
    %v144 = vld [vmem:[#allocation5 + $0x20] sm:$0xff]
    %v145 = vld [vmem:[#allocation5 + $0x28] sm:$0xff]
    %v146 = vld [vmem:[#allocation5 + $0x30] sm:$0xff]
    %v147 = vld [vmem:[#allocation5 + $0x38] sm:$0xff]
    %v148 = vld [vmem:[#allocation5 + $0x40] sm:$0xff]
    %v149 = vld [vmem:[#allocation5 + $0x48] sm:$0xff]
    %v150 = vld [vmem:[#allocation5 + $0x50] sm:$0xff]
    %v151 = vld [vmem:[#allocation5 + $0x58] sm:$0xff]
    %v152 = vld [vmem:[#allocation5 + $0x60] sm:$0xff]
    %v153 = vld [vmem:[#allocation5 + $0x68] sm:$0xff]
    %v154 = vld [vmem:[#allocation5 + $0x70] sm:$0xff]
    %v155 = vld [vmem:[#allocation5 + $0x78] sm:$0xff]
    %v156 = vld [vmem:[#allocation5 + $0x80] sm:$0xff]
    %v157 = vld [vmem:[#allocation5 + $0x88] sm:$0xff]
    %v158 = vld [vmem:[#allocation5 + $0x90] sm:$0xff]
    %v159 = vld [vmem:[#allocation5 + $0x98] sm:$0xff]
    %v160 = vld [vmem:[#allocation5 + $0xa0] sm:$0xff]
    %v161 = vld [vmem:[#allocation5 + $0xa8] sm:$0xff]
    %v162 = vld [vmem:[#allocation5 + $0xb0] sm:$0xff]
    %v163 = vld [vmem:[#allocation5 + $0xb8] sm:$0xff]
    %v164 = vld [vmem:[#allocation5 + $0xc0] sm:$0xff]
    %v165 = vld [vmem:[#allocation5 + $0xc8] sm:$0xff]
    %v166 = vld [vmem:[#allocation5 + $0xd0] sm:$0xff]
    %v167 = vld [vmem:[#allocation5 + $0xd8] sm:$0xff]
    %v168 = vld [vmem:[#allocation5 + $0xe0] sm:$0xff]
    %v169 = vld [vmem:[#allocation5 + $0xe8] sm:$0xff]
    %v170 = vld [vmem:[#allocation5 + $0xf0] sm:$0xff]
    %v171 = vld [vmem:[#allocation5 + $0xf8] sm:$0xff]
    %v172 = vld [vmem:[#allocation5 + $0x100] sm:$0xff]
    %v173 = vld [vmem:[#allocation5 + $0x108] sm:$0xff]
    %v174 = vld [vmem:[#allocation5 + $0x110] sm:$0xff]
    %v175 = vld [vmem:[#allocation5 + $0x118] sm:$0xff]
    %v176 = vld [vmem:[#allocation5 + $0x120] sm:$0xff]
    %v177 = vld [vmem:[#allocation5 + $0x128] sm:$0xff]
    %v178 = vld [vmem:[#allocation5 + $0x130] sm:$0xff]
    %v179 = vld [vmem:[#allocation5 + $0x138] sm:$0xff]
    %v180 = vld [vmem:[#allocation5 + $0x140] sm:$0xff]
    %v181 = vld [vmem:[#allocation5 + $0x148] sm:$0xff]
    %v182 = vld [vmem:[#allocation5 + $0x150] sm:$0xff]
    %v183 = vld [vmem:[#allocation5 + $0x158] sm:$0xff]
    %v184 = vld [vmem:[#allocation5 + $0x160] sm:$0xff]
    %v185 = vld [vmem:[#allocation5 + $0x168] sm:$0xff]
    %v186 = vld [vmem:[#allocation5 + $0x170] sm:$0xff]
    %v187 = vld [vmem:[#allocation5 + $0x178] sm:$0xff]
    %v188 = vld [vmem:[#allocation5 + $0x180] sm:$0xff]
    %v189 = vld [vmem:[#allocation5 + $0x188] sm:$0xff]
    %v190 = vld [vmem:[#allocation5 + $0x190] sm:$0xff]
    %v191 = vld [vmem:[#allocation5 + $0x198] sm:$0xff]
    %v192 = vld [vmem:[#allocation5 + $0x1a0] sm:$0xff]
    %v193 = vld [vmem:[#allocation5 + $0x1a8] sm:$0xff]
    %v194 = vld [vmem:[#allocation5 + $0x1b0] sm:$0xff]
    %v195 = vld [vmem:[#allocation5 + $0x1b8] sm:$0xff]
    %v196 = vld [vmem:[#allocation5 + $0x1c0] sm:$0xff]
    %v197 = vld [vmem:[#allocation5 + $0x1c8] sm:$0xff]
    %v198 = vld [vmem:[#allocation5 + $0x1d0] sm:$0xff]
    %v199 = vld [vmem:[#allocation5 + $0x1d8] sm:$0xff]
    %v200 = vld [vmem:[#allocation5 + $0x1e0] sm:$0xff]
    %v201 = vld [vmem:[#allocation5 + $0x1e8] sm:$0xff]
    %v202 = vld [vmem:[#allocation5 + $0x1f0] sm:$0xff]
    %v203 = vld [vmem:[#allocation5 + $0x1f8] sm:$0xff]
    %v204 = vld [vmem:[#allocation5 + $0x200] sm:$0xff]
    %v205 = vld [vmem:[#allocation5 + $0x208] sm:$0xff]
    %v206 = vld [vmem:[#allocation5 + $0x210] sm:$0xff]
    %v207 = vld [vmem:[#allocation5 + $0x218] sm:$0xff]
    %v208 = vld [vmem:[#allocation5 + $0x220] sm:$0xff]
    %v209 = vld [vmem:[#allocation5 + $0x228] sm:$0xff]
    %v210 = vld [vmem:[#allocation5 + $0x230] sm:$0xff]
    %v211 = vld [vmem:[#allocation5 + $0x238] sm:$0xff]
    %v212 = vld [vmem:[#allocation5 + $0x240] sm:$0xff]
    %v213 = vld [vmem:[#allocation5 + $0x248] sm:$0xff]
    %v214 = vld [vmem:[#allocation5 + $0x250] sm:$0xff]
    %v215 = vld [vmem:[#allocation5 + $0x258] sm:$0xff]
    %v216 = vld [vmem:[#allocation5 + $0x260] sm:$0xff]
    %v217 = vld [vmem:[#allocation5 + $0x268] sm:$0xff]
    %v218 = vld [vmem:[#allocation5 + $0x270] sm:$0xff]
    %v219 = vld [vmem:[#allocation5 + $0x278] sm:$0xff]
    %v220 = vld [vmem:[#allocation5 + $0x280] sm:$0xff]
    %v221 = vld [vmem:[#allocation5 + $0x288] sm:$0xff]
    %v222 = vld [vmem:[#allocation5 + $0x290] sm:$0xff]
    %v223 = vld [vmem:[#allocation5 + $0x298] sm:$0xff]
    %v224 = vld [vmem:[#allocation5 + $0x2a0] sm:$0xff]
    %v225 = vld [vmem:[#allocation5 + $0x2a8] sm:$0xff]
    %v226 = vld [vmem:[#allocation5 + $0x2b0] sm:$0xff]
    %v227 = vld [vmem:[#allocation5 + $0x2b8] sm:$0xff]
    %v228 = vld [vmem:[#allocation5 + $0x2c0] sm:$0xff]
    %v229 = vld [vmem:[#allocation5 + $0x2c8] sm:$0xff]
    %v230 = vld [vmem:[#allocation5 + $0x2d0] sm:$0xff]
    %v231 = vld [vmem:[#allocation5 + $0x2d8] sm:$0xff]
    %v232 = vld [vmem:[#allocation5 + $0x2e0] sm:$0xff]
    %v233 = vld [vmem:[#allocation5 + $0x2e8] sm:$0xff]
    %v234 = vld [vmem:[#allocation5 + $0x2f0] sm:$0xff]
    %v235 = vld [vmem:[#allocation5 + $0x2f8] sm:$0xff]
    %v236 = vld [vmem:[#allocation5 + $0x300] sm:$0xff]
    %v237 = vld [vmem:[#allocation5 + $0x308] sm:$0xff]
    %v238 = vld [vmem:[#allocation5 + $0x310] sm:$0xff]
    %v239 = vld [vmem:[#allocation5 + $0x318] sm:$0xff]
    %v240 = vld [vmem:[#allocation5 + $0x320] sm:$0xff]
    %v241 = vld [vmem:[#allocation5 + $0x328] sm:$0xff]
    %v242 = vld [vmem:[#allocation5 + $0x330] sm:$0xff]
    %v243 = vld [vmem:[#allocation5 + $0x338] sm:$0xff]
    %v244 = vld [vmem:[#allocation5 + $0x340] sm:$0xff]
    %v245 = vld [vmem:[#allocation5 + $0x348] sm:$0xff]
    %v246 = vld [vmem:[#allocation5 + $0x350] sm:$0xff]
    %v247 = vld [vmem:[#allocation5 + $0x358] sm:$0xff]
    %v248 = vld [vmem:[#allocation5 + $0x360] sm:$0xff]
    %v249 = vld [vmem:[#allocation5 + $0x368] sm:$0xff]
    %v250 = vld [vmem:[#allocation5 + $0x370] sm:$0xff]
    %v251 = vld [vmem:[#allocation5 + $0x378] sm:$0xff]
    %v252 = vld [vmem:[#allocation5 + $0x380] sm:$0xff]
    %v253 = vld [vmem:[#allocation5 + $0x388] sm:$0xff]
    %v254 = vld [vmem:[#allocation5 + $0x390] sm:$0xff]
    %v255 = vld [vmem:[#allocation5 + $0x398] sm:$0xff]
    %v256 = vld [vmem:[#allocation5 + $0x3a0] sm:$0xff]
    %v257 = vld [vmem:[#allocation5 + $0x3a8] sm:$0xff]
    %v258 = vld [vmem:[#allocation5 + $0x3b0] sm:$0xff]
    %v259 = vld [vmem:[#allocation5 + $0x3b8] sm:$0xff]
    %v260 = vld [vmem:[#allocation5 + $0x3c0] sm:$0xff]
    %v261 = vld [vmem:[#allocation5 + $0x3c8] sm:$0xff]
    %v262 = vld [vmem:[#allocation5 + $0x3d0] sm:$0xff]
    %v263 = vld [vmem:[#allocation5 + $0x3d8] sm:$0xff]
    %v264 = vld [vmem:[#allocation5 + $0x3e0] sm:$0xff]
    %v265 = vld [vmem:[#allocation5 + $0x3e8] sm:$0xff]
    %v266 = vld [vmem:[#allocation5 + $0x3f0] sm:$0xff]
    %v267 = vld [vmem:[#allocation5 + $0x3f8] sm:$0xff]
    %v268 = vld [vmem:[#allocation5 + $0x400] sm:$0xff]
    %v269 = vld [vmem:[#allocation5 + $0x408] sm:$0xff]
    %v270 = vld [vmem:[#allocation5 + $0x410] sm:$0xff]
    %v271 = vld [vmem:[#allocation5 + $0x418] sm:$0xff]
    %v272 = vld [vmem:[#allocation5 + $0x420] sm:$0xff]
    %v273 = vld [vmem:[#allocation5 + $0x428] sm:$0xff]
    %v274 = vld [vmem:[#allocation5 + $0x430] sm:$0xff]
    %v275 = vld [vmem:[#allocation5 + $0x438] sm:$0xff]
    %v276 = vld [vmem:[#allocation5 + $0x440] sm:$0xff]
    %v277 = vld [vmem:[#allocation5 + $0x448] sm:$0xff]
    %v278 = vld [vmem:[#allocation5 + $0x450] sm:$0xff]
    %v279 = vld [vmem:[#allocation5 + $0x458] sm:$0xff]
    %v280 = vld [vmem:[#allocation5 + $0x460] sm:$0xff]
    %v281 = vld [vmem:[#allocation5 + $0x468] sm:$0xff]
    %v282 = vld [vmem:[#allocation5 + $0x470] sm:$0xff]
    %v283 = vld [vmem:[#allocation5 + $0x478] sm:$0xff]
    %v284 = vld [vmem:[#allocation5 + $0x480] sm:$0xff]
    %v285 = vld [vmem:[#allocation5 + $0x488] sm:$0xff]
    %v286 = vld [vmem:[#allocation5 + $0x490] sm:$0xff]
    %v287 = vld [vmem:[#allocation5 + $0x498] sm:$0xff]
    %v288 = vld [vmem:[#allocation5 + $0x4a0] sm:$0xff]
    %v289 = vld [vmem:[#allocation5 + $0x4a8] sm:$0xff]
    %v290 = vld [vmem:[#allocation5 + $0x4b0] sm:$0xff]
    %v291 = vld [vmem:[#allocation5 + $0x4b8] sm:$0xff]
    %v292 = vld [vmem:[#allocation5 + $0x4c0] sm:$0xff]
    %v293 = vld [vmem:[#allocation5 + $0x4c8] sm:$0xff]
    %v294 = vld [vmem:[#allocation5 + $0x4d0] sm:$0xff]
    %v295 = vld [vmem:[#allocation5 + $0x4d8] sm:$0xff]
    %v296 = vld [vmem:[#allocation5 + $0x4e0] sm:$0xff]
    %v297 = vld [vmem:[#allocation5 + $0x4e8] sm:$0xff]
    %v298 = vld [vmem:[#allocation5 + $0x4f0] sm:$0xff]
    %v299 = vld [vmem:[#allocation5 + $0x4f8] sm:$0xff]
    %v300 = vld [vmem:[#allocation5 + $0x500] sm:$0xff]
    %v301 = vld [vmem:[#allocation5 + $0x508] sm:$0xff]
    %v302 = vld [vmem:[#allocation5 + $0x510] sm:$0xff]
    %v303 = vld [vmem:[#allocation5 + $0x518] sm:$0xff]
    %v304 = vld [vmem:[#allocation5 + $0x520] sm:$0xff]
    %v305 = vld [vmem:[#allocation5 + $0x528] sm:$0xff]
    %v306 = vld [vmem:[#allocation5 + $0x530] sm:$0xff]
    %v307 = vld [vmem:[#allocation5 + $0x538] sm:$0xff]
    %v308 = vld [vmem:[#allocation5 + $0x540] sm:$0xff]
    %v309 = vld [vmem:[#allocation5 + $0x548] sm:$0xff]
    %v310 = vld [vmem:[#allocation5 + $0x550] sm:$0xff]
    %v311 = vld [vmem:[#allocation5 + $0x558] sm:$0xff]
    %v312 = vld [vmem:[#allocation5 + $0x560] sm:$0xff]
    %v313 = vld [vmem:[#allocation5 + $0x568] sm:$0xff]
    %v314 = vld [vmem:[#allocation5 + $0x570] sm:$0xff]
    %v315 = vld [vmem:[#allocation5 + $0x578] sm:$0xff]
    %v316 = vld [vmem:[#allocation5 + $0x580] sm:$0xff]
    %v317 = vld [vmem:[#allocation5 + $0x588] sm:$0xff]
    %v318 = vld [vmem:[#allocation5 + $0x590] sm:$0xff]
    %v319 = vld [vmem:[#allocation5 + $0x598] sm:$0xff]
    %v320 = vld [vmem:[#allocation5 + $0x5a0] sm:$0xff]
    %v321 = vld [vmem:[#allocation5 + $0x5a8] sm:$0xff]
    %v322 = vld [vmem:[#allocation5 + $0x5b0] sm:$0xff]
    %v323 = vld [vmem:[#allocation5 + $0x5b8] sm:$0xff]
    %v324 = vld [vmem:[#allocation5 + $0x5c0] sm:$0xff]
    %v325 = vld [vmem:[#allocation5 + $0x5c8] sm:$0xff]
    %v326 = vld [vmem:[#allocation5 + $0x5d0] sm:$0xff]
    %v327 = vld [vmem:[#allocation5 + $0x5d8] sm:$0xff]
    %v328 = vld [vmem:[#allocation5 + $0x5e0] sm:$0xff]
    %v329 = vld [vmem:[#allocation5 + $0x5e8] sm:$0xff]
    %v330 = vld [vmem:[#allocation5 + $0x5f0] sm:$0xff]
    %v331 = vld [vmem:[#allocation5 + $0x5f8] sm:$0xff]
    %v332 = vld [vmem:[#allocation5 + $0x600] sm:$0xff]
    %v333 = vld [vmem:[#allocation5 + $0x608] sm:$0xff]
    %v334 = vld [vmem:[#allocation5 + $0x610] sm:$0xff]
    %v335 = vld [vmem:[#allocation5 + $0x618] sm:$0xff]
    %v336 = vld [vmem:[#allocation5 + $0x620] sm:$0xff]
    %v337 = vld [vmem:[#allocation5 + $0x628] sm:$0xff]
    %v338 = vld [vmem:[#allocation5 + $0x630] sm:$0xff]
    %v339 = vld [vmem:[#allocation5 + $0x638] sm:$0xff]
    %v340 = vld [vmem:[#allocation5 + $0x640] sm:$0xff]
    %v341 = vld [vmem:[#allocation5 + $0x648] sm:$0xff]
    %v342 = vld [vmem:[#allocation5 + $0x650] sm:$0xff]
    %v343 = vld [vmem:[#allocation5 + $0x658] sm:$0xff]
    %v344 = vld [vmem:[#allocation5 + $0x660] sm:$0xff]
    %v345 = vld [vmem:[#allocation5 + $0x668] sm:$0xff]
    %v346 = vld [vmem:[#allocation5 + $0x670] sm:$0xff]
    %v347 = vld [vmem:[#allocation5 + $0x678] sm:$0xff]
    %v348 = vld [vmem:[#allocation5 + $0x680] sm:$0xff]
    %v349 = vld [vmem:[#allocation5 + $0x688] sm:$0xff]
    %v350 = vld [vmem:[#allocation5 + $0x690] sm:$0xff]
    %v351 = vld [vmem:[#allocation5 + $0x698] sm:$0xff]
    %v352 = vld [vmem:[#allocation5 + $0x6a0] sm:$0xff]
    %v353 = vld [vmem:[#allocation5 + $0x6a8] sm:$0xff]
    %v354 = vld [vmem:[#allocation5 + $0x6b0] sm:$0xff]
    %v355 = vld [vmem:[#allocation5 + $0x6b8] sm:$0xff]
    %v356 = vld [vmem:[#allocation5 + $0x6c0] sm:$0xff]
    %v357 = vld [vmem:[#allocation5 + $0x6c8] sm:$0xff]
    %v358 = vld [vmem:[#allocation5 + $0x6d0] sm:$0xff]
    %v359 = vld [vmem:[#allocation5 + $0x6d8] sm:$0xff]
    %v360 = vld [vmem:[#allocation5 + $0x6e0] sm:$0xff]
    %v361 = vld [vmem:[#allocation5 + $0x6e8] sm:$0xff]
    %v362 = vld [vmem:[#allocation5 + $0x6f0] sm:$0xff]
    %v363 = vld [vmem:[#allocation5 + $0x6f8] sm:$0xff]
    %v364 = vld [vmem:[#allocation5 + $0x700] sm:$0xff]
    %v365 = vld [vmem:[#allocation5 + $0x708] sm:$0xff]
    %v366 = vld [vmem:[#allocation5 + $0x710] sm:$0xff]
    %v367 = vld [vmem:[#allocation5 + $0x718] sm:$0xff]
    %v368 = vld [vmem:[#allocation5 + $0x720] sm:$0xff]
    %v369 = vld [vmem:[#allocation5 + $0x728] sm:$0xff]
    %v370 = vld [vmem:[#allocation5 + $0x730] sm:$0xff]
    %v371 = vld [vmem:[#allocation5 + $0x738] sm:$0xff]
    %v372 = vld [vmem:[#allocation5 + $0x740] sm:$0xff]
    %v373 = vld [vmem:[#allocation5 + $0x748] sm:$0xff]
    %v374 = vld [vmem:[#allocation5 + $0x750] sm:$0xff]
    %v375 = vld [vmem:[#allocation5 + $0x758] sm:$0xff]
    %v376 = vld [vmem:[#allocation5 + $0x760] sm:$0xff]
    %v377 = vld [vmem:[#allocation5 + $0x768] sm:$0xff]
    %v378 = vld [vmem:[#allocation5 + $0x770] sm:$0xff]
    %v379 = vld [vmem:[#allocation5 + $0x778] sm:$0xff]
    %v380 = vld [vmem:[#allocation5 + $0x780] sm:$0xff]
    %v381 = vld [vmem:[#allocation5 + $0x788] sm:$0xff]
    %v382 = vld [vmem:[#allocation5 + $0x790] sm:$0xff]
    %v383 = vld [vmem:[#allocation5 + $0x798] sm:$0xff]
    %v384 = vld [vmem:[#allocation5 + $0x7a0] sm:$0xff]
    %v385 = vld [vmem:[#allocation5 + $0x7a8] sm:$0xff]
    %v386 = vld [vmem:[#allocation5 + $0x7b0] sm:$0xff]
    %v387 = vld [vmem:[#allocation5 + $0x7b8] sm:$0xff]
    %v388 = vld [vmem:[#allocation5 + $0x7c0] sm:$0xff]
    %v389 = vld [vmem:[#allocation5 + $0x7c8] sm:$0xff]
    %v390 = vld [vmem:[#allocation5 + $0x7d0] sm:$0xff]
    %v391 = vld [vmem:[#allocation5 + $0x7d8] sm:$0xff]
    %v392 = vld [vmem:[#allocation5 + $0x7e0] sm:$0xff]
    %v393 = vld [vmem:[#allocation5 + $0x7e8] sm:$0xff]
    %v394 = vld [vmem:[#allocation5 + $0x7f0] sm:$0xff]
    %v395 = vld [vmem:[#allocation5 + $0x7f8] sm:$0xff]
    %v396 = vld [vmem:[#allocation5 + $0x800] sm:$0xff]
    %v397 = vld [vmem:[#allocation5 + $0x808] sm:$0xff]
    %v398 = vld [vmem:[#allocation5 + $0x810] sm:$0xff]
    %v399 = vld [vmem:[#allocation5 + $0x818] sm:$0xff]
    %v400 = vld [vmem:[#allocation5 + $0x820] sm:$0xff]
    %v401 = vld [vmem:[#allocation5 + $0x828] sm:$0xff]
    %v402 = vld [vmem:[#allocation5 + $0x830] sm:$0xff]
    %v403 = vld [vmem:[#allocation5 + $0x838] sm:$0xff]
    %v404 = vld [vmem:[#allocation5 + $0x840] sm:$0xff]
    %v405 = vld [vmem:[#allocation5 + $0x848] sm:$0xff]
    %v406 = vld [vmem:[#allocation5 + $0x850] sm:$0xff]
    %v407 = vld [vmem:[#allocation5 + $0x858] sm:$0xff]
    %v408 = vld [vmem:[#allocation5 + $0x860] sm:$0xff]
    %v409 = vld [vmem:[#allocation5 + $0x868] sm:$0xff]
    %v410 = vld [vmem:[#allocation5 + $0x870] sm:$0xff]
    %v411 = vld [vmem:[#allocation5 + $0x878] sm:$0xff]
    %v412 = vld [vmem:[#allocation5 + $0x880] sm:$0xff]
    %v413 = vld [vmem:[#allocation5 + $0x888] sm:$0xff]
    %v414 = vld [vmem:[#allocation5 + $0x890] sm:$0xff]
    %v415 = vld [vmem:[#allocation5 + $0x898] sm:$0xff]
    %v416 = vld [vmem:[#allocation5 + $0x8a0] sm:$0xff]
    %v417 = vld [vmem:[#allocation5 + $0x8a8] sm:$0xff]
    %v418 = vld [vmem:[#allocation5 + $0x8b0] sm:$0xff]
    %v419 = vld [vmem:[#allocation5 + $0x8b8] sm:$0xff]
    %v420 = vld [vmem:[#allocation5 + $0x8c0] sm:$0xff]
    %v421 = vld [vmem:[#allocation5 + $0x8c8] sm:$0xff]
    %v422 = vld [vmem:[#allocation5 + $0x8d0] sm:$0xff]
    %v423 = vld [vmem:[#allocation5 + $0x8d8] sm:$0xff]
    %v424 = vld [vmem:[#allocation5 + $0x8e0] sm:$0xff]
    %v425 = vld [vmem:[#allocation5 + $0x8e8] sm:$0xff]
    %v426 = vld [vmem:[#allocation5 + $0x8f0] sm:$0xff]
    %v427 = vld [vmem:[#allocation5 + $0x8f8] sm:$0xff]
    %v428 = vld [vmem:[#allocation5 + $0x900] sm:$0xff]
    %v429 = vld [vmem:[#allocation5 + $0x908] sm:$0xff]
    %v430 = vld [vmem:[#allocation5 + $0x910] sm:$0xff]
    %v431 = vld [vmem:[#allocation5 + $0x918] sm:$0xff]
    %v432 = vld [vmem:[#allocation5 + $0x920] sm:$0xff]
    %v433 = vld [vmem:[#allocation5 + $0x928] sm:$0xff]
    %v434 = vld [vmem:[#allocation5 + $0x930] sm:$0xff]
    %v435 = vld [vmem:[#allocation5 + $0x938] sm:$0xff]
    %v436 = vld [vmem:[#allocation5 + $0x940] sm:$0xff]
    %v437 = vld [vmem:[#allocation5 + $0x948] sm:$0xff]
    %v438 = vld [vmem:[#allocation5 + $0x950] sm:$0xff]
    %v439 = vld [vmem:[#allocation5 + $0x958] sm:$0xff]
    %v440 = vld [vmem:[#allocation5 + $0x960] sm:$0xff]
    %v441 = vld [vmem:[#allocation5 + $0x968] sm:$0xff]
    %v442 = vld [vmem:[#allocation5 + $0x970] sm:$0xff]
    %v443 = vld [vmem:[#allocation5 + $0x978] sm:$0xff]
    %v444 = vld [vmem:[#allocation5 + $0x980] sm:$0xff]
    %v445 = vld [vmem:[#allocation5 + $0x988] sm:$0xff]
    %v446 = vld [vmem:[#allocation5 + $0x990] sm:$0xff]
    %v447 = vld [vmem:[#allocation5 + $0x998] sm:$0xff]
    %v448 = vld [vmem:[#allocation5 + $0x9a0] sm:$0xff]
    %v449 = vld [vmem:[#allocation5 + $0x9a8] sm:$0xff]
    %v450 = vld [vmem:[#allocation5 + $0x9b0] sm:$0xff]
    %v451 = vld [vmem:[#allocation5 + $0x9b8] sm:$0xff]
    %v452 = vld [vmem:[#allocation5 + $0x9c0] sm:$0xff]
    %v453 = vld [vmem:[#allocation5 + $0x9c8] sm:$0xff]
    %v454 = vld [vmem:[#allocation5 + $0x9d0] sm:$0xff]
    %v455 = vld [vmem:[#allocation5 + $0x9d8] sm:$0xff]
    %v456 = vld [vmem:[#allocation5 + $0x9e0] sm:$0xff]
    %v457 = vld [vmem:[#allocation5 + $0x9e8] sm:$0xff]
    %v458 = vld [vmem:[#allocation5 + $0x9f0] sm:$0xff]
    %v459 = vld [vmem:[#allocation5 + $0x9f8] sm:$0xff]
    %v460 = vld [vmem:[#allocation5 + $0xa00] sm:$0xff]
    %v461 = vld [vmem:[#allocation5 + $0xa08] sm:$0xff]
    %v462 = vld [vmem:[#allocation5 + $0xa10] sm:$0xff]
    %v463 = vld [vmem:[#allocation5 + $0xa18] sm:$0xff]
    %v464 = vld [vmem:[#allocation5 + $0xa20] sm:$0xff]
    %v465 = vld [vmem:[#allocation5 + $0xa28] sm:$0xff]
    %v466 = vld [vmem:[#allocation5 + $0xa30] sm:$0xff]
    %v467 = vld [vmem:[#allocation5 + $0xa38] sm:$0xff]
    %v468 = vld [vmem:[#allocation5 + $0xa40] sm:$0xff]
    %v469 = vld [vmem:[#allocation5 + $0xa48] sm:$0xff]
    %v470 = vld [vmem:[#allocation5 + $0xa50] sm:$0xff]
    %v471 = vld [vmem:[#allocation5 + $0xa58] sm:$0xff]
    %v472 = vld [vmem:[#allocation5 + $0xa60] sm:$0xff]
    %v473 = vld [vmem:[#allocation5 + $0xa68] sm:$0xff]
    %v474 = vld [vmem:[#allocation5 + $0xa70] sm:$0xff]
    %v475 = vld [vmem:[#allocation5 + $0xa78] sm:$0xff]
    %v476 = vld [vmem:[#allocation5 + $0xa80] sm:$0xff]
    %v477 = vld [vmem:[#allocation5 + $0xa88] sm:$0xff]
    %v478 = vld [vmem:[#allocation5 + $0xa90] sm:$0xff]
    %v479 = vld [vmem:[#allocation5 + $0xa98] sm:$0xff]
    %v480 = vld [vmem:[#allocation5 + $0xaa0] sm:$0xff]
    %v481 = vld [vmem:[#allocation5 + $0xaa8] sm:$0xff]
    %v482 = vld [vmem:[#allocation5 + $0xab0] sm:$0xff]
    %v483 = vld [vmem:[#allocation5 + $0xab8] sm:$0xff]
    %v484 = vld [vmem:[#allocation5 + $0xac0] sm:$0xff]
    %v485 = vld [vmem:[#allocation5 + $0xac8] sm:$0xff]
    %v486 = vld [vmem:[#allocation5 + $0xad0] sm:$0xff]
    %v487 = vld [vmem:[#allocation5 + $0xad8] sm:$0xff]
    %v488 = vld [vmem:[#allocation5 + $0xae0] sm:$0xff]
    %v489 = vld [vmem:[#allocation5 + $0xae8] sm:$0xff]
    %v490 = vld [vmem:[#allocation5 + $0xaf0] sm:$0xff]
    %v491 = vld [vmem:[#allocation5 + $0xaf8] sm:$0xff]
    %v492 = vld [vmem:[#allocation5 + $0xb00] sm:$0xff]
    %v493 = vld [vmem:[#allocation5 + $0xb08] sm:$0xff]
    %v494 = vld [vmem:[#allocation5 + $0xb10] sm:$0xff]
    %v495 = vld [vmem:[#allocation5 + $0xb18] sm:$0xff]
    %v496 = vld [vmem:[#allocation5 + $0xb20] sm:$0xff]
    %v497 = vld [vmem:[#allocation5 + $0xb28] sm:$0xff]
    %v498 = vld [vmem:[#allocation5 + $0xb30] sm:$0xff]
    %v499 = vld [vmem:[#allocation5 + $0xb38] sm:$0xff]
    %v500 = vld [vmem:[#allocation5 + $0xb40] sm:$0xff]
    %v501 = vld [vmem:[#allocation5 + $0xb48] sm:$0xff]
    %v502 = vld [vmem:[#allocation5 + $0xb50] sm:$0xff]
    %v503 = vld [vmem:[#allocation5 + $0xb58] sm:$0xff]
    %v504 = vld [vmem:[#allocation5 + $0xb60] sm:$0xff]
    %v505 = vld [vmem:[#allocation5 + $0xb68] sm:$0xff]
    %v506 = vld [vmem:[#allocation5 + $0xb70] sm:$0xff]
    %v507 = vld [vmem:[#allocation5 + $0xb78] sm:$0xff]
    %v508 = vld [vmem:[#allocation5 + $0xb80] sm:$0xff]
    %v509 = vld [vmem:[#allocation5 + $0xb88] sm:$0xff]
    %v510 = vld [vmem:[#allocation5 + $0xb90] sm:$0xff]
    %v511 = vld [vmem:[#allocation5 + $0xb98] sm:$0xff]
    %v512 = vld [vmem:[#allocation5 + $0xba0] sm:$0xff]
    %v513 = vld [vmem:[#allocation5 + $0xba8] sm:$0xff]
    %v514 = vld [vmem:[#allocation5 + $0xbb0] sm:$0xff]
    %v515 = vld [vmem:[#allocation5 + $0xbb8] sm:$0xff]
    %v516 = vld [vmem:[#allocation5 + $0xbc0] sm:$0xff]
    %v517 = vld [vmem:[#allocation5 + $0xbc8] sm:$0xff]
    %v518 = vld [vmem:[#allocation5 + $0xbd0] sm:$0xff]
    %v519 = vld [vmem:[#allocation5 + $0xbd8] sm:$0xff]
    %v520 = vld [vmem:[#allocation5 + $0xbe0] sm:$0xff]
    %v521 = vld [vmem:[#allocation5 + $0xbe8] sm:$0xff]
    %v522 = vld [vmem:[#allocation5 + $0xbf0] sm:$0xff]
    %v523 = vld [vmem:[#allocation5 + $0xbf8] sm:$0xff]
    %v524 = vld [vmem:[#allocation5 + $0xc00] sm:$0xff]
    %v525 = vld [vmem:[#allocation5 + $0xc08] sm:$0xff]
    %v526 = vld [vmem:[#allocation5 + $0xc10] sm:$0xff]
    %v527 = vld [vmem:[#allocation5 + $0xc18] sm:$0xff]
    %v528 = vld [vmem:[#allocation5 + $0xc20] sm:$0xff]
    %v529 = vld [vmem:[#allocation5 + $0xc28] sm:$0xff]
    %v530 = vld [vmem:[#allocation5 + $0xc30] sm:$0xff]
    %v531 = vld [vmem:[#allocation5 + $0xc38] sm:$0xff]
    %v532 = vld [vmem:[#allocation5 + $0xc40] sm:$0xff]
    %v533 = vld [vmem:[#allocation5 + $0xc48] sm:$0xff]
    %v534 = vld [vmem:[#allocation5 + $0xc50] sm:$0xff]
    %v535 = vld [vmem:[#allocation5 + $0xc58] sm:$0xff]
    %v536 = vld [vmem:[#allocation5 + $0xc60] sm:$0xff]
    %v537 = vld [vmem:[#allocation5 + $0xc68] sm:$0xff]
    %v538 = vld [vmem:[#allocation5 + $0xc70] sm:$0xff]
    %v539 = vld [vmem:[#allocation5 + $0xc78] sm:$0xff]
    %v540 = vld [vmem:[#allocation5 + $0xc80] sm:$0xff]
    %v541 = vld [vmem:[#allocation5 + $0xc88] sm:$0xff]
    %v542 = vld [vmem:[#allocation5 + $0xc90] sm:$0xff]
    %v543 = vld [vmem:[#allocation5 + $0xc98] sm:$0xff]
    %v544 = vld [vmem:[#allocation5 + $0xca0] sm:$0xff]
    %v545 = vld [vmem:[#allocation5 + $0xca8] sm:$0xff]
    %v546 = vld [vmem:[#allocation5 + $0xcb0] sm:$0xff]
    %v547 = vld [vmem:[#allocation5 + $0xcb8] sm:$0xff]
    %v548 = vld [vmem:[#allocation5 + $0xcc0] sm:$0xff]
    %v549 = vld [vmem:[#allocation5 + $0xcc8] sm:$0xff]
    %v550 = vld [vmem:[#allocation5 + $0xcd0] sm:$0xff]
    %v551 = vld [vmem:[#allocation5 + $0xcd8] sm:$0xff]
    %v552 = vld [vmem:[#allocation5 + $0xce0] sm:$0xff]
    %v553 = vld [vmem:[#allocation5 + $0xce8] sm:$0xff]
    %v554 = vld [vmem:[#allocation5 + $0xcf0] sm:$0xff]
    %v555 = vld [vmem:[#allocation5 + $0xcf8] sm:$0xff]
    %v556 = vld [vmem:[#allocation5 + $0xd00] sm:$0xff]
    %v557 = vld [vmem:[#allocation5 + $0xd08] sm:$0xff]
    %v558 = vld [vmem:[#allocation5 + $0xd10] sm:$0xff]
    %v559 = vld [vmem:[#allocation5 + $0xd18] sm:$0xff]
    %v560 = vld [vmem:[#allocation5 + $0xd20] sm:$0xff]
    %v561 = vld [vmem:[#allocation5 + $0xd28] sm:$0xff]
    %v562 = vld [vmem:[#allocation5 + $0xd30] sm:$0xff]
    %v563 = vld [vmem:[#allocation5 + $0xd38] sm:$0xff]
    %v564 = vld [vmem:[#allocation5 + $0xd40] sm:$0xff]
    %v565 = vld [vmem:[#allocation5 + $0xd48] sm:$0xff]
    %v566 = vld [vmem:[#allocation5 + $0xd50] sm:$0xff]
    %v567 = vld [vmem:[#allocation5 + $0xd58] sm:$0xff]
    %v568 = vld [vmem:[#allocation5 + $0xd60] sm:$0xff]
    %v569 = vld [vmem:[#allocation5 + $0xd68] sm:$0xff]
    %v570 = vld [vmem:[#allocation5 + $0xd70] sm:$0xff]
    %v571 = vld [vmem:[#allocation5 + $0xd78] sm:$0xff]
    %v572 = vld [vmem:[#allocation5 + $0xd80] sm:$0xff]
    %v573 = vld [vmem:[#allocation5 + $0xd88] sm:$0xff]
    %v574 = vld [vmem:[#allocation5 + $0xd90] sm:$0xff]
    %v575 = vld [vmem:[#allocation5 + $0xd98] sm:$0xff]
    %v576 = vld [vmem:[#allocation5 + $0xda0] sm:$0xff]
    %v577 = vld [vmem:[#allocation5 + $0xda8] sm:$0xff]
    %v578 = vld [vmem:[#allocation5 + $0xdb0] sm:$0xff]
    %v579 = vld [vmem:[#allocation5 + $0xdb8] sm:$0xff]
    %v580 = vld [vmem:[#allocation5 + $0xdc0] sm:$0xff]
    %v581 = vld [vmem:[#allocation5 + $0xdc8] sm:$0xff]
    %v582 = vld [vmem:[#allocation5 + $0xdd0] sm:$0xff]
    %v583 = vld [vmem:[#allocation5 + $0xdd8] sm:$0xff]
    %v584 = vld [vmem:[#allocation5 + $0xde0] sm:$0xff]
    %v585 = vld [vmem:[#allocation5 + $0xde8] sm:$0xff]
    %v586 = vld [vmem:[#allocation5 + $0xdf0] sm:$0xff]
    %v587 = vld [vmem:[#allocation5 + $0xdf8] sm:$0xff]
    %v588 = vld [vmem:[#allocation5 + $0xe00] sm:$0xff]
    %v589 = vld [vmem:[#allocation5 + $0xe08] sm:$0xff]
    %v590 = vld [vmem:[#allocation5 + $0xe10] sm:$0xff]
    %v591 = vld [vmem:[#allocation5 + $0xe18] sm:$0xff]
    %v592 = vld [vmem:[#allocation5 + $0xe20] sm:$0xff]
    %v593 = vld [vmem:[#allocation5 + $0xe28] sm:$0xff]
    %v594 = vld [vmem:[#allocation5 + $0xe30] sm:$0xff]
    %v595 = vld [vmem:[#allocation5 + $0xe38] sm:$0xff]
    %v596 = vld [vmem:[#allocation5 + $0xe40] sm:$0xff]
    %v597 = vld [vmem:[#allocation5 + $0xe48] sm:$0xff]
    %v598 = vld [vmem:[#allocation5 + $0xe50] sm:$0xff]
    %v599 = vld [vmem:[#allocation5 + $0xe58] sm:$0xff]
    %v600 = vld [vmem:[#allocation5 + $0xe60] sm:$0xff]
    %v601 = vld [vmem:[#allocation5 + $0xe68] sm:$0xff]
    %v602 = vld [vmem:[#allocation5 + $0xe70] sm:$0xff]
    %v603 = vld [vmem:[#allocation5 + $0xe78] sm:$0xff]
    %v604 = vld [vmem:[#allocation5 + $0xe80] sm:$0xff]
    %v605 = vld [vmem:[#allocation5 + $0xe88] sm:$0xff]
    %v606 = vld [vmem:[#allocation5 + $0xe90] sm:$0xff]
    %v607 = vld [vmem:[#allocation5 + $0xe98] sm:$0xff]
    %v608 = vld [vmem:[#allocation5 + $0xea0] sm:$0xff]
    %v609 = vld [vmem:[#allocation5 + $0xea8] sm:$0xff]
    %v610 = vld [vmem:[#allocation5 + $0xeb0] sm:$0xff]
    %v611 = vld [vmem:[#allocation5 + $0xeb8] sm:$0xff]
    %v612 = vld [vmem:[#allocation5 + $0xec0] sm:$0xff]
    %v613 = vld [vmem:[#allocation5 + $0xec8] sm:$0xff]
    %v614 = vld [vmem:[#allocation5 + $0xed0] sm:$0xff]
    %v615 = vld [vmem:[#allocation5 + $0xed8] sm:$0xff]
    %v616 = vld [vmem:[#allocation5 + $0xee0] sm:$0xff]
    %v617 = vld [vmem:[#allocation5 + $0xee8] sm:$0xff]
    %v618 = vld [vmem:[#allocation5 + $0xef0] sm:$0xff]
    %v619 = vld [vmem:[#allocation5 + $0xef8] sm:$0xff]
    %v620 = vld [vmem:[#allocation5 + $0xf00] sm:$0xff]
    %v621 = vld [vmem:[#allocation5 + $0xf08] sm:$0xff]
    %v622 = vld [vmem:[#allocation5 + $0xf10] sm:$0xff]
    %v623 = vld [vmem:[#allocation5 + $0xf18] sm:$0xff]
    %v624 = vld [vmem:[#allocation5 + $0xf20] sm:$0xff]
    %v625 = vld [vmem:[#allocation5 + $0xf28] sm:$0xff]
    %v626 = vld [vmem:[#allocation5 + $0xf30] sm:$0xff]
    %v627 = vld [vmem:[#allocation5 + $0xf38] sm:$0xff]
    %v628 = vld [vmem:[#allocation5 + $0xf40] sm:$0xff]
    %v629 = vld [vmem:[#allocation5 + $0xf48] sm:$0xff]
    %v630 = vld [vmem:[#allocation5 + $0xf50] sm:$0xff]
    %v631 = vld [vmem:[#allocation5 + $0xf58] sm:$0xff]
    %v632 = vld [vmem:[#allocation5 + $0xf60] sm:$0xff]
    %v633 = vld [vmem:[#allocation5 + $0xf68] sm:$0xff]
    %v634 = vld [vmem:[#allocation5 + $0xf70] sm:$0xff]
    %v635 = vld [vmem:[#allocation5 + $0xf78] sm:$0xff]
    %v636 = vld [vmem:[#allocation5 + $0xf80] sm:$0xff]
    %v637 = vld [vmem:[#allocation5 + $0xf88] sm:$0xff]
    %v638 = vld [vmem:[#allocation5 + $0xf90] sm:$0xff]
    %v639 = vld [vmem:[#allocation5 + $0xf98] sm:$0xff]
    %v640 = vld [vmem:[#allocation5 + $0xfa0] sm:$0xff]
    %v641 = vld [vmem:[#allocation5 + $0xfa8] sm:$0xff]
    %v642 = vld [vmem:[#allocation5 + $0xfb0] sm:$0xff]
    %v643 = vld [vmem:[#allocation5 + $0xfb8] sm:$0xff]
    %v644 = vld [vmem:[#allocation5 + $0xfc0] sm:$0xff]
    %v645 = vld [vmem:[#allocation5 + $0xfc8] sm:$0xff]
    %v646 = vld [vmem:[#allocation5 + $0xfd0] sm:$0xff]
    %v647 = vld [vmem:[#allocation5 + $0xfd8] sm:$0xff]
    %v648 = vld [vmem:[#allocation5 + $0xfe0] sm:$0xff]
    %v649 = vld [vmem:[#allocation5 + $0xfe8] sm:$0xff]
    %v650 = vld [vmem:[#allocation5 + $0xff0] sm:$0xff]
    %v651 = vld [vmem:[#allocation5 + $0xff8] sm:$0xff]
    %v652 = vld [vmem:[#allocation5 + $0x1000] sm:$0xff]
    %v653 = vld [vmem:[#allocation5 + $0x1008] sm:$0xff]
    %v654 = vld [vmem:[#allocation5 + $0x1010] sm:$0xff]
    %v655 = vld [vmem:[#allocation5 + $0x1018] sm:$0xff]
    %v656 = vld [vmem:[#allocation5 + $0x1020] sm:$0xff]
    %v657 = vld [vmem:[#allocation5 + $0x1028] sm:$0xff]
    %v658 = vld [vmem:[#allocation5 + $0x1030] sm:$0xff]
    %v659 = vld [vmem:[#allocation5 + $0x1038] sm:$0xff]
    %v660 = vld [vmem:[#allocation5 + $0x1040] sm:$0xff]
    %v661 = vld [vmem:[#allocation5 + $0x1048] sm:$0xff]
    %v662 = vld [vmem:[#allocation5 + $0x1050] sm:$0xff]
    %v663 = vld [vmem:[#allocation5 + $0x1058] sm:$0xff]
    %v664 = vld [vmem:[#allocation5 + $0x1060] sm:$0xff]
    %v665 = vld [vmem:[#allocation5 + $0x1068] sm:$0xff]
    %v666 = vld [vmem:[#allocation5 + $0x1070] sm:$0xff]
    %v667 = vld [vmem:[#allocation5 + $0x1078] sm:$0xff]
    %v668 = vld [vmem:[#allocation5 + $0x1080] sm:$0xff]
    %v669 = vld [vmem:[#allocation5 + $0x1088] sm:$0xff]
    %v670 = vld [vmem:[#allocation5 + $0x1090] sm:$0xff]
    %v671 = vld [vmem:[#allocation5 + $0x1098] sm:$0xff]
    %v672 = vld [vmem:[#allocation5 + $0x10a0] sm:$0xff]
    %v673 = vld [vmem:[#allocation5 + $0x10a8] sm:$0xff]
    %v674 = vld [vmem:[#allocation5 + $0x10b0] sm:$0xff]
    %v675 = vld [vmem:[#allocation5 + $0x10b8] sm:$0xff]
    %v676 = vld [vmem:[#allocation5 + $0x10c0] sm:$0xff]
    %v677 = vld [vmem:[#allocation5 + $0x10c8] sm:$0xff]
    %v678 = vld [vmem:[#allocation5 + $0x10d0] sm:$0xff]
    %v679 = vld [vmem:[#allocation5 + $0x10d8] sm:$0xff]
    %v680 = vld [vmem:[#allocation5 + $0x10e0] sm:$0xff]
    %v681 = vld [vmem:[#allocation5 + $0x10e8] sm:$0xff]
    %v682 = vld [vmem:[#allocation5 + $0x10f0] sm:$0xff]
    %v683 = vld [vmem:[#allocation5 + $0x10f8] sm:$0xff]
    %v684 = vld [vmem:[#allocation5 + $0x1100] sm:$0xff]
    %v685 = vld [vmem:[#allocation5 + $0x1108] sm:$0xff]
    %v686 = vld [vmem:[#allocation5 + $0x1110] sm:$0xff]
    %v687 = vld [vmem:[#allocation5 + $0x1118] sm:$0xff]
    %v688 = vld [vmem:[#allocation5 + $0x1120] sm:$0xff]
    %v689 = vld [vmem:[#allocation5 + $0x1128] sm:$0xff]
    %v690 = vld [vmem:[#allocation5 + $0x1130] sm:$0xff]
    %v691 = vld [vmem:[#allocation5 + $0x1138] sm:$0xff]
    %v692 = vld [vmem:[#allocation5 + $0x1140] sm:$0xff]
    %v693 = vld [vmem:[#allocation5 + $0x1148] sm:$0xff]
    %v694 = vld [vmem:[#allocation5 + $0x1150] sm:$0xff]
    %v695 = vld [vmem:[#allocation5 + $0x1158] sm:$0xff]
    %v696 = vld [vmem:[#allocation5 + $0x1160] sm:$0xff]
    %v697 = vld [vmem:[#allocation5 + $0x1168] sm:$0xff]
    %v698 = vld [vmem:[#allocation5 + $0x1170] sm:$0xff]
    %v699 = vld [vmem:[#allocation5 + $0x1178] sm:$0xff]
    %v700 = vld [vmem:[#allocation5 + $0x1180] sm:$0xff]
    %v701 = vld [vmem:[#allocation5 + $0x1188] sm:$0xff]
    %v702 = vld [vmem:[#allocation5 + $0x1190] sm:$0xff]
    %v703 = vld [vmem:[#allocation5 + $0x1198] sm:$0xff]
    %v704 = vld [vmem:[#allocation5 + $0x11a0] sm:$0xff]
    %v705 = vld [vmem:[#allocation5 + $0x11a8] sm:$0xff]
    %v706 = vld [vmem:[#allocation5 + $0x11b0] sm:$0xff]
    %v707 = vld [vmem:[#allocation5 + $0x11b8] sm:$0xff]
    %v708 = vld [vmem:[#allocation5 + $0x11c0] sm:$0xff]
    %v709 = vld [vmem:[#allocation5 + $0x11c8] sm:$0xff]
    %v710 = vld [vmem:[#allocation5 + $0x11d0] sm:$0xff]
    %v711 = vld [vmem:[#allocation5 + $0x11d8] sm:$0xff]
    %v712 = vld [vmem:[#allocation5 + $0x11e0] sm:$0xff]
    %v713 = vld [vmem:[#allocation5 + $0x11e8] sm:$0xff]
    %v714 = vld [vmem:[#allocation5 + $0x11f0] sm:$0xff]
    %v715 = vld [vmem:[#allocation5 + $0x11f8] sm:$0xff]
    %v716 = vld [vmem:[#allocation5 + $0x1200] sm:$0xff]
    %v717 = vld [vmem:[#allocation5 + $0x1208] sm:$0xff]
    %v718 = vld [vmem:[#allocation5 + $0x1210] sm:$0xff]
    %v719 = vld [vmem:[#allocation5 + $0x1218] sm:$0xff]
    %v720 = vld [vmem:[#allocation5 + $0x1220] sm:$0xff]
    %v721 = vld [vmem:[#allocation5 + $0x1228] sm:$0xff]
    %v722 = vld [vmem:[#allocation5 + $0x1230] sm:$0xff]
    %v723 = vld [vmem:[#allocation5 + $0x1238] sm:$0xff]
    %v724 = vld [vmem:[#allocation5 + $0x1240] sm:$0xff]
    %v725 = vld [vmem:[#allocation5 + $0x1248] sm:$0xff]
    %v726 = vld [vmem:[#allocation5 + $0x1250] sm:$0xff]
    %v727 = vld [vmem:[#allocation5 + $0x1258] sm:$0xff]
    %v728 = vld [vmem:[#allocation5 + $0x1260] sm:$0xff]
    %v729 = vld [vmem:[#allocation5 + $0x1268] sm:$0xff]
    %v730 = vld [vmem:[#allocation5 + $0x1270] sm:$0xff]
    %v731 = vld [vmem:[#allocation5 + $0x1278] sm:$0xff]
    %v732 = vld [vmem:[#allocation5 + $0x1280] sm:$0xff]
    %v733 = vld [vmem:[#allocation5 + $0x1288] sm:$0xff]
    %v734 = vld [vmem:[#allocation5 + $0x1290] sm:$0xff]
    %v735 = vld [vmem:[#allocation5 + $0x1298] sm:$0xff]
    %v736 = vld [vmem:[#allocation5 + $0x12a0] sm:$0xff]
    %v737 = vld [vmem:[#allocation5 + $0x12a8] sm:$0xff]
    %v738 = vld [vmem:[#allocation5 + $0x12b0] sm:$0xff]
    %v739 = vld [vmem:[#allocation5 + $0x12b8] sm:$0xff]
    %v740 = vld [vmem:[#allocation5 + $0x12c0] sm:$0xff]
    %v741 = vld [vmem:[#allocation5 + $0x12c8] sm:$0xff]
    %v742 = vld [vmem:[#allocation5 + $0x12d0] sm:$0xff]
    %v743 = vld [vmem:[#allocation5 + $0x12d8] sm:$0xff]
    %v744 = vld [vmem:[#allocation5 + $0x12e0] sm:$0xff]
    %v745 = vld [vmem:[#allocation5 + $0x12e8] sm:$0xff]
    %v746 = vld [vmem:[#allocation5 + $0x12f0] sm:$0xff]
    %v747 = vld [vmem:[#allocation5 + $0x12f8] sm:$0xff]
    %v748 = vld [vmem:[#allocation5 + $0x1300] sm:$0xff]
    %v749 = vld [vmem:[#allocation5 + $0x1308] sm:$0xff]
    %v750 = vld [vmem:[#allocation5 + $0x1310] sm:$0xff]
    %v751 = vld [vmem:[#allocation5 + $0x1318] sm:$0xff]
    %v752 = vld [vmem:[#allocation5 + $0x1320] sm:$0xff]
    %v753 = vld [vmem:[#allocation5 + $0x1328] sm:$0xff]
    %v754 = vld [vmem:[#allocation5 + $0x1330] sm:$0xff]
    %v755 = vld [vmem:[#allocation5 + $0x1338] sm:$0xff]
    %v756 = vld [vmem:[#allocation5 + $0x1340] sm:$0xff]
    %v757 = vld [vmem:[#allocation5 + $0x1348] sm:$0xff]
    %v758 = vld [vmem:[#allocation5 + $0x1350] sm:$0xff]
    %v759 = vld [vmem:[#allocation5 + $0x1358] sm:$0xff]
    %v760 = vld [vmem:[#allocation5 + $0x1360] sm:$0xff]
    %v761 = vld [vmem:[#allocation5 + $0x1368] sm:$0xff]
    %v762 = vld [vmem:[#allocation5 + $0x1370] sm:$0xff]
    %v763 = vld [vmem:[#allocation5 + $0x1378] sm:$0xff]
    %v764 = vld [vmem:[#allocation5 + $0x1380] sm:$0xff]
    %v765 = vld [vmem:[#allocation5 + $0x1388] sm:$0xff]
    %v766 = vld [vmem:[#allocation5 + $0x1390] sm:$0xff]
    %v767 = vld [vmem:[#allocation5 + $0x1398] sm:$0xff]
    %v768 = vld [vmem:[#allocation5 + $0x13a0] sm:$0xff]
    %v769 = vld [vmem:[#allocation5 + $0x13a8] sm:$0xff]
    %v770 = vld [vmem:[#allocation5 + $0x13b0] sm:$0xff]
    %v771 = vld [vmem:[#allocation5 + $0x13b8] sm:$0xff]
    %v772 = vld [vmem:[#allocation5 + $0x13c0] sm:$0xff]
    %v773 = vld [vmem:[#allocation5 + $0x13c8] sm:$0xff]
    %v774 = vld [vmem:[#allocation5 + $0x13d0] sm:$0xff]
    %v775 = vld [vmem:[#allocation5 + $0x13d8] sm:$0xff]
    %v776 = vld [vmem:[#allocation5 + $0x13e0] sm:$0xff]
    %v777 = vld [vmem:[#allocation5 + $0x13e8] sm:$0xff]
    %v778 = vld [vmem:[#allocation5 + $0x13f0] sm:$0xff]
    %v779 = vld [vmem:[#allocation5 + $0x13f8] sm:$0xff]
    %v780 = vld [vmem:[#allocation5 + $0x1400] sm:$0xff]
    %v781 = vld [vmem:[#allocation5 + $0x1408] sm:$0xff]
    %v782 = vld [vmem:[#allocation5 + $0x1410] sm:$0xff]
    %v783 = vld [vmem:[#allocation5 + $0x1418] sm:$0xff]
    %v784 = vld [vmem:[#allocation5 + $0x1420] sm:$0xff]
    %v785 = vld [vmem:[#allocation5 + $0x1428] sm:$0xff]
    %v786 = vld [vmem:[#allocation5 + $0x1430] sm:$0xff]
    %v787 = vld [vmem:[#allocation5 + $0x1438] sm:$0xff]
    %v788 = vld [vmem:[#allocation5 + $0x1440] sm:$0xff]
    %v789 = vld [vmem:[#allocation5 + $0x1448] sm:$0xff]
    %v790 = vld [vmem:[#allocation5 + $0x1450] sm:$0xff]
    %v791 = vld [vmem:[#allocation5 + $0x1458] sm:$0xff]
    %v792 = vld [vmem:[#allocation5 + $0x1460] sm:$0xff]
    %v793 = vld [vmem:[#allocation5 + $0x1468] sm:$0xff]
    %v794 = vld [vmem:[#allocation5 + $0x1470] sm:$0xff]
    %v795 = vld [vmem:[#allocation5 + $0x1478] sm:$0xff]
    %v796 = vld [vmem:[#allocation5 + $0x1480] sm:$0xff]
    %v797 = vld [vmem:[#allocation5 + $0x1488] sm:$0xff]
    %v798 = vld [vmem:[#allocation5 + $0x1490] sm:$0xff]
    %v799 = vld [vmem:[#allocation5 + $0x1498] sm:$0xff]
    %v800 = vld [vmem:[#allocation5 + $0x14a0] sm:$0xff]
    %v801 = vld [vmem:[#allocation5 + $0x14a8] sm:$0xff]
    %v802 = vld [vmem:[#allocation5 + $0x14b0] sm:$0xff]
    %v803 = vld [vmem:[#allocation5 + $0x14b8] sm:$0xff]
    %v804 = vld [vmem:[#allocation5 + $0x14c0] sm:$0xff]
    %v805 = vld [vmem:[#allocation5 + $0x14c8] sm:$0xff]
    %v806 = vld [vmem:[#allocation5 + $0x14d0] sm:$0xff]
    %v807 = vld [vmem:[#allocation5 + $0x14d8] sm:$0xff]
    %v808 = vld [vmem:[#allocation5 + $0x14e0] sm:$0xff]
    %v809 = vld [vmem:[#allocation5 + $0x14e8] sm:$0xff]
    %v810 = vld [vmem:[#allocation5 + $0x14f0] sm:$0xff]
    %v811 = vld [vmem:[#allocation5 + $0x14f8] sm:$0xff]
    %v812 = vld [vmem:[#allocation5 + $0x1500] sm:$0xff]
    %v813 = vld [vmem:[#allocation5 + $0x1508] sm:$0xff]
    %v814 = vld [vmem:[#allocation5 + $0x1510] sm:$0xff]
    %v815 = vld [vmem:[#allocation5 + $0x1518] sm:$0xff]
    %v816 = vld [vmem:[#allocation5 + $0x1520] sm:$0xff]
    %v817 = vld [vmem:[#allocation5 + $0x1528] sm:$0xff]
    %v818 = vld [vmem:[#allocation5 + $0x1530] sm:$0xff]
    %v819 = vld [vmem:[#allocation5 + $0x1538] sm:$0xff]
    %v820 = vld [vmem:[#allocation5 + $0x1540] sm:$0xff]
    %v821 = vld [vmem:[#allocation5 + $0x1548] sm:$0xff]
    %v822 = vld [vmem:[#allocation5 + $0x1550] sm:$0xff]
    %v823 = vld [vmem:[#allocation5 + $0x1558] sm:$0xff]
    %v824 = vld [vmem:[#allocation5 + $0x1560] sm:$0xff]
    %v825 = vld [vmem:[#allocation5 + $0x1568] sm:$0xff]
    %v826 = vld [vmem:[#allocation5 + $0x1570] sm:$0xff]
    %v827 = vld [vmem:[#allocation5 + $0x1578] sm:$0xff]
    %v828 = vld [vmem:[#allocation5 + $0x1580] sm:$0xff]
    %v829 = vld [vmem:[#allocation5 + $0x1588] sm:$0xff]
    %v830 = vld [vmem:[#allocation5 + $0x1590] sm:$0xff]
    %v831 = vld [vmem:[#allocation5 + $0x1598] sm:$0xff]
    %v832 = vld [vmem:[#allocation5 + $0x15a0] sm:$0xff]
    %v833 = vld [vmem:[#allocation5 + $0x15a8] sm:$0xff]
    %v834 = vld [vmem:[#allocation5 + $0x15b0] sm:$0xff]
    %v835 = vld [vmem:[#allocation5 + $0x15b8] sm:$0xff]
    %v836 = vld [vmem:[#allocation5 + $0x15c0] sm:$0xff]
    %v837 = vld [vmem:[#allocation5 + $0x15c8] sm:$0xff]
    %v838 = vld [vmem:[#allocation5 + $0x15d0] sm:$0xff]
    %v839 = vld [vmem:[#allocation5 + $0x15d8] sm:$0xff]
    %v840 = vld [vmem:[#allocation5 + $0x15e0] sm:$0xff]
    %v841 = vld [vmem:[#allocation5 + $0x15e8] sm:$0xff]
    %v842 = vld [vmem:[#allocation5 + $0x15f0] sm:$0xff]
    %v843 = vld [vmem:[#allocation5 + $0x15f8] sm:$0xff]
    %v844 = vld [vmem:[#allocation5 + $0x1600] sm:$0xff]
    %v845 = vld [vmem:[#allocation5 + $0x1608] sm:$0xff]
    %v846 = vld [vmem:[#allocation5 + $0x1610] sm:$0xff]
    %v847 = vld [vmem:[#allocation5 + $0x1618] sm:$0xff]
    %v848 = vld [vmem:[#allocation5 + $0x1620] sm:$0xff]
    %v849 = vld [vmem:[#allocation5 + $0x1628] sm:$0xff]
    %v850 = vld [vmem:[#allocation5 + $0x1630] sm:$0xff]
    %v851 = vld [vmem:[#allocation5 + $0x1638] sm:$0xff]
    %v852 = vld [vmem:[#allocation5 + $0x1640] sm:$0xff]
    %v853 = vld [vmem:[#allocation5 + $0x1648] sm:$0xff]
    %v854 = vld [vmem:[#allocation5 + $0x1650] sm:$0xff]
    %v855 = vld [vmem:[#allocation5 + $0x1658] sm:$0xff]
    %v856 = vld [vmem:[#allocation5 + $0x1660] sm:$0xff]
    %v857 = vld [vmem:[#allocation5 + $0x1668] sm:$0xff]
    %v858 = vld [vmem:[#allocation5 + $0x1670] sm:$0xff]
    %v859 = vld [vmem:[#allocation5 + $0x1678] sm:$0xff]
    %v860 = vld [vmem:[#allocation5 + $0x1680] sm:$0xff]
    %v861 = vld [vmem:[#allocation5 + $0x1688] sm:$0xff]
    %v862 = vld [vmem:[#allocation5 + $0x1690] sm:$0xff]
    %v863 = vld [vmem:[#allocation5 + $0x1698] sm:$0xff]
    %v864 = vld [vmem:[#allocation5 + $0x16a0] sm:$0xff]
    %v865 = vld [vmem:[#allocation5 + $0x16a8] sm:$0xff]
    %v866 = vld [vmem:[#allocation5 + $0x16b0] sm:$0xff]
    %v867 = vld [vmem:[#allocation5 + $0x16b8] sm:$0xff]
    %v868 = vld [vmem:[#allocation5 + $0x16c0] sm:$0xff]
    %v869 = vld [vmem:[#allocation5 + $0x16c8] sm:$0xff]
    %v870 = vld [vmem:[#allocation5 + $0x16d0] sm:$0xff]
    %v871 = vld [vmem:[#allocation5 + $0x16d8] sm:$0xff]
    %v872 = vld [vmem:[#allocation5 + $0x16e0] sm:$0xff]
    %v873 = vld [vmem:[#allocation5 + $0x16e8] sm:$0xff]
    %v874 = vld [vmem:[#allocation5 + $0x16f0] sm:$0xff]
    %v875 = vld [vmem:[#allocation5 + $0x16f8] sm:$0xff]
    %v876 = vld [vmem:[#allocation5 + $0x1700] sm:$0xff]
    %v877 = vld [vmem:[#allocation5 + $0x1708] sm:$0xff]
    %v878 = vld [vmem:[#allocation5 + $0x1710] sm:$0xff]
    %v879 = vld [vmem:[#allocation5 + $0x1718] sm:$0xff]
    %v880 = vld [vmem:[#allocation5 + $0x1720] sm:$0xff]
    %v881 = vld [vmem:[#allocation5 + $0x1728] sm:$0xff]
    %v882 = vld [vmem:[#allocation5 + $0x1730] sm:$0xff]
    %v883 = vld [vmem:[#allocation5 + $0x1738] sm:$0xff]
    %v884 = vld [vmem:[#allocation5 + $0x1740] sm:$0xff]
    %v885 = vld [vmem:[#allocation5 + $0x1748] sm:$0xff]
    %v886 = vld [vmem:[#allocation5 + $0x1750] sm:$0xff]
    %v887 = vld [vmem:[#allocation5 + $0x1758] sm:$0xff]
    %v888 = vld [vmem:[#allocation5 + $0x1760] sm:$0xff]
    %v889 = vld [vmem:[#allocation5 + $0x1768] sm:$0xff]
    %v890 = vld [vmem:[#allocation5 + $0x1770] sm:$0xff]
    %v891 = vld [vmem:[#allocation5 + $0x1778] sm:$0xff]
    %v892 = vld [vmem:[#allocation5 + $0x1780] sm:$0xff]
    %v893 = vld [vmem:[#allocation5 + $0x1788] sm:$0xff]
    %v894 = vld [vmem:[#allocation5 + $0x1790] sm:$0xff]
    %v895 = vld [vmem:[#allocation5 + $0x1798] sm:$0xff]
    %v896 = vld [vmem:[#allocation5 + $0x17a0] sm:$0xff]
    %v897 = vld [vmem:[#allocation5 + $0x17a8] sm:$0xff]
    %v898 = vld [vmem:[#allocation5 + $0x17b0] sm:$0xff]
    %v899 = vld [vmem:[#allocation5 + $0x17b8] sm:$0xff]
    %v900 = vld [vmem:[#allocation5 + $0x17c0] sm:$0xff]
    %v901 = vld [vmem:[#allocation5 + $0x17c8] sm:$0xff]
    %v902 = vld [vmem:[#allocation5 + $0x17d0] sm:$0xff]
    %v903 = vld [vmem:[#allocation5 + $0x17d8] sm:$0xff]
    %v904 = vld [vmem:[#allocation5 + $0x17e0] sm:$0xff]
    %v905 = vld [vmem:[#allocation5 + $0x17e8] sm:$0xff]
    %v906 = vld [vmem:[#allocation5 + $0x17f0] sm:$0xff]
    %v907 = vld [vmem:[#allocation5 + $0x17f8] sm:$0xff]
    %v908 = vld [vmem:[#allocation7] sm:$0xf]
    %v910 = vperm.slane %v908, 0
    %v911 = vperm.slane %v908, 1
    %v912 = vperm.slane %v908, 2
    %v913 = vperm.slane %v908, 3
    %v930 = vunpack.c.l.b16 %v128
    %v931 = vunpack.c.h.b16 %v128
    %v932 = vunpack.c.l.b16 %v129
    %v933 = vunpack.c.h.b16 %v129
    %v934 = vunpack.c.l.b16 %v130
    %v935 = vunpack.c.h.b16 %v130
    %v936 = vunpack.c.l.b16 %v131
    %v937 = vunpack.c.h.b16 %v131
    %v938 = vunpack.c.l.b16 %v132
    %v939 = vunpack.c.h.b16 %v132
    %v940 = vunpack.c.l.b16 %v133
    %v941 = vunpack.c.h.b16 %v133
    %v942 = vunpack.c.l.b16 %v134
    %v943 = vunpack.c.h.b16 %v134
    %v944 = vunpack.c.l.b16 %v135
    %v945 = vunpack.c.h.b16 %v135
    %v946 = vunpack.c.l.b16 %v136
    %v947 = vunpack.c.h.b16 %v136
    %v948 = vunpack.c.l.b16 %v137
    %v949 = vunpack.c.h.b16 %v137
    %v950 = vunpack.c.l.b16 %v138
    %v951 = vunpack.c.h.b16 %v138
    %v952 = vunpack.c.l.b16 %v139
    %v953 = vunpack.c.h.b16 %v139
    %v954 = vpack.c.b16 %v930, %v930
    %v955 = vpack.c.b16 %v931, %v931
    %v956 = vpack.c.b16 %v932, %v932
    %v957 = vpack.c.b16 %v933, %v933
    %v958 = vpack.c.b16 %v934, %v934
    %v959 = vpack.c.b16 %v935, %v935
    %v960 = vpack.c.b16 %v936, %v936
    %v961 = vpack.c.b16 %v937, %v937
    %v962 = vpack.c.b16 %v938, %v938
    %v963 = vpack.c.b16 %v939, %v939
    %v964 = vpack.c.b16 %v940, %v940
    %v965 = vpack.c.b16 %v941, %v941
    %v966 = vpack.c.b16 %v942, %v942
    %v967 = vpack.c.b16 %v943, %v943
    %v968 = vpack.c.b16 %v944, %v944
    %v969 = vpack.c.b16 %v945, %v945
    %v970 = vpack.c.b16 %v946, %v946
    %v971 = vpack.c.b16 %v947, %v947
    %v972 = vpack.c.b16 %v948, %v948
    %v973 = vpack.c.b16 %v949, %v949
    %v974 = vpack.c.b16 %v950, %v950
    %v975 = vpack.c.b16 %v951, %v951
    %v976 = vpack.c.b16 %v952, %v952
    %v977 = vpack.c.b16 %v953, %v953
    %v1770 = vunpack.c.l.b16 %v140
    %v1771 = vunpack.c.h.b16 %v140
    %v1772 = vunpack.c.l.b16 %v141
    %v1773 = vunpack.c.h.b16 %v141
    %v1774 = vunpack.c.l.b16 %v142
    %v1775 = vunpack.c.h.b16 %v142
    %v1776 = vunpack.c.l.b16 %v143
    %v1777 = vunpack.c.h.b16 %v143
    %v1778 = vunpack.c.l.b16 %v144
    %v1779 = vunpack.c.h.b16 %v144
    %v1780 = vunpack.c.l.b16 %v145
    %v1781 = vunpack.c.h.b16 %v145
    %v1782 = vunpack.c.l.b16 %v146
    %v1783 = vunpack.c.h.b16 %v146
    %v1784 = vunpack.c.l.b16 %v147
    %v1785 = vunpack.c.h.b16 %v147
    %v1786 = vunpack.c.l.b16 %v148
    %v1787 = vunpack.c.h.b16 %v148
    %v1788 = vunpack.c.l.b16 %v149
    %v1789 = vunpack.c.h.b16 %v149
    %v1790 = vunpack.c.l.b16 %v150
    %v1791 = vunpack.c.h.b16 %v150
    %v1792 = vunpack.c.l.b16 %v151
    %v1793 = vunpack.c.h.b16 %v151
    %v1794 = vunpack.c.l.b16 %v152
    %v1795 = vunpack.c.h.b16 %v152
    %v1796 = vunpack.c.l.b16 %v153
    %v1797 = vunpack.c.h.b16 %v153
    %v1798 = vunpack.c.l.b16 %v154
    %v1799 = vunpack.c.h.b16 %v154
    %v1800 = vunpack.c.l.b16 %v155
    %v1801 = vunpack.c.h.b16 %v155
    %v1802 = vunpack.c.l.b16 %v156
    %v1803 = vunpack.c.h.b16 %v156
    %v1804 = vunpack.c.l.b16 %v157
    %v1805 = vunpack.c.h.b16 %v157
    %v1806 = vunpack.c.l.b16 %v158
    %v1807 = vunpack.c.h.b16 %v158
    %v1808 = vunpack.c.l.b16 %v159
    %v1809 = vunpack.c.h.b16 %v159
    %v1810 = vunpack.c.l.b16 %v160
    %v1811 = vunpack.c.h.b16 %v160
    %v1812 = vunpack.c.l.b16 %v161
    %v1813 = vunpack.c.h.b16 %v161
    %v1814 = vunpack.c.l.b16 %v162
    %v1815 = vunpack.c.h.b16 %v162
    %v1816 = vunpack.c.l.b16 %v163
    %v1817 = vunpack.c.h.b16 %v163
    %v1818 = vunpack.c.l.b16 %v164
    %v1819 = vunpack.c.h.b16 %v164
    %v1820 = vunpack.c.l.b16 %v165
    %v1821 = vunpack.c.h.b16 %v165
    %v1822 = vunpack.c.l.b16 %v166
    %v1823 = vunpack.c.h.b16 %v166
    %v1824 = vunpack.c.l.b16 %v167
    %v1825 = vunpack.c.h.b16 %v167
    %v1826 = vunpack.c.l.b16 %v168
    %v1827 = vunpack.c.h.b16 %v168
    %v1828 = vunpack.c.l.b16 %v169
    %v1829 = vunpack.c.h.b16 %v169
    %v1830 = vunpack.c.l.b16 %v170
    %v1831 = vunpack.c.h.b16 %v170
    %v1832 = vunpack.c.l.b16 %v171
    %v1833 = vunpack.c.h.b16 %v171
    %v1834 = vunpack.c.l.b16 %v172
    %v1835 = vunpack.c.h.b16 %v172
    %v1836 = vunpack.c.l.b16 %v173
    %v1837 = vunpack.c.h.b16 %v173
    %v1838 = vunpack.c.l.b16 %v174
    %v1839 = vunpack.c.h.b16 %v174
    %v1840 = vunpack.c.l.b16 %v175
    %v1841 = vunpack.c.h.b16 %v175
    %v1842 = vunpack.c.l.b16 %v176
    %v1843 = vunpack.c.h.b16 %v176
    %v1844 = vunpack.c.l.b16 %v177
    %v1845 = vunpack.c.h.b16 %v177
    %v1846 = vunpack.c.l.b16 %v178
    %v1847 = vunpack.c.h.b16 %v178
    %v1848 = vunpack.c.l.b16 %v179
    %v1849 = vunpack.c.h.b16 %v179
    %v1850 = vunpack.c.l.b16 %v180
    %v1851 = vunpack.c.h.b16 %v180
    %v1852 = vunpack.c.l.b16 %v181
    %v1853 = vunpack.c.h.b16 %v181
    %v1854 = vunpack.c.l.b16 %v182
    %v1855 = vunpack.c.h.b16 %v182
    %v1856 = vunpack.c.l.b16 %v183
    %v1857 = vunpack.c.h.b16 %v183
    %v1858 = vunpack.c.l.b16 %v184
    %v1859 = vunpack.c.h.b16 %v184
    %v1860 = vunpack.c.l.b16 %v185
    %v1861 = vunpack.c.h.b16 %v185
    %v1862 = vunpack.c.l.b16 %v186
    %v1863 = vunpack.c.h.b16 %v186
    %v1864 = vunpack.c.l.b16 %v187
    %v1865 = vunpack.c.h.b16 %v187
    %v1866 = vunpack.c.l.b16 %v188
    %v1867 = vunpack.c.h.b16 %v188
    %v1868 = vunpack.c.l.b16 %v189
    %v1869 = vunpack.c.h.b16 %v189
    %v1870 = vunpack.c.l.b16 %v190
    %v1871 = vunpack.c.h.b16 %v190
    %v1872 = vunpack.c.l.b16 %v191
    %v1873 = vunpack.c.h.b16 %v191
    %v1874 = vunpack.c.l.b16 %v192
    %v1875 = vunpack.c.h.b16 %v192
    %v1876 = vunpack.c.l.b16 %v193
    %v1877 = vunpack.c.h.b16 %v193
    %v1878 = vunpack.c.l.b16 %v194
    %v1879 = vunpack.c.h.b16 %v194
    %v1880 = vunpack.c.l.b16 %v195
    %v1881 = vunpack.c.h.b16 %v195
    %v1882 = vunpack.c.l.b16 %v196
    %v1883 = vunpack.c.h.b16 %v196
    %v1884 = vunpack.c.l.b16 %v197
    %v1885 = vunpack.c.h.b16 %v197
    %v1886 = vunpack.c.l.b16 %v198
    %v1887 = vunpack.c.h.b16 %v198
    %v1888 = vunpack.c.l.b16 %v199
    %v1889 = vunpack.c.h.b16 %v199
    %v1890 = vunpack.c.l.b16 %v200
    %v1891 = vunpack.c.h.b16 %v200
    %v1892 = vunpack.c.l.b16 %v201
    %v1893 = vunpack.c.h.b16 %v201
    %v1894 = vunpack.c.l.b16 %v202
    %v1895 = vunpack.c.h.b16 %v202
    %v1896 = vunpack.c.l.b16 %v203
    %v1897 = vunpack.c.h.b16 %v203
    %v1898 = vunpack.c.l.b16 %v204
    %v1899 = vunpack.c.h.b16 %v204
    %v1900 = vunpack.c.l.b16 %v205
    %v1901 = vunpack.c.h.b16 %v205
    %v1902 = vunpack.c.l.b16 %v206
    %v1903 = vunpack.c.h.b16 %v206
    %v1904 = vunpack.c.l.b16 %v207
    %v1905 = vunpack.c.h.b16 %v207
    %v1906 = vunpack.c.l.b16 %v208
    %v1907 = vunpack.c.h.b16 %v208
    %v1908 = vunpack.c.l.b16 %v209
    %v1909 = vunpack.c.h.b16 %v209
    %v1910 = vunpack.c.l.b16 %v210
    %v1911 = vunpack.c.h.b16 %v210
    %v1912 = vunpack.c.l.b16 %v211
    %v1913 = vunpack.c.h.b16 %v211
    %v1914 = vunpack.c.l.b16 %v212
    %v1915 = vunpack.c.h.b16 %v212
    %v1916 = vunpack.c.l.b16 %v213
    %v1917 = vunpack.c.h.b16 %v213
    %v1918 = vunpack.c.l.b16 %v214
    %v1919 = vunpack.c.h.b16 %v214
    %v1920 = vunpack.c.l.b16 %v215
    %v1921 = vunpack.c.h.b16 %v215
    %v1922 = vunpack.c.l.b16 %v216
    %v1923 = vunpack.c.h.b16 %v216
    %v1924 = vunpack.c.l.b16 %v217
    %v1925 = vunpack.c.h.b16 %v217
    %v1926 = vunpack.c.l.b16 %v218
    %v1927 = vunpack.c.h.b16 %v218
    %v1928 = vunpack.c.l.b16 %v219
    %v1929 = vunpack.c.h.b16 %v219
    %v1930 = vunpack.c.l.b16 %v220
    %v1931 = vunpack.c.h.b16 %v220
    %v1932 = vunpack.c.l.b16 %v221
    %v1933 = vunpack.c.h.b16 %v221
    %v1934 = vunpack.c.l.b16 %v222
    %v1935 = vunpack.c.h.b16 %v222
    %v1936 = vunpack.c.l.b16 %v223
    %v1937 = vunpack.c.h.b16 %v223
    %v1938 = vunpack.c.l.b16 %v224
    %v1939 = vunpack.c.h.b16 %v224
    %v1940 = vunpack.c.l.b16 %v225
    %v1941 = vunpack.c.h.b16 %v225
    %v1942 = vunpack.c.l.b16 %v226
    %v1943 = vunpack.c.h.b16 %v226
    %v1944 = vunpack.c.l.b16 %v227
    %v1945 = vunpack.c.h.b16 %v227
    %v1946 = vunpack.c.l.b16 %v228
    %v1947 = vunpack.c.h.b16 %v228
    %v1948 = vunpack.c.l.b16 %v229
    %v1949 = vunpack.c.h.b16 %v229
    %v1950 = vunpack.c.l.b16 %v230
    %v1951 = vunpack.c.h.b16 %v230
    %v1952 = vunpack.c.l.b16 %v231
    %v1953 = vunpack.c.h.b16 %v231
    %v1954 = vunpack.c.l.b16 %v232
    %v1955 = vunpack.c.h.b16 %v232
    %v1956 = vunpack.c.l.b16 %v233
    %v1957 = vunpack.c.h.b16 %v233
    %v1958 = vunpack.c.l.b16 %v234
    %v1959 = vunpack.c.h.b16 %v234
    %v1960 = vunpack.c.l.b16 %v235
    %v1961 = vunpack.c.h.b16 %v235
    %v1962 = vunpack.c.l.b16 %v236
    %v1963 = vunpack.c.h.b16 %v236
    %v1964 = vunpack.c.l.b16 %v237
    %v1965 = vunpack.c.h.b16 %v237
    %v1966 = vunpack.c.l.b16 %v238
    %v1967 = vunpack.c.h.b16 %v238
    %v1968 = vunpack.c.l.b16 %v239
    %v1969 = vunpack.c.h.b16 %v239
    %v1970 = vunpack.c.l.b16 %v240
    %v1971 = vunpack.c.h.b16 %v240
    %v1972 = vunpack.c.l.b16 %v241
    %v1973 = vunpack.c.h.b16 %v241
    %v1974 = vunpack.c.l.b16 %v242
    %v1975 = vunpack.c.h.b16 %v242
    %v1976 = vunpack.c.l.b16 %v243
    %v1977 = vunpack.c.h.b16 %v243
    %v1978 = vunpack.c.l.b16 %v244
    %v1979 = vunpack.c.h.b16 %v244
    %v1980 = vunpack.c.l.b16 %v245
    %v1981 = vunpack.c.h.b16 %v245
    %v1982 = vunpack.c.l.b16 %v246
    %v1983 = vunpack.c.h.b16 %v246
    %v1984 = vunpack.c.l.b16 %v247
    %v1985 = vunpack.c.h.b16 %v247
    %v1986 = vunpack.c.l.b16 %v248
    %v1987 = vunpack.c.h.b16 %v248
    %v1988 = vunpack.c.l.b16 %v249
    %v1989 = vunpack.c.h.b16 %v249
    %v1990 = vunpack.c.l.b16 %v250
    %v1991 = vunpack.c.h.b16 %v250
    %v1992 = vunpack.c.l.b16 %v251
    %v1993 = vunpack.c.h.b16 %v251
    %v1994 = vunpack.c.l.b16 %v252
    %v1995 = vunpack.c.h.b16 %v252
    %v1996 = vunpack.c.l.b16 %v253
    %v1997 = vunpack.c.h.b16 %v253
    %v1998 = vunpack.c.l.b16 %v254
    %v1999 = vunpack.c.h.b16 %v254
    %v2000 = vunpack.c.l.b16 %v255
    %v2001 = vunpack.c.h.b16 %v255
    %v2002 = vunpack.c.l.b16 %v256
    %v2003 = vunpack.c.h.b16 %v256
    %v2004 = vunpack.c.l.b16 %v257
    %v2005 = vunpack.c.h.b16 %v257
    %v2006 = vunpack.c.l.b16 %v258
    %v2007 = vunpack.c.h.b16 %v258
    %v2008 = vunpack.c.l.b16 %v259
    %v2009 = vunpack.c.h.b16 %v259
    %v2010 = vunpack.c.l.b16 %v260
    %v2011 = vunpack.c.h.b16 %v260
    %v2012 = vunpack.c.l.b16 %v261
    %v2013 = vunpack.c.h.b16 %v261
    %v2014 = vunpack.c.l.b16 %v262
    %v2015 = vunpack.c.h.b16 %v262
    %v2016 = vunpack.c.l.b16 %v263
    %v2017 = vunpack.c.h.b16 %v263
    %v2018 = vunpack.c.l.b16 %v264
    %v2019 = vunpack.c.h.b16 %v264
    %v2020 = vunpack.c.l.b16 %v265
    %v2021 = vunpack.c.h.b16 %v265
    %v2022 = vunpack.c.l.b16 %v266
    %v2023 = vunpack.c.h.b16 %v266
    %v2024 = vunpack.c.l.b16 %v267
    %v2025 = vunpack.c.h.b16 %v267
    %v2026 = vunpack.c.l.b16 %v268
    %v2027 = vunpack.c.h.b16 %v268
    %v2028 = vunpack.c.l.b16 %v269
    %v2029 = vunpack.c.h.b16 %v269
    %v2030 = vunpack.c.l.b16 %v270
    %v2031 = vunpack.c.h.b16 %v270
    %v2032 = vunpack.c.l.b16 %v271
    %v2033 = vunpack.c.h.b16 %v271
    %v2034 = vunpack.c.l.b16 %v272
    %v2035 = vunpack.c.h.b16 %v272
    %v2036 = vunpack.c.l.b16 %v273
    %v2037 = vunpack.c.h.b16 %v273
    %v2038 = vunpack.c.l.b16 %v274
    %v2039 = vunpack.c.h.b16 %v274
    %v2040 = vunpack.c.l.b16 %v275
    %v2041 = vunpack.c.h.b16 %v275
    %v2042 = vunpack.c.l.b16 %v276
    %v2043 = vunpack.c.h.b16 %v276
    %v2044 = vunpack.c.l.b16 %v277
    %v2045 = vunpack.c.h.b16 %v277
    %v2046 = vunpack.c.l.b16 %v278
    %v2047 = vunpack.c.h.b16 %v278
    %v2048 = vunpack.c.l.b16 %v279
    %v2049 = vunpack.c.h.b16 %v279
    %v2050 = vunpack.c.l.b16 %v280
    %v2051 = vunpack.c.h.b16 %v280
    %v2052 = vunpack.c.l.b16 %v281
    %v2053 = vunpack.c.h.b16 %v281
    %v2054 = vunpack.c.l.b16 %v282
    %v2055 = vunpack.c.h.b16 %v282
    %v2056 = vunpack.c.l.b16 %v283
    %v2057 = vunpack.c.h.b16 %v283
    %v2058 = vunpack.c.l.b16 %v284
    %v2059 = vunpack.c.h.b16 %v284
    %v2060 = vunpack.c.l.b16 %v285
    %v2061 = vunpack.c.h.b16 %v285
    %v2062 = vunpack.c.l.b16 %v286
    %v2063 = vunpack.c.h.b16 %v286
    %v2064 = vunpack.c.l.b16 %v287
    %v2065 = vunpack.c.h.b16 %v287
    %v2066 = vunpack.c.l.b16 %v288
    %v2067 = vunpack.c.h.b16 %v288
    %v2068 = vunpack.c.l.b16 %v289
    %v2069 = vunpack.c.h.b16 %v289
    %v2070 = vunpack.c.l.b16 %v290
    %v2071 = vunpack.c.h.b16 %v290
    %v2072 = vunpack.c.l.b16 %v291
    %v2073 = vunpack.c.h.b16 %v291
    %v2074 = vunpack.c.l.b16 %v292
    %v2075 = vunpack.c.h.b16 %v292
    %v2076 = vunpack.c.l.b16 %v293
    %v2077 = vunpack.c.h.b16 %v293
    %v2078 = vunpack.c.l.b16 %v294
    %v2079 = vunpack.c.h.b16 %v294
    %v2080 = vunpack.c.l.b16 %v295
    %v2081 = vunpack.c.h.b16 %v295
    %v2082 = vunpack.c.l.b16 %v296
    %v2083 = vunpack.c.h.b16 %v296
    %v2084 = vunpack.c.l.b16 %v297
    %v2085 = vunpack.c.h.b16 %v297
    %v2086 = vunpack.c.l.b16 %v298
    %v2087 = vunpack.c.h.b16 %v298
    %v2088 = vunpack.c.l.b16 %v299
    %v2089 = vunpack.c.h.b16 %v299
    %v2090 = vunpack.c.l.b16 %v300
    %v2091 = vunpack.c.h.b16 %v300
    %v2092 = vunpack.c.l.b16 %v301
    %v2093 = vunpack.c.h.b16 %v301
    %v2094 = vunpack.c.l.b16 %v302
    %v2095 = vunpack.c.h.b16 %v302
    %v2096 = vunpack.c.l.b16 %v303
    %v2097 = vunpack.c.h.b16 %v303
    %v2098 = vunpack.c.l.b16 %v304
    %v2099 = vunpack.c.h.b16 %v304
    %v2100 = vunpack.c.l.b16 %v305
    %v2101 = vunpack.c.h.b16 %v305
    %v2102 = vunpack.c.l.b16 %v306
    %v2103 = vunpack.c.h.b16 %v306
    %v2104 = vunpack.c.l.b16 %v307
    %v2105 = vunpack.c.h.b16 %v307
    %v2106 = vunpack.c.l.b16 %v308
    %v2107 = vunpack.c.h.b16 %v308
    %v2108 = vunpack.c.l.b16 %v309
    %v2109 = vunpack.c.h.b16 %v309
    %v2110 = vunpack.c.l.b16 %v310
    %v2111 = vunpack.c.h.b16 %v310
    %v2112 = vunpack.c.l.b16 %v311
    %v2113 = vunpack.c.h.b16 %v311
    %v2114 = vunpack.c.l.b16 %v312
    %v2115 = vunpack.c.h.b16 %v312
    %v2116 = vunpack.c.l.b16 %v313
    %v2117 = vunpack.c.h.b16 %v313
    %v2118 = vunpack.c.l.b16 %v314
    %v2119 = vunpack.c.h.b16 %v314
    %v2120 = vunpack.c.l.b16 %v315
    %v2121 = vunpack.c.h.b16 %v315
    %v2122 = vunpack.c.l.b16 %v316
    %v2123 = vunpack.c.h.b16 %v316
    %v2124 = vunpack.c.l.b16 %v317
    %v2125 = vunpack.c.h.b16 %v317
    %v2126 = vunpack.c.l.b16 %v318
    %v2127 = vunpack.c.h.b16 %v318
    %v2128 = vunpack.c.l.b16 %v319
    %v2129 = vunpack.c.h.b16 %v319
    %v2130 = vunpack.c.l.b16 %v320
    %v2131 = vunpack.c.h.b16 %v320
    %v2132 = vunpack.c.l.b16 %v321
    %v2133 = vunpack.c.h.b16 %v321
    %v2134 = vunpack.c.l.b16 %v322
    %v2135 = vunpack.c.h.b16 %v322
    %v2136 = vunpack.c.l.b16 %v323
    %v2137 = vunpack.c.h.b16 %v323
    %v2138 = vunpack.c.l.b16 %v324
    %v2139 = vunpack.c.h.b16 %v324
    %v2140 = vunpack.c.l.b16 %v325
    %v2141 = vunpack.c.h.b16 %v325
    %v2142 = vunpack.c.l.b16 %v326
    %v2143 = vunpack.c.h.b16 %v326
    %v2144 = vunpack.c.l.b16 %v327
    %v2145 = vunpack.c.h.b16 %v327
    %v2146 = vunpack.c.l.b16 %v328
    %v2147 = vunpack.c.h.b16 %v328
    %v2148 = vunpack.c.l.b16 %v329
    %v2149 = vunpack.c.h.b16 %v329
    %v2150 = vunpack.c.l.b16 %v330
    %v2151 = vunpack.c.h.b16 %v330
    %v2152 = vunpack.c.l.b16 %v331
    %v2153 = vunpack.c.h.b16 %v331
    %v2154 = vunpack.c.l.b16 %v332
    %v2155 = vunpack.c.h.b16 %v332
    %v2156 = vunpack.c.l.b16 %v333
    %v2157 = vunpack.c.h.b16 %v333
    %v2158 = vunpack.c.l.b16 %v334
    %v2159 = vunpack.c.h.b16 %v334
    %v2160 = vunpack.c.l.b16 %v335
    %v2161 = vunpack.c.h.b16 %v335
    %v2162 = vunpack.c.l.b16 %v336
    %v2163 = vunpack.c.h.b16 %v336
    %v2164 = vunpack.c.l.b16 %v337
    %v2165 = vunpack.c.h.b16 %v337
    %v2166 = vunpack.c.l.b16 %v338
    %v2167 = vunpack.c.h.b16 %v338
    %v2168 = vunpack.c.l.b16 %v339
    %v2169 = vunpack.c.h.b16 %v339
    %v2170 = vunpack.c.l.b16 %v340
    %v2171 = vunpack.c.h.b16 %v340
    %v2172 = vunpack.c.l.b16 %v341
    %v2173 = vunpack.c.h.b16 %v341
    %v2174 = vunpack.c.l.b16 %v342
    %v2175 = vunpack.c.h.b16 %v342
    %v2176 = vunpack.c.l.b16 %v343
    %v2177 = vunpack.c.h.b16 %v343
    %v2178 = vunpack.c.l.b16 %v344
    %v2179 = vunpack.c.h.b16 %v344
    %v2180 = vunpack.c.l.b16 %v345
    %v2181 = vunpack.c.h.b16 %v345
    %v2182 = vunpack.c.l.b16 %v346
    %v2183 = vunpack.c.h.b16 %v346
    %v2184 = vunpack.c.l.b16 %v347
    %v2185 = vunpack.c.h.b16 %v347
    %v2186 = vunpack.c.l.b16 %v348
    %v2187 = vunpack.c.h.b16 %v348
    %v2188 = vunpack.c.l.b16 %v349
    %v2189 = vunpack.c.h.b16 %v349
    %v2190 = vunpack.c.l.b16 %v350
    %v2191 = vunpack.c.h.b16 %v350
    %v2192 = vunpack.c.l.b16 %v351
    %v2193 = vunpack.c.h.b16 %v351
    %v2194 = vunpack.c.l.b16 %v352
    %v2195 = vunpack.c.h.b16 %v352
    %v2196 = vunpack.c.l.b16 %v353
    %v2197 = vunpack.c.h.b16 %v353
    %v2198 = vunpack.c.l.b16 %v354
    %v2199 = vunpack.c.h.b16 %v354
    %v2200 = vunpack.c.l.b16 %v355
    %v2201 = vunpack.c.h.b16 %v355
    %v2202 = vunpack.c.l.b16 %v356
    %v2203 = vunpack.c.h.b16 %v356
    %v2204 = vunpack.c.l.b16 %v357
    %v2205 = vunpack.c.h.b16 %v357
    %v2206 = vunpack.c.l.b16 %v358
    %v2207 = vunpack.c.h.b16 %v358
    %v2208 = vunpack.c.l.b16 %v359
    %v2209 = vunpack.c.h.b16 %v359
    %v2210 = vunpack.c.l.b16 %v360
    %v2211 = vunpack.c.h.b16 %v360
    %v2212 = vunpack.c.l.b16 %v361
    %v2213 = vunpack.c.h.b16 %v361
    %v2214 = vunpack.c.l.b16 %v362
    %v2215 = vunpack.c.h.b16 %v362
    %v2216 = vunpack.c.l.b16 %v363
    %v2217 = vunpack.c.h.b16 %v363
    %v2218 = vunpack.c.l.b16 %v364
    %v2219 = vunpack.c.h.b16 %v364
    %v2220 = vunpack.c.l.b16 %v365
    %v2221 = vunpack.c.h.b16 %v365
    %v2222 = vunpack.c.l.b16 %v366
    %v2223 = vunpack.c.h.b16 %v366
    %v2224 = vunpack.c.l.b16 %v367
    %v2225 = vunpack.c.h.b16 %v367
    %v2226 = vunpack.c.l.b16 %v368
    %v2227 = vunpack.c.h.b16 %v368
    %v2228 = vunpack.c.l.b16 %v369
    %v2229 = vunpack.c.h.b16 %v369
    %v2230 = vunpack.c.l.b16 %v370
    %v2231 = vunpack.c.h.b16 %v370
    %v2232 = vunpack.c.l.b16 %v371
    %v2233 = vunpack.c.h.b16 %v371
    %v2234 = vunpack.c.l.b16 %v372
    %v2235 = vunpack.c.h.b16 %v372
    %v2236 = vunpack.c.l.b16 %v373
    %v2237 = vunpack.c.h.b16 %v373
    %v2238 = vunpack.c.l.b16 %v374
    %v2239 = vunpack.c.h.b16 %v374
    %v2240 = vunpack.c.l.b16 %v375
    %v2241 = vunpack.c.h.b16 %v375
    %v2242 = vunpack.c.l.b16 %v376
    %v2243 = vunpack.c.h.b16 %v376
    %v2244 = vunpack.c.l.b16 %v377
    %v2245 = vunpack.c.h.b16 %v377
    %v2246 = vunpack.c.l.b16 %v378
    %v2247 = vunpack.c.h.b16 %v378
    %v2248 = vunpack.c.l.b16 %v379
    %v2249 = vunpack.c.h.b16 %v379
    %v2250 = vunpack.c.l.b16 %v380
    %v2251 = vunpack.c.h.b16 %v380
    %v2252 = vunpack.c.l.b16 %v381
    %v2253 = vunpack.c.h.b16 %v381
    %v2254 = vunpack.c.l.b16 %v382
    %v2255 = vunpack.c.h.b16 %v382
    %v2256 = vunpack.c.l.b16 %v383
    %v2257 = vunpack.c.h.b16 %v383
    %v2258 = vunpack.c.l.b16 %v384
    %v2259 = vunpack.c.h.b16 %v384
    %v2260 = vunpack.c.l.b16 %v385
    %v2261 = vunpack.c.h.b16 %v385
    %v2262 = vunpack.c.l.b16 %v386
    %v2263 = vunpack.c.h.b16 %v386
    %v2264 = vunpack.c.l.b16 %v387
    %v2265 = vunpack.c.h.b16 %v387
    %v2266 = vunpack.c.l.b16 %v388
    %v2267 = vunpack.c.h.b16 %v388
    %v2268 = vunpack.c.l.b16 %v389
    %v2269 = vunpack.c.h.b16 %v389
    %v2270 = vunpack.c.l.b16 %v390
    %v2271 = vunpack.c.h.b16 %v390
    %v2272 = vunpack.c.l.b16 %v391
    %v2273 = vunpack.c.h.b16 %v391
    %v2274 = vunpack.c.l.b16 %v392
    %v2275 = vunpack.c.h.b16 %v392
    %v2276 = vunpack.c.l.b16 %v393
    %v2277 = vunpack.c.h.b16 %v393
    %v2278 = vunpack.c.l.b16 %v394
    %v2279 = vunpack.c.h.b16 %v394
    %v2280 = vunpack.c.l.b16 %v395
    %v2281 = vunpack.c.h.b16 %v395
    %v2282 = vunpack.c.l.b16 %v396
    %v2283 = vunpack.c.h.b16 %v396
    %v2284 = vunpack.c.l.b16 %v397
    %v2285 = vunpack.c.h.b16 %v397
    %v2286 = vunpack.c.l.b16 %v398
    %v2287 = vunpack.c.h.b16 %v398
    %v2288 = vunpack.c.l.b16 %v399
    %v2289 = vunpack.c.h.b16 %v399
    %v2290 = vunpack.c.l.b16 %v400
    %v2291 = vunpack.c.h.b16 %v400
    %v2292 = vunpack.c.l.b16 %v401
    %v2293 = vunpack.c.h.b16 %v401
    %v2294 = vunpack.c.l.b16 %v402
    %v2295 = vunpack.c.h.b16 %v402
    %v2296 = vunpack.c.l.b16 %v403
    %v2297 = vunpack.c.h.b16 %v403
    %v2298 = vunpack.c.l.b16 %v404
    %v2299 = vunpack.c.h.b16 %v404
    %v2300 = vunpack.c.l.b16 %v405
    %v2301 = vunpack.c.h.b16 %v405
    %v2302 = vunpack.c.l.b16 %v406
    %v2303 = vunpack.c.h.b16 %v406
    %v2304 = vunpack.c.l.b16 %v407
    %v2305 = vunpack.c.h.b16 %v407
    %v2306 = vunpack.c.l.b16 %v408
    %v2307 = vunpack.c.h.b16 %v408
    %v2308 = vunpack.c.l.b16 %v409
    %v2309 = vunpack.c.h.b16 %v409
    %v2310 = vunpack.c.l.b16 %v410
    %v2311 = vunpack.c.h.b16 %v410
    %v2312 = vunpack.c.l.b16 %v411
    %v2313 = vunpack.c.h.b16 %v411
    %v2314 = vunpack.c.l.b16 %v412
    %v2315 = vunpack.c.h.b16 %v412
    %v2316 = vunpack.c.l.b16 %v413
    %v2317 = vunpack.c.h.b16 %v413
    %v2318 = vunpack.c.l.b16 %v414
    %v2319 = vunpack.c.h.b16 %v414
    %v2320 = vunpack.c.l.b16 %v415
    %v2321 = vunpack.c.h.b16 %v415
    %v2322 = vunpack.c.l.b16 %v416
    %v2323 = vunpack.c.h.b16 %v416
    %v2324 = vunpack.c.l.b16 %v417
    %v2325 = vunpack.c.h.b16 %v417
    %v2326 = vunpack.c.l.b16 %v418
    %v2327 = vunpack.c.h.b16 %v418
    %v2328 = vunpack.c.l.b16 %v419
    %v2329 = vunpack.c.h.b16 %v419
    %v2330 = vunpack.c.l.b16 %v420
    %v2331 = vunpack.c.h.b16 %v420
    %v2332 = vunpack.c.l.b16 %v421
    %v2333 = vunpack.c.h.b16 %v421
    %v2334 = vunpack.c.l.b16 %v422
    %v2335 = vunpack.c.h.b16 %v422
    %v2336 = vunpack.c.l.b16 %v423
    %v2337 = vunpack.c.h.b16 %v423
    %v2338 = vunpack.c.l.b16 %v424
    %v2339 = vunpack.c.h.b16 %v424
    %v2340 = vunpack.c.l.b16 %v425
    %v2341 = vunpack.c.h.b16 %v425
    %v2342 = vunpack.c.l.b16 %v426
    %v2343 = vunpack.c.h.b16 %v426
    %v2344 = vunpack.c.l.b16 %v427
    %v2345 = vunpack.c.h.b16 %v427
    %v2346 = vunpack.c.l.b16 %v428
    %v2347 = vunpack.c.h.b16 %v428
    %v2348 = vunpack.c.l.b16 %v429
    %v2349 = vunpack.c.h.b16 %v429
    %v2350 = vunpack.c.l.b16 %v430
    %v2351 = vunpack.c.h.b16 %v430
    %v2352 = vunpack.c.l.b16 %v431
    %v2353 = vunpack.c.h.b16 %v431
    %v2354 = vunpack.c.l.b16 %v432
    %v2355 = vunpack.c.h.b16 %v432
    %v2356 = vunpack.c.l.b16 %v433
    %v2357 = vunpack.c.h.b16 %v433
    %v2358 = vunpack.c.l.b16 %v434
    %v2359 = vunpack.c.h.b16 %v434
    %v2360 = vunpack.c.l.b16 %v435
    %v2361 = vunpack.c.h.b16 %v435
    %v2362 = vunpack.c.l.b16 %v436
    %v2363 = vunpack.c.h.b16 %v436
    %v2364 = vunpack.c.l.b16 %v437
    %v2365 = vunpack.c.h.b16 %v437
    %v2366 = vunpack.c.l.b16 %v438
    %v2367 = vunpack.c.h.b16 %v438
    %v2368 = vunpack.c.l.b16 %v439
    %v2369 = vunpack.c.h.b16 %v439
    %v2370 = vunpack.c.l.b16 %v440
    %v2371 = vunpack.c.h.b16 %v440
    %v2372 = vunpack.c.l.b16 %v441
    %v2373 = vunpack.c.h.b16 %v441
    %v2374 = vunpack.c.l.b16 %v442
    %v2375 = vunpack.c.h.b16 %v442
    %v2376 = vunpack.c.l.b16 %v443
    %v2377 = vunpack.c.h.b16 %v443
    %v2378 = vunpack.c.l.b16 %v444
    %v2379 = vunpack.c.h.b16 %v444
    %v2380 = vunpack.c.l.b16 %v445
    %v2381 = vunpack.c.h.b16 %v445
    %v2382 = vunpack.c.l.b16 %v446
    %v2383 = vunpack.c.h.b16 %v446
    %v2384 = vunpack.c.l.b16 %v447
    %v2385 = vunpack.c.h.b16 %v447
    %v2386 = vunpack.c.l.b16 %v448
    %v2387 = vunpack.c.h.b16 %v448
    %v2388 = vunpack.c.l.b16 %v449
    %v2389 = vunpack.c.h.b16 %v449
    %v2390 = vunpack.c.l.b16 %v450
    %v2391 = vunpack.c.h.b16 %v450
    %v2392 = vunpack.c.l.b16 %v451
    %v2393 = vunpack.c.h.b16 %v451
    %v2394 = vunpack.c.l.b16 %v452
    %v2395 = vunpack.c.h.b16 %v452
    %v2396 = vunpack.c.l.b16 %v453
    %v2397 = vunpack.c.h.b16 %v453
    %v2398 = vunpack.c.l.b16 %v454
    %v2399 = vunpack.c.h.b16 %v454
    %v2400 = vunpack.c.l.b16 %v455
    %v2401 = vunpack.c.h.b16 %v455
    %v2402 = vunpack.c.l.b16 %v456
    %v2403 = vunpack.c.h.b16 %v456
    %v2404 = vunpack.c.l.b16 %v457
    %v2405 = vunpack.c.h.b16 %v457
    %v2406 = vunpack.c.l.b16 %v458
    %v2407 = vunpack.c.h.b16 %v458
    %v2408 = vunpack.c.l.b16 %v459
    %v2409 = vunpack.c.h.b16 %v459
    %v2410 = vunpack.c.l.b16 %v460
    %v2411 = vunpack.c.h.b16 %v460
    %v2412 = vunpack.c.l.b16 %v461
    %v2413 = vunpack.c.h.b16 %v461
    %v2414 = vunpack.c.l.b16 %v462
    %v2415 = vunpack.c.h.b16 %v462
    %v2416 = vunpack.c.l.b16 %v463
    %v2417 = vunpack.c.h.b16 %v463
    %v2418 = vunpack.c.l.b16 %v464
    %v2419 = vunpack.c.h.b16 %v464
    %v2420 = vunpack.c.l.b16 %v465
    %v2421 = vunpack.c.h.b16 %v465
    %v2422 = vunpack.c.l.b16 %v466
    %v2423 = vunpack.c.h.b16 %v466
    %v2424 = vunpack.c.l.b16 %v467
    %v2425 = vunpack.c.h.b16 %v467
    %v2426 = vunpack.c.l.b16 %v468
    %v2427 = vunpack.c.h.b16 %v468
    %v2428 = vunpack.c.l.b16 %v469
    %v2429 = vunpack.c.h.b16 %v469
    %v2430 = vunpack.c.l.b16 %v470
    %v2431 = vunpack.c.h.b16 %v470
    %v2432 = vunpack.c.l.b16 %v471
    %v2433 = vunpack.c.h.b16 %v471
    %v2434 = vunpack.c.l.b16 %v472
    %v2435 = vunpack.c.h.b16 %v472
    %v2436 = vunpack.c.l.b16 %v473
    %v2437 = vunpack.c.h.b16 %v473
    %v2438 = vunpack.c.l.b16 %v474
    %v2439 = vunpack.c.h.b16 %v474
    %v2440 = vunpack.c.l.b16 %v475
    %v2441 = vunpack.c.h.b16 %v475
    %v2442 = vunpack.c.l.b16 %v476
    %v2443 = vunpack.c.h.b16 %v476
    %v2444 = vunpack.c.l.b16 %v477
    %v2445 = vunpack.c.h.b16 %v477
    %v2446 = vunpack.c.l.b16 %v478
    %v2447 = vunpack.c.h.b16 %v478
    %v2448 = vunpack.c.l.b16 %v479
    %v2449 = vunpack.c.h.b16 %v479
    %v2450 = vunpack.c.l.b16 %v480
    %v2451 = vunpack.c.h.b16 %v480
    %v2452 = vunpack.c.l.b16 %v481
    %v2453 = vunpack.c.h.b16 %v481
    %v2454 = vunpack.c.l.b16 %v482
    %v2455 = vunpack.c.h.b16 %v482
    %v2456 = vunpack.c.l.b16 %v483
    %v2457 = vunpack.c.h.b16 %v483
    %v2458 = vunpack.c.l.b16 %v484
    %v2459 = vunpack.c.h.b16 %v484
    %v2460 = vunpack.c.l.b16 %v485
    %v2461 = vunpack.c.h.b16 %v485
    %v2462 = vunpack.c.l.b16 %v486
    %v2463 = vunpack.c.h.b16 %v486
    %v2464 = vunpack.c.l.b16 %v487
    %v2465 = vunpack.c.h.b16 %v487
    %v2466 = vunpack.c.l.b16 %v488
    %v2467 = vunpack.c.h.b16 %v488
    %v2468 = vunpack.c.l.b16 %v489
    %v2469 = vunpack.c.h.b16 %v489
    %v2470 = vunpack.c.l.b16 %v490
    %v2471 = vunpack.c.h.b16 %v490
    %v2472 = vunpack.c.l.b16 %v491
    %v2473 = vunpack.c.h.b16 %v491
    %v2474 = vunpack.c.l.b16 %v492
    %v2475 = vunpack.c.h.b16 %v492
    %v2476 = vunpack.c.l.b16 %v493
    %v2477 = vunpack.c.h.b16 %v493
    %v2478 = vunpack.c.l.b16 %v494
    %v2479 = vunpack.c.h.b16 %v494
    %v2480 = vunpack.c.l.b16 %v495
    %v2481 = vunpack.c.h.b16 %v495
    %v2482 = vunpack.c.l.b16 %v496
    %v2483 = vunpack.c.h.b16 %v496
    %v2484 = vunpack.c.l.b16 %v497
    %v2485 = vunpack.c.h.b16 %v497
    %v2486 = vunpack.c.l.b16 %v498
    %v2487 = vunpack.c.h.b16 %v498
    %v2488 = vunpack.c.l.b16 %v499
    %v2489 = vunpack.c.h.b16 %v499
    %v2490 = vunpack.c.l.b16 %v500
    %v2491 = vunpack.c.h.b16 %v500
    %v2492 = vunpack.c.l.b16 %v501
    %v2493 = vunpack.c.h.b16 %v501
    %v2494 = vunpack.c.l.b16 %v502
    %v2495 = vunpack.c.h.b16 %v502
    %v2496 = vunpack.c.l.b16 %v503
    %v2497 = vunpack.c.h.b16 %v503
    %v2498 = vunpack.c.l.b16 %v504
    %v2499 = vunpack.c.h.b16 %v504
    %v2500 = vunpack.c.l.b16 %v505
    %v2501 = vunpack.c.h.b16 %v505
    %v2502 = vunpack.c.l.b16 %v506
    %v2503 = vunpack.c.h.b16 %v506
    %v2504 = vunpack.c.l.b16 %v507
    %v2505 = vunpack.c.h.b16 %v507
    %v2506 = vunpack.c.l.b16 %v508
    %v2507 = vunpack.c.h.b16 %v508
    %v2508 = vunpack.c.l.b16 %v509
    %v2509 = vunpack.c.h.b16 %v509
    %v2510 = vunpack.c.l.b16 %v510
    %v2511 = vunpack.c.h.b16 %v510
    %v2512 = vunpack.c.l.b16 %v511
    %v2513 = vunpack.c.h.b16 %v511
    %v2514 = vunpack.c.l.b16 %v512
    %v2515 = vunpack.c.h.b16 %v512
    %v2516 = vunpack.c.l.b16 %v513
    %v2517 = vunpack.c.h.b16 %v513
    %v2518 = vunpack.c.l.b16 %v514
    %v2519 = vunpack.c.h.b16 %v514
    %v2520 = vunpack.c.l.b16 %v515
    %v2521 = vunpack.c.h.b16 %v515
    %v2522 = vunpack.c.l.b16 %v516
    %v2523 = vunpack.c.h.b16 %v516
    %v2524 = vunpack.c.l.b16 %v517
    %v2525 = vunpack.c.h.b16 %v517
    %v2526 = vunpack.c.l.b16 %v518
    %v2527 = vunpack.c.h.b16 %v518
    %v2528 = vunpack.c.l.b16 %v519
    %v2529 = vunpack.c.h.b16 %v519
    %v2530 = vunpack.c.l.b16 %v520
    %v2531 = vunpack.c.h.b16 %v520
    %v2532 = vunpack.c.l.b16 %v521
    %v2533 = vunpack.c.h.b16 %v521
    %v2534 = vunpack.c.l.b16 %v522
    %v2535 = vunpack.c.h.b16 %v522
    %v2536 = vunpack.c.l.b16 %v523
    %v2537 = vunpack.c.h.b16 %v523
    %v2538 = vunpack.c.l.b16 %v524
    %v2539 = vunpack.c.h.b16 %v524
    %v2540 = vunpack.c.l.b16 %v525
    %v2541 = vunpack.c.h.b16 %v525
    %v2542 = vunpack.c.l.b16 %v526
    %v2543 = vunpack.c.h.b16 %v526
    %v2544 = vunpack.c.l.b16 %v527
    %v2545 = vunpack.c.h.b16 %v527
    %v2546 = vunpack.c.l.b16 %v528
    %v2547 = vunpack.c.h.b16 %v528
    %v2548 = vunpack.c.l.b16 %v529
    %v2549 = vunpack.c.h.b16 %v529
    %v2550 = vunpack.c.l.b16 %v530
    %v2551 = vunpack.c.h.b16 %v530
    %v2552 = vunpack.c.l.b16 %v531
    %v2553 = vunpack.c.h.b16 %v531
    %v2554 = vunpack.c.l.b16 %v532
    %v2555 = vunpack.c.h.b16 %v532
    %v2556 = vunpack.c.l.b16 %v533
    %v2557 = vunpack.c.h.b16 %v533
    %v2558 = vunpack.c.l.b16 %v534
    %v2559 = vunpack.c.h.b16 %v534
    %v2560 = vunpack.c.l.b16 %v535
    %v2561 = vunpack.c.h.b16 %v535
    %v2562 = vunpack.c.l.b16 %v536
    %v2563 = vunpack.c.h.b16 %v536
    %v2564 = vunpack.c.l.b16 %v537
    %v2565 = vunpack.c.h.b16 %v537
    %v2566 = vunpack.c.l.b16 %v538
    %v2567 = vunpack.c.h.b16 %v538
    %v2568 = vunpack.c.l.b16 %v539
    %v2569 = vunpack.c.h.b16 %v539
    %v2570 = vunpack.c.l.b16 %v540
    %v2571 = vunpack.c.h.b16 %v540
    %v2572 = vunpack.c.l.b16 %v541
    %v2573 = vunpack.c.h.b16 %v541
    %v2574 = vunpack.c.l.b16 %v542
    %v2575 = vunpack.c.h.b16 %v542
    %v2576 = vunpack.c.l.b16 %v543
    %v2577 = vunpack.c.h.b16 %v543
    %v2578 = vunpack.c.l.b16 %v544
    %v2579 = vunpack.c.h.b16 %v544
    %v2580 = vunpack.c.l.b16 %v545
    %v2581 = vunpack.c.h.b16 %v545
    %v2582 = vunpack.c.l.b16 %v546
    %v2583 = vunpack.c.h.b16 %v546
    %v2584 = vunpack.c.l.b16 %v547
    %v2585 = vunpack.c.h.b16 %v547
    %v2586 = vunpack.c.l.b16 %v548
    %v2587 = vunpack.c.h.b16 %v548
    %v2588 = vunpack.c.l.b16 %v549
    %v2589 = vunpack.c.h.b16 %v549
    %v2590 = vunpack.c.l.b16 %v550
    %v2591 = vunpack.c.h.b16 %v550
    %v2592 = vunpack.c.l.b16 %v551
    %v2593 = vunpack.c.h.b16 %v551
    %v2594 = vunpack.c.l.b16 %v552
    %v2595 = vunpack.c.h.b16 %v552
    %v2596 = vunpack.c.l.b16 %v553
    %v2597 = vunpack.c.h.b16 %v553
    %v2598 = vunpack.c.l.b16 %v554
    %v2599 = vunpack.c.h.b16 %v554
    %v2600 = vunpack.c.l.b16 %v555
    %v2601 = vunpack.c.h.b16 %v555
    %v2602 = vunpack.c.l.b16 %v556
    %v2603 = vunpack.c.h.b16 %v556
    %v2604 = vunpack.c.l.b16 %v557
    %v2605 = vunpack.c.h.b16 %v557
    %v2606 = vunpack.c.l.b16 %v558
    %v2607 = vunpack.c.h.b16 %v558
    %v2608 = vunpack.c.l.b16 %v559
    %v2609 = vunpack.c.h.b16 %v559
    %v2610 = vunpack.c.l.b16 %v560
    %v2611 = vunpack.c.h.b16 %v560
    %v2612 = vunpack.c.l.b16 %v561
    %v2613 = vunpack.c.h.b16 %v561
    %v2614 = vunpack.c.l.b16 %v562
    %v2615 = vunpack.c.h.b16 %v562
    %v2616 = vunpack.c.l.b16 %v563
    %v2617 = vunpack.c.h.b16 %v563
    %v2618 = vunpack.c.l.b16 %v564
    %v2619 = vunpack.c.h.b16 %v564
    %v2620 = vunpack.c.l.b16 %v565
    %v2621 = vunpack.c.h.b16 %v565
    %v2622 = vunpack.c.l.b16 %v566
    %v2623 = vunpack.c.h.b16 %v566
    %v2624 = vunpack.c.l.b16 %v567
    %v2625 = vunpack.c.h.b16 %v567
    %v2626 = vunpack.c.l.b16 %v568
    %v2627 = vunpack.c.h.b16 %v568
    %v2628 = vunpack.c.l.b16 %v569
    %v2629 = vunpack.c.h.b16 %v569
    %v2630 = vunpack.c.l.b16 %v570
    %v2631 = vunpack.c.h.b16 %v570
    %v2632 = vunpack.c.l.b16 %v571
    %v2633 = vunpack.c.h.b16 %v571
    %v2634 = vunpack.c.l.b16 %v572
    %v2635 = vunpack.c.h.b16 %v572
    %v2636 = vunpack.c.l.b16 %v573
    %v2637 = vunpack.c.h.b16 %v573
    %v2638 = vunpack.c.l.b16 %v574
    %v2639 = vunpack.c.h.b16 %v574
    %v2640 = vunpack.c.l.b16 %v575
    %v2641 = vunpack.c.h.b16 %v575
    %v2642 = vunpack.c.l.b16 %v576
    %v2643 = vunpack.c.h.b16 %v576
    %v2644 = vunpack.c.l.b16 %v577
    %v2645 = vunpack.c.h.b16 %v577
    %v2646 = vunpack.c.l.b16 %v578
    %v2647 = vunpack.c.h.b16 %v578
    %v2648 = vunpack.c.l.b16 %v579
    %v2649 = vunpack.c.h.b16 %v579
    %v2650 = vunpack.c.l.b16 %v580
    %v2651 = vunpack.c.h.b16 %v580
    %v2652 = vunpack.c.l.b16 %v581
    %v2653 = vunpack.c.h.b16 %v581
    %v2654 = vunpack.c.l.b16 %v582
    %v2655 = vunpack.c.h.b16 %v582
    %v2656 = vunpack.c.l.b16 %v583
    %v2657 = vunpack.c.h.b16 %v583
    %v2658 = vunpack.c.l.b16 %v584
    %v2659 = vunpack.c.h.b16 %v584
    %v2660 = vunpack.c.l.b16 %v585
    %v2661 = vunpack.c.h.b16 %v585
    %v2662 = vunpack.c.l.b16 %v586
    %v2663 = vunpack.c.h.b16 %v586
    %v2664 = vunpack.c.l.b16 %v587
    %v2665 = vunpack.c.h.b16 %v587
    %v2666 = vunpack.c.l.b16 %v588
    %v2667 = vunpack.c.h.b16 %v588
    %v2668 = vunpack.c.l.b16 %v589
    %v2669 = vunpack.c.h.b16 %v589
    %v2670 = vunpack.c.l.b16 %v590
    %v2671 = vunpack.c.h.b16 %v590
    %v2672 = vunpack.c.l.b16 %v591
    %v2673 = vunpack.c.h.b16 %v591
    %v2674 = vunpack.c.l.b16 %v592
    %v2675 = vunpack.c.h.b16 %v592
    %v2676 = vunpack.c.l.b16 %v593
    %v2677 = vunpack.c.h.b16 %v593
    %v2678 = vunpack.c.l.b16 %v594
    %v2679 = vunpack.c.h.b16 %v594
    %v2680 = vunpack.c.l.b16 %v595
    %v2681 = vunpack.c.h.b16 %v595
    %v2682 = vunpack.c.l.b16 %v596
    %v2683 = vunpack.c.h.b16 %v596
    %v2684 = vunpack.c.l.b16 %v597
    %v2685 = vunpack.c.h.b16 %v597
    %v2686 = vunpack.c.l.b16 %v598
    %v2687 = vunpack.c.h.b16 %v598
    %v2688 = vunpack.c.l.b16 %v599
    %v2689 = vunpack.c.h.b16 %v599
    %v2690 = vunpack.c.l.b16 %v600
    %v2691 = vunpack.c.h.b16 %v600
    %v2692 = vunpack.c.l.b16 %v601
    %v2693 = vunpack.c.h.b16 %v601
    %v2694 = vunpack.c.l.b16 %v602
    %v2695 = vunpack.c.h.b16 %v602
    %v2696 = vunpack.c.l.b16 %v603
    %v2697 = vunpack.c.h.b16 %v603
    %v2698 = vunpack.c.l.b16 %v604
    %v2699 = vunpack.c.h.b16 %v604
    %v2700 = vunpack.c.l.b16 %v605
    %v2701 = vunpack.c.h.b16 %v605
    %v2702 = vunpack.c.l.b16 %v606
    %v2703 = vunpack.c.h.b16 %v606
    %v2704 = vunpack.c.l.b16 %v607
    %v2705 = vunpack.c.h.b16 %v607
    %v2706 = vunpack.c.l.b16 %v608
    %v2707 = vunpack.c.h.b16 %v608
    %v2708 = vunpack.c.l.b16 %v609
    %v2709 = vunpack.c.h.b16 %v609
    %v2710 = vunpack.c.l.b16 %v610
    %v2711 = vunpack.c.h.b16 %v610
    %v2712 = vunpack.c.l.b16 %v611
    %v2713 = vunpack.c.h.b16 %v611
    %v2714 = vunpack.c.l.b16 %v612
    %v2715 = vunpack.c.h.b16 %v612
    %v2716 = vunpack.c.l.b16 %v613
    %v2717 = vunpack.c.h.b16 %v613
    %v2718 = vunpack.c.l.b16 %v614
    %v2719 = vunpack.c.h.b16 %v614
    %v2720 = vunpack.c.l.b16 %v615
    %v2721 = vunpack.c.h.b16 %v615
    %v2722 = vunpack.c.l.b16 %v616
    %v2723 = vunpack.c.h.b16 %v616
    %v2724 = vunpack.c.l.b16 %v617
    %v2725 = vunpack.c.h.b16 %v617
    %v2726 = vunpack.c.l.b16 %v618
    %v2727 = vunpack.c.h.b16 %v618
    %v2728 = vunpack.c.l.b16 %v619
    %v2729 = vunpack.c.h.b16 %v619
    %v2730 = vunpack.c.l.b16 %v620
    %v2731 = vunpack.c.h.b16 %v620
    %v2732 = vunpack.c.l.b16 %v621
    %v2733 = vunpack.c.h.b16 %v621
    %v2734 = vunpack.c.l.b16 %v622
    %v2735 = vunpack.c.h.b16 %v622
    %v2736 = vunpack.c.l.b16 %v623
    %v2737 = vunpack.c.h.b16 %v623
    %v2738 = vunpack.c.l.b16 %v624
    %v2739 = vunpack.c.h.b16 %v624
    %v2740 = vunpack.c.l.b16 %v625
    %v2741 = vunpack.c.h.b16 %v625
    %v2742 = vunpack.c.l.b16 %v626
    %v2743 = vunpack.c.h.b16 %v626
    %v2744 = vunpack.c.l.b16 %v627
    %v2745 = vunpack.c.h.b16 %v627
    %v2746 = vunpack.c.l.b16 %v628
    %v2747 = vunpack.c.h.b16 %v628
    %v2748 = vunpack.c.l.b16 %v629
    %v2749 = vunpack.c.h.b16 %v629
    %v2750 = vunpack.c.l.b16 %v630
    %v2751 = vunpack.c.h.b16 %v630
    %v2752 = vunpack.c.l.b16 %v631
    %v2753 = vunpack.c.h.b16 %v631
    %v2754 = vunpack.c.l.b16 %v632
    %v2755 = vunpack.c.h.b16 %v632
    %v2756 = vunpack.c.l.b16 %v633
    %v2757 = vunpack.c.h.b16 %v633
    %v2758 = vunpack.c.l.b16 %v634
    %v2759 = vunpack.c.h.b16 %v634
    %v2760 = vunpack.c.l.b16 %v635
    %v2761 = vunpack.c.h.b16 %v635
    %v2762 = vunpack.c.l.b16 %v636
    %v2763 = vunpack.c.h.b16 %v636
    %v2764 = vunpack.c.l.b16 %v637
    %v2765 = vunpack.c.h.b16 %v637
    %v2766 = vunpack.c.l.b16 %v638
    %v2767 = vunpack.c.h.b16 %v638
    %v2768 = vunpack.c.l.b16 %v639
    %v2769 = vunpack.c.h.b16 %v639
    %v2770 = vunpack.c.l.b16 %v640
    %v2771 = vunpack.c.h.b16 %v640
    %v2772 = vunpack.c.l.b16 %v641
    %v2773 = vunpack.c.h.b16 %v641
    %v2774 = vunpack.c.l.b16 %v642
    %v2775 = vunpack.c.h.b16 %v642
    %v2776 = vunpack.c.l.b16 %v643
    %v2777 = vunpack.c.h.b16 %v643
    %v2778 = vunpack.c.l.b16 %v644
    %v2779 = vunpack.c.h.b16 %v644
    %v2780 = vunpack.c.l.b16 %v645
    %v2781 = vunpack.c.h.b16 %v645
    %v2782 = vunpack.c.l.b16 %v646
    %v2783 = vunpack.c.h.b16 %v646
    %v2784 = vunpack.c.l.b16 %v647
    %v2785 = vunpack.c.h.b16 %v647
    %v2786 = vunpack.c.l.b16 %v648
    %v2787 = vunpack.c.h.b16 %v648
    %v2788 = vunpack.c.l.b16 %v649
    %v2789 = vunpack.c.h.b16 %v649
    %v2790 = vunpack.c.l.b16 %v650
    %v2791 = vunpack.c.h.b16 %v650
    %v2792 = vunpack.c.l.b16 %v651
    %v2793 = vunpack.c.h.b16 %v651
    %v2794 = vunpack.c.l.b16 %v652
    %v2795 = vunpack.c.h.b16 %v652
    %v2796 = vunpack.c.l.b16 %v653
    %v2797 = vunpack.c.h.b16 %v653
    %v2798 = vunpack.c.l.b16 %v654
    %v2799 = vunpack.c.h.b16 %v654
    %v2800 = vunpack.c.l.b16 %v655
    %v2801 = vunpack.c.h.b16 %v655
    %v2802 = vunpack.c.l.b16 %v656
    %v2803 = vunpack.c.h.b16 %v656
    %v2804 = vunpack.c.l.b16 %v657
    %v2805 = vunpack.c.h.b16 %v657
    %v2806 = vunpack.c.l.b16 %v658
    %v2807 = vunpack.c.h.b16 %v658
    %v2808 = vunpack.c.l.b16 %v659
    %v2809 = vunpack.c.h.b16 %v659
    %v2810 = vunpack.c.l.b16 %v660
    %v2811 = vunpack.c.h.b16 %v660
    %v2812 = vunpack.c.l.b16 %v661
    %v2813 = vunpack.c.h.b16 %v661
    %v2814 = vunpack.c.l.b16 %v662
    %v2815 = vunpack.c.h.b16 %v662
    %v2816 = vunpack.c.l.b16 %v663
    %v2817 = vunpack.c.h.b16 %v663
    %v2818 = vunpack.c.l.b16 %v664
    %v2819 = vunpack.c.h.b16 %v664
    %v2820 = vunpack.c.l.b16 %v665
    %v2821 = vunpack.c.h.b16 %v665
    %v2822 = vunpack.c.l.b16 %v666
    %v2823 = vunpack.c.h.b16 %v666
    %v2824 = vunpack.c.l.b16 %v667
    %v2825 = vunpack.c.h.b16 %v667
    %v2826 = vunpack.c.l.b16 %v668
    %v2827 = vunpack.c.h.b16 %v668
    %v2828 = vunpack.c.l.b16 %v669
    %v2829 = vunpack.c.h.b16 %v669
    %v2830 = vunpack.c.l.b16 %v670
    %v2831 = vunpack.c.h.b16 %v670
    %v2832 = vunpack.c.l.b16 %v671
    %v2833 = vunpack.c.h.b16 %v671
    %v2834 = vunpack.c.l.b16 %v672
    %v2835 = vunpack.c.h.b16 %v672
    %v2836 = vunpack.c.l.b16 %v673
    %v2837 = vunpack.c.h.b16 %v673
    %v2838 = vunpack.c.l.b16 %v674
    %v2839 = vunpack.c.h.b16 %v674
    %v2840 = vunpack.c.l.b16 %v675
    %v2841 = vunpack.c.h.b16 %v675
    %v2842 = vunpack.c.l.b16 %v676
    %v2843 = vunpack.c.h.b16 %v676
    %v2844 = vunpack.c.l.b16 %v677
    %v2845 = vunpack.c.h.b16 %v677
    %v2846 = vunpack.c.l.b16 %v678
    %v2847 = vunpack.c.h.b16 %v678
    %v2848 = vunpack.c.l.b16 %v679
    %v2849 = vunpack.c.h.b16 %v679
    %v2850 = vunpack.c.l.b16 %v680
    %v2851 = vunpack.c.h.b16 %v680
    %v2852 = vunpack.c.l.b16 %v681
    %v2853 = vunpack.c.h.b16 %v681
    %v2854 = vunpack.c.l.b16 %v682
    %v2855 = vunpack.c.h.b16 %v682
    %v2856 = vunpack.c.l.b16 %v683
    %v2857 = vunpack.c.h.b16 %v683
    %v2858 = vunpack.c.l.b16 %v684
    %v2859 = vunpack.c.h.b16 %v684
    %v2860 = vunpack.c.l.b16 %v685
    %v2861 = vunpack.c.h.b16 %v685
    %v2862 = vunpack.c.l.b16 %v686
    %v2863 = vunpack.c.h.b16 %v686
    %v2864 = vunpack.c.l.b16 %v687
    %v2865 = vunpack.c.h.b16 %v687
    %v2866 = vunpack.c.l.b16 %v688
    %v2867 = vunpack.c.h.b16 %v688
    %v2868 = vunpack.c.l.b16 %v689
    %v2869 = vunpack.c.h.b16 %v689
    %v2870 = vunpack.c.l.b16 %v690
    %v2871 = vunpack.c.h.b16 %v690
    %v2872 = vunpack.c.l.b16 %v691
    %v2873 = vunpack.c.h.b16 %v691
    %v2874 = vunpack.c.l.b16 %v692
    %v2875 = vunpack.c.h.b16 %v692
    %v2876 = vunpack.c.l.b16 %v693
    %v2877 = vunpack.c.h.b16 %v693
    %v2878 = vunpack.c.l.b16 %v694
    %v2879 = vunpack.c.h.b16 %v694
    %v2880 = vunpack.c.l.b16 %v695
    %v2881 = vunpack.c.h.b16 %v695
    %v2882 = vunpack.c.l.b16 %v696
    %v2883 = vunpack.c.h.b16 %v696
    %v2884 = vunpack.c.l.b16 %v697
    %v2885 = vunpack.c.h.b16 %v697
    %v2886 = vunpack.c.l.b16 %v698
    %v2887 = vunpack.c.h.b16 %v698
    %v2888 = vunpack.c.l.b16 %v699
    %v2889 = vunpack.c.h.b16 %v699
    %v2890 = vunpack.c.l.b16 %v700
    %v2891 = vunpack.c.h.b16 %v700
    %v2892 = vunpack.c.l.b16 %v701
    %v2893 = vunpack.c.h.b16 %v701
    %v2894 = vunpack.c.l.b16 %v702
    %v2895 = vunpack.c.h.b16 %v702
    %v2896 = vunpack.c.l.b16 %v703
    %v2897 = vunpack.c.h.b16 %v703
    %v2898 = vunpack.c.l.b16 %v704
    %v2899 = vunpack.c.h.b16 %v704
    %v2900 = vunpack.c.l.b16 %v705
    %v2901 = vunpack.c.h.b16 %v705
    %v2902 = vunpack.c.l.b16 %v706
    %v2903 = vunpack.c.h.b16 %v706
    %v2904 = vunpack.c.l.b16 %v707
    %v2905 = vunpack.c.h.b16 %v707
    %v2906 = vunpack.c.l.b16 %v708
    %v2907 = vunpack.c.h.b16 %v708
    %v2908 = vunpack.c.l.b16 %v709
    %v2909 = vunpack.c.h.b16 %v709
    %v2910 = vunpack.c.l.b16 %v710
    %v2911 = vunpack.c.h.b16 %v710
    %v2912 = vunpack.c.l.b16 %v711
    %v2913 = vunpack.c.h.b16 %v711
    %v2914 = vunpack.c.l.b16 %v712
    %v2915 = vunpack.c.h.b16 %v712
    %v2916 = vunpack.c.l.b16 %v713
    %v2917 = vunpack.c.h.b16 %v713
    %v2918 = vunpack.c.l.b16 %v714
    %v2919 = vunpack.c.h.b16 %v714
    %v2920 = vunpack.c.l.b16 %v715
    %v2921 = vunpack.c.h.b16 %v715
    %v2922 = vunpack.c.l.b16 %v716
    %v2923 = vunpack.c.h.b16 %v716
    %v2924 = vunpack.c.l.b16 %v717
    %v2925 = vunpack.c.h.b16 %v717
    %v2926 = vunpack.c.l.b16 %v718
    %v2927 = vunpack.c.h.b16 %v718
    %v2928 = vunpack.c.l.b16 %v719
    %v2929 = vunpack.c.h.b16 %v719
    %v2930 = vunpack.c.l.b16 %v720
    %v2931 = vunpack.c.h.b16 %v720
    %v2932 = vunpack.c.l.b16 %v721
    %v2933 = vunpack.c.h.b16 %v721
    %v2934 = vunpack.c.l.b16 %v722
    %v2935 = vunpack.c.h.b16 %v722
    %v2936 = vunpack.c.l.b16 %v723
    %v2937 = vunpack.c.h.b16 %v723
    %v2938 = vunpack.c.l.b16 %v724
    %v2939 = vunpack.c.h.b16 %v724
    %v2940 = vunpack.c.l.b16 %v725
    %v2941 = vunpack.c.h.b16 %v725
    %v2942 = vunpack.c.l.b16 %v726
    %v2943 = vunpack.c.h.b16 %v726
    %v2944 = vunpack.c.l.b16 %v727
    %v2945 = vunpack.c.h.b16 %v727
    %v2946 = vunpack.c.l.b16 %v728
    %v2947 = vunpack.c.h.b16 %v728
    %v2948 = vunpack.c.l.b16 %v729
    %v2949 = vunpack.c.h.b16 %v729
    %v2950 = vunpack.c.l.b16 %v730
    %v2951 = vunpack.c.h.b16 %v730
    %v2952 = vunpack.c.l.b16 %v731
    %v2953 = vunpack.c.h.b16 %v731
    %v2954 = vunpack.c.l.b16 %v732
    %v2955 = vunpack.c.h.b16 %v732
    %v2956 = vunpack.c.l.b16 %v733
    %v2957 = vunpack.c.h.b16 %v733
    %v2958 = vunpack.c.l.b16 %v734
    %v2959 = vunpack.c.h.b16 %v734
    %v2960 = vunpack.c.l.b16 %v735
    %v2961 = vunpack.c.h.b16 %v735
    %v2962 = vunpack.c.l.b16 %v736
    %v2963 = vunpack.c.h.b16 %v736
    %v2964 = vunpack.c.l.b16 %v737
    %v2965 = vunpack.c.h.b16 %v737
    %v2966 = vunpack.c.l.b16 %v738
    %v2967 = vunpack.c.h.b16 %v738
    %v2968 = vunpack.c.l.b16 %v739
    %v2969 = vunpack.c.h.b16 %v739
    %v2970 = vunpack.c.l.b16 %v740
    %v2971 = vunpack.c.h.b16 %v740
    %v2972 = vunpack.c.l.b16 %v741
    %v2973 = vunpack.c.h.b16 %v741
    %v2974 = vunpack.c.l.b16 %v742
    %v2975 = vunpack.c.h.b16 %v742
    %v2976 = vunpack.c.l.b16 %v743
    %v2977 = vunpack.c.h.b16 %v743
    %v2978 = vunpack.c.l.b16 %v744
    %v2979 = vunpack.c.h.b16 %v744
    %v2980 = vunpack.c.l.b16 %v745
    %v2981 = vunpack.c.h.b16 %v745
    %v2982 = vunpack.c.l.b16 %v746
    %v2983 = vunpack.c.h.b16 %v746
    %v2984 = vunpack.c.l.b16 %v747
    %v2985 = vunpack.c.h.b16 %v747
    %v2986 = vunpack.c.l.b16 %v748
    %v2987 = vunpack.c.h.b16 %v748
    %v2988 = vunpack.c.l.b16 %v749
    %v2989 = vunpack.c.h.b16 %v749
    %v2990 = vunpack.c.l.b16 %v750
    %v2991 = vunpack.c.h.b16 %v750
    %v2992 = vunpack.c.l.b16 %v751
    %v2993 = vunpack.c.h.b16 %v751
    %v2994 = vunpack.c.l.b16 %v752
    %v2995 = vunpack.c.h.b16 %v752
    %v2996 = vunpack.c.l.b16 %v753
    %v2997 = vunpack.c.h.b16 %v753
    %v2998 = vunpack.c.l.b16 %v754
    %v2999 = vunpack.c.h.b16 %v754
    %v3000 = vunpack.c.l.b16 %v755
    %v3001 = vunpack.c.h.b16 %v755
    %v3002 = vunpack.c.l.b16 %v756
    %v3003 = vunpack.c.h.b16 %v756
    %v3004 = vunpack.c.l.b16 %v757
    %v3005 = vunpack.c.h.b16 %v757
    %v3006 = vunpack.c.l.b16 %v758
    %v3007 = vunpack.c.h.b16 %v758
    %v3008 = vunpack.c.l.b16 %v759
    %v3009 = vunpack.c.h.b16 %v759
    %v3010 = vunpack.c.l.b16 %v760
    %v3011 = vunpack.c.h.b16 %v760
    %v3012 = vunpack.c.l.b16 %v761
    %v3013 = vunpack.c.h.b16 %v761
    %v3014 = vunpack.c.l.b16 %v762
    %v3015 = vunpack.c.h.b16 %v762
    %v3016 = vunpack.c.l.b16 %v763
    %v3017 = vunpack.c.h.b16 %v763
    %v3018 = vunpack.c.l.b16 %v764
    %v3019 = vunpack.c.h.b16 %v764
    %v3020 = vunpack.c.l.b16 %v765
    %v3021 = vunpack.c.h.b16 %v765
    %v3022 = vunpack.c.l.b16 %v766
    %v3023 = vunpack.c.h.b16 %v766
    %v3024 = vunpack.c.l.b16 %v767
    %v3025 = vunpack.c.h.b16 %v767
    %v3026 = vunpack.c.l.b16 %v768
    %v3027 = vunpack.c.h.b16 %v768
    %v3028 = vunpack.c.l.b16 %v769
    %v3029 = vunpack.c.h.b16 %v769
    %v3030 = vunpack.c.l.b16 %v770
    %v3031 = vunpack.c.h.b16 %v770
    %v3032 = vunpack.c.l.b16 %v771
    %v3033 = vunpack.c.h.b16 %v771
    %v3034 = vunpack.c.l.b16 %v772
    %v3035 = vunpack.c.h.b16 %v772
    %v3036 = vunpack.c.l.b16 %v773
    %v3037 = vunpack.c.h.b16 %v773
    %v3038 = vunpack.c.l.b16 %v774
    %v3039 = vunpack.c.h.b16 %v774
    %v3040 = vunpack.c.l.b16 %v775
    %v3041 = vunpack.c.h.b16 %v775
    %v3042 = vunpack.c.l.b16 %v776
    %v3043 = vunpack.c.h.b16 %v776
    %v3044 = vunpack.c.l.b16 %v777
    %v3045 = vunpack.c.h.b16 %v777
    %v3046 = vunpack.c.l.b16 %v778
    %v3047 = vunpack.c.h.b16 %v778
    %v3048 = vunpack.c.l.b16 %v779
    %v3049 = vunpack.c.h.b16 %v779
    %v3050 = vunpack.c.l.b16 %v780
    %v3051 = vunpack.c.h.b16 %v780
    %v3052 = vunpack.c.l.b16 %v781
    %v3053 = vunpack.c.h.b16 %v781
    %v3054 = vunpack.c.l.b16 %v782
    %v3055 = vunpack.c.h.b16 %v782
    %v3056 = vunpack.c.l.b16 %v783
    %v3057 = vunpack.c.h.b16 %v783
    %v3058 = vunpack.c.l.b16 %v784
    %v3059 = vunpack.c.h.b16 %v784
    %v3060 = vunpack.c.l.b16 %v785
    %v3061 = vunpack.c.h.b16 %v785
    %v3062 = vunpack.c.l.b16 %v786
    %v3063 = vunpack.c.h.b16 %v786
    %v3064 = vunpack.c.l.b16 %v787
    %v3065 = vunpack.c.h.b16 %v787
    %v3066 = vunpack.c.l.b16 %v788
    %v3067 = vunpack.c.h.b16 %v788
    %v3068 = vunpack.c.l.b16 %v789
    %v3069 = vunpack.c.h.b16 %v789
    %v3070 = vunpack.c.l.b16 %v790
    %v3071 = vunpack.c.h.b16 %v790
    %v3072 = vunpack.c.l.b16 %v791
    %v3073 = vunpack.c.h.b16 %v791
    %v3074 = vunpack.c.l.b16 %v792
    %v3075 = vunpack.c.h.b16 %v792
    %v3076 = vunpack.c.l.b16 %v793
    %v3077 = vunpack.c.h.b16 %v793
    %v3078 = vunpack.c.l.b16 %v794
    %v3079 = vunpack.c.h.b16 %v794
    %v3080 = vunpack.c.l.b16 %v795
    %v3081 = vunpack.c.h.b16 %v795
    %v3082 = vunpack.c.l.b16 %v796
    %v3083 = vunpack.c.h.b16 %v796
    %v3084 = vunpack.c.l.b16 %v797
    %v3085 = vunpack.c.h.b16 %v797
    %v3086 = vunpack.c.l.b16 %v798
    %v3087 = vunpack.c.h.b16 %v798
    %v3088 = vunpack.c.l.b16 %v799
    %v3089 = vunpack.c.h.b16 %v799
    %v3090 = vunpack.c.l.b16 %v800
    %v3091 = vunpack.c.h.b16 %v800
    %v3092 = vunpack.c.l.b16 %v801
    %v3093 = vunpack.c.h.b16 %v801
    %v3094 = vunpack.c.l.b16 %v802
    %v3095 = vunpack.c.h.b16 %v802
    %v3096 = vunpack.c.l.b16 %v803
    %v3097 = vunpack.c.h.b16 %v803
    %v3098 = vunpack.c.l.b16 %v804
    %v3099 = vunpack.c.h.b16 %v804
    %v3100 = vunpack.c.l.b16 %v805
    %v3101 = vunpack.c.h.b16 %v805
    %v3102 = vunpack.c.l.b16 %v806
    %v3103 = vunpack.c.h.b16 %v806
    %v3104 = vunpack.c.l.b16 %v807
    %v3105 = vunpack.c.h.b16 %v807
    %v3106 = vunpack.c.l.b16 %v808
    %v3107 = vunpack.c.h.b16 %v808
    %v3108 = vunpack.c.l.b16 %v809
    %v3109 = vunpack.c.h.b16 %v809
    %v3110 = vunpack.c.l.b16 %v810
    %v3111 = vunpack.c.h.b16 %v810
    %v3112 = vunpack.c.l.b16 %v811
    %v3113 = vunpack.c.h.b16 %v811
    %v3114 = vunpack.c.l.b16 %v812
    %v3115 = vunpack.c.h.b16 %v812
    %v3116 = vunpack.c.l.b16 %v813
    %v3117 = vunpack.c.h.b16 %v813
    %v3118 = vunpack.c.l.b16 %v814
    %v3119 = vunpack.c.h.b16 %v814
    %v3120 = vunpack.c.l.b16 %v815
    %v3121 = vunpack.c.h.b16 %v815
    %v3122 = vunpack.c.l.b16 %v816
    %v3123 = vunpack.c.h.b16 %v816
    %v3124 = vunpack.c.l.b16 %v817
    %v3125 = vunpack.c.h.b16 %v817
    %v3126 = vunpack.c.l.b16 %v818
    %v3127 = vunpack.c.h.b16 %v818
    %v3128 = vunpack.c.l.b16 %v819
    %v3129 = vunpack.c.h.b16 %v819
    %v3130 = vunpack.c.l.b16 %v820
    %v3131 = vunpack.c.h.b16 %v820
    %v3132 = vunpack.c.l.b16 %v821
    %v3133 = vunpack.c.h.b16 %v821
    %v3134 = vunpack.c.l.b16 %v822
    %v3135 = vunpack.c.h.b16 %v822
    %v3136 = vunpack.c.l.b16 %v823
    %v3137 = vunpack.c.h.b16 %v823
    %v3138 = vunpack.c.l.b16 %v824
    %v3139 = vunpack.c.h.b16 %v824
    %v3140 = vunpack.c.l.b16 %v825
    %v3141 = vunpack.c.h.b16 %v825
    %v3142 = vunpack.c.l.b16 %v826
    %v3143 = vunpack.c.h.b16 %v826
    %v3144 = vunpack.c.l.b16 %v827
    %v3145 = vunpack.c.h.b16 %v827
    %v3146 = vunpack.c.l.b16 %v828
    %v3147 = vunpack.c.h.b16 %v828
    %v3148 = vunpack.c.l.b16 %v829
    %v3149 = vunpack.c.h.b16 %v829
    %v3150 = vunpack.c.l.b16 %v830
    %v3151 = vunpack.c.h.b16 %v830
    %v3152 = vunpack.c.l.b16 %v831
    %v3153 = vunpack.c.h.b16 %v831
    %v3154 = vunpack.c.l.b16 %v832
    %v3155 = vunpack.c.h.b16 %v832
    %v3156 = vunpack.c.l.b16 %v833
    %v3157 = vunpack.c.h.b16 %v833
    %v3158 = vunpack.c.l.b16 %v834
    %v3159 = vunpack.c.h.b16 %v834
    %v3160 = vunpack.c.l.b16 %v835
    %v3161 = vunpack.c.h.b16 %v835
    %v3162 = vunpack.c.l.b16 %v836
    %v3163 = vunpack.c.h.b16 %v836
    %v3164 = vunpack.c.l.b16 %v837
    %v3165 = vunpack.c.h.b16 %v837
    %v3166 = vunpack.c.l.b16 %v838
    %v3167 = vunpack.c.h.b16 %v838
    %v3168 = vunpack.c.l.b16 %v839
    %v3169 = vunpack.c.h.b16 %v839
    %v3170 = vunpack.c.l.b16 %v840
    %v3171 = vunpack.c.h.b16 %v840
    %v3172 = vunpack.c.l.b16 %v841
    %v3173 = vunpack.c.h.b16 %v841
    %v3174 = vunpack.c.l.b16 %v842
    %v3175 = vunpack.c.h.b16 %v842
    %v3176 = vunpack.c.l.b16 %v843
    %v3177 = vunpack.c.h.b16 %v843
    %v3178 = vunpack.c.l.b16 %v844
    %v3179 = vunpack.c.h.b16 %v844
    %v3180 = vunpack.c.l.b16 %v845
    %v3181 = vunpack.c.h.b16 %v845
    %v3182 = vunpack.c.l.b16 %v846
    %v3183 = vunpack.c.h.b16 %v846
    %v3184 = vunpack.c.l.b16 %v847
    %v3185 = vunpack.c.h.b16 %v847
    %v3186 = vunpack.c.l.b16 %v848
    %v3187 = vunpack.c.h.b16 %v848
    %v3188 = vunpack.c.l.b16 %v849
    %v3189 = vunpack.c.h.b16 %v849
    %v3190 = vunpack.c.l.b16 %v850
    %v3191 = vunpack.c.h.b16 %v850
    %v3192 = vunpack.c.l.b16 %v851
    %v3193 = vunpack.c.h.b16 %v851
    %v3194 = vunpack.c.l.b16 %v852
    %v3195 = vunpack.c.h.b16 %v852
    %v3196 = vunpack.c.l.b16 %v853
    %v3197 = vunpack.c.h.b16 %v853
    %v3198 = vunpack.c.l.b16 %v854
    %v3199 = vunpack.c.h.b16 %v854
    %v3200 = vunpack.c.l.b16 %v855
    %v3201 = vunpack.c.h.b16 %v855
    %v3202 = vunpack.c.l.b16 %v856
    %v3203 = vunpack.c.h.b16 %v856
    %v3204 = vunpack.c.l.b16 %v857
    %v3205 = vunpack.c.h.b16 %v857
    %v3206 = vunpack.c.l.b16 %v858
    %v3207 = vunpack.c.h.b16 %v858
    %v3208 = vunpack.c.l.b16 %v859
    %v3209 = vunpack.c.h.b16 %v859
    %v3210 = vunpack.c.l.b16 %v860
    %v3211 = vunpack.c.h.b16 %v860
    %v3212 = vunpack.c.l.b16 %v861
    %v3213 = vunpack.c.h.b16 %v861
    %v3214 = vunpack.c.l.b16 %v862
    %v3215 = vunpack.c.h.b16 %v862
    %v3216 = vunpack.c.l.b16 %v863
    %v3217 = vunpack.c.h.b16 %v863
    %v3218 = vunpack.c.l.b16 %v864
    %v3219 = vunpack.c.h.b16 %v864
    %v3220 = vunpack.c.l.b16 %v865
    %v3221 = vunpack.c.h.b16 %v865
    %v3222 = vunpack.c.l.b16 %v866
    %v3223 = vunpack.c.h.b16 %v866
    %v3224 = vunpack.c.l.b16 %v867
    %v3225 = vunpack.c.h.b16 %v867
    %v3226 = vunpack.c.l.b16 %v868
    %v3227 = vunpack.c.h.b16 %v868
    %v3228 = vunpack.c.l.b16 %v869
    %v3229 = vunpack.c.h.b16 %v869
    %v3230 = vunpack.c.l.b16 %v870
    %v3231 = vunpack.c.h.b16 %v870
    %v3232 = vunpack.c.l.b16 %v871
    %v3233 = vunpack.c.h.b16 %v871
    %v3234 = vunpack.c.l.b16 %v872
    %v3235 = vunpack.c.h.b16 %v872
    %v3236 = vunpack.c.l.b16 %v873
    %v3237 = vunpack.c.h.b16 %v873
    %v3238 = vunpack.c.l.b16 %v874
    %v3239 = vunpack.c.h.b16 %v874
    %v3240 = vunpack.c.l.b16 %v875
    %v3241 = vunpack.c.h.b16 %v875
    %v3242 = vunpack.c.l.b16 %v876
    %v3243 = vunpack.c.h.b16 %v876
    %v3244 = vunpack.c.l.b16 %v877
    %v3245 = vunpack.c.h.b16 %v877
    %v3246 = vunpack.c.l.b16 %v878
    %v3247 = vunpack.c.h.b16 %v878
    %v3248 = vunpack.c.l.b16 %v879
    %v3249 = vunpack.c.h.b16 %v879
    %v3250 = vunpack.c.l.b16 %v880
    %v3251 = vunpack.c.h.b16 %v880
    %v3252 = vunpack.c.l.b16 %v881
    %v3253 = vunpack.c.h.b16 %v881
    %v3254 = vunpack.c.l.b16 %v882
    %v3255 = vunpack.c.h.b16 %v882
    %v3256 = vunpack.c.l.b16 %v883
    %v3257 = vunpack.c.h.b16 %v883
    %v3258 = vunpack.c.l.b16 %v884
    %v3259 = vunpack.c.h.b16 %v884
    %v3260 = vunpack.c.l.b16 %v885
    %v3261 = vunpack.c.h.b16 %v885
    %v3262 = vunpack.c.l.b16 %v886
    %v3263 = vunpack.c.h.b16 %v886
    %v3264 = vunpack.c.l.b16 %v887
    %v3265 = vunpack.c.h.b16 %v887
    %v3266 = vunpack.c.l.b16 %v888
    %v3267 = vunpack.c.h.b16 %v888
    %v3268 = vunpack.c.l.b16 %v889
    %v3269 = vunpack.c.h.b16 %v889
    %v3270 = vunpack.c.l.b16 %v890
    %v3271 = vunpack.c.h.b16 %v890
    %v3272 = vunpack.c.l.b16 %v891
    %v3273 = vunpack.c.h.b16 %v891
    %v3274 = vunpack.c.l.b16 %v892
    %v3275 = vunpack.c.h.b16 %v892
    %v3276 = vunpack.c.l.b16 %v893
    %v3277 = vunpack.c.h.b16 %v893
    %v3278 = vunpack.c.l.b16 %v894
    %v3279 = vunpack.c.h.b16 %v894
    %v3280 = vunpack.c.l.b16 %v895
    %v3281 = vunpack.c.h.b16 %v895
    %v3282 = vunpack.c.l.b16 %v896
    %v3283 = vunpack.c.h.b16 %v896
    %v3284 = vunpack.c.l.b16 %v897
    %v3285 = vunpack.c.h.b16 %v897
    %v3286 = vunpack.c.l.b16 %v898
    %v3287 = vunpack.c.h.b16 %v898
    %v3288 = vunpack.c.l.b16 %v899
    %v3289 = vunpack.c.h.b16 %v899
    %v3290 = vunpack.c.l.b16 %v900
    %v3291 = vunpack.c.h.b16 %v900
    %v3292 = vunpack.c.l.b16 %v901
    %v3293 = vunpack.c.h.b16 %v901
    %v3294 = vunpack.c.l.b16 %v902
    %v3295 = vunpack.c.h.b16 %v902
    %v3296 = vunpack.c.l.b16 %v903
    %v3297 = vunpack.c.h.b16 %v903
    %v3298 = vunpack.c.l.b16 %v904
    %v3299 = vunpack.c.h.b16 %v904
    %v3300 = vunpack.c.l.b16 %v905
    %v3301 = vunpack.c.h.b16 %v905
    %v3302 = vunpack.c.l.b16 %v906
    %v3303 = vunpack.c.h.b16 %v906
    %v3304 = vunpack.c.l.b16 %v907
    %v3305 = vunpack.c.h.b16 %v907
    %v3306 = vpack.c.b16 %v1774, %v1770
    %v3307 = vpack.c.b16 %v1775, %v1771
    %v3308 = vpack.c.b16 %v1776, %v1772
    %v3309 = vpack.c.b16 %v1777, %v1773
    %v3310 = vpack.c.b16 %v1782, %v1778
    %v3311 = vpack.c.b16 %v1783, %v1779
    %v3312 = vpack.c.b16 %v1784, %v1780
    %v3313 = vpack.c.b16 %v1785, %v1781
    %v3314 = vpack.c.b16 %v1790, %v1786
    %v3315 = vpack.c.b16 %v1791, %v1787
    %v3316 = vpack.c.b16 %v1792, %v1788
    %v3317 = vpack.c.b16 %v1793, %v1789
    %v3318 = vpack.c.b16 %v1798, %v1794
    %v3319 = vpack.c.b16 %v1799, %v1795
    %v3320 = vpack.c.b16 %v1800, %v1796
    %v3321 = vpack.c.b16 %v1801, %v1797
    %v3322 = vpack.c.b16 %v1806, %v1802
    %v3323 = vpack.c.b16 %v1807, %v1803
    %v3324 = vpack.c.b16 %v1808, %v1804
    %v3325 = vpack.c.b16 %v1809, %v1805
    %v3326 = vpack.c.b16 %v1814, %v1810
    %v3327 = vpack.c.b16 %v1815, %v1811
    %v3328 = vpack.c.b16 %v1816, %v1812
    %v3329 = vpack.c.b16 %v1817, %v1813
    %v3330 = vpack.c.b16 %v1822, %v1818
    %v3331 = vpack.c.b16 %v1823, %v1819
    %v3332 = vpack.c.b16 %v1824, %v1820
    %v3333 = vpack.c.b16 %v1825, %v1821
    %v3334 = vpack.c.b16 %v1830, %v1826
    %v3335 = vpack.c.b16 %v1831, %v1827
    %v3336 = vpack.c.b16 %v1832, %v1828
    %v3337 = vpack.c.b16 %v1833, %v1829
    %v3338 = vpack.c.b16 %v1838, %v1834
    %v3339 = vpack.c.b16 %v1839, %v1835
    %v3340 = vpack.c.b16 %v1840, %v1836
    %v3341 = vpack.c.b16 %v1841, %v1837
    %v3342 = vpack.c.b16 %v1846, %v1842
    %v3343 = vpack.c.b16 %v1847, %v1843
    %v3344 = vpack.c.b16 %v1848, %v1844
    %v3345 = vpack.c.b16 %v1849, %v1845
    %v3346 = vpack.c.b16 %v1854, %v1850
    %v3347 = vpack.c.b16 %v1855, %v1851
    %v3348 = vpack.c.b16 %v1856, %v1852
    %v3349 = vpack.c.b16 %v1857, %v1853
    %v3350 = vpack.c.b16 %v1862, %v1858
    %v3351 = vpack.c.b16 %v1863, %v1859
    %v3352 = vpack.c.b16 %v1864, %v1860
    %v3353 = vpack.c.b16 %v1865, %v1861
    %v3354 = vpack.c.b16 %v1870, %v1866
    %v3355 = vpack.c.b16 %v1871, %v1867
    %v3356 = vpack.c.b16 %v1872, %v1868
    %v3357 = vpack.c.b16 %v1873, %v1869
    %v3358 = vpack.c.b16 %v1878, %v1874
    %v3359 = vpack.c.b16 %v1879, %v1875
    %v3360 = vpack.c.b16 %v1880, %v1876
    %v3361 = vpack.c.b16 %v1881, %v1877
    %v3362 = vpack.c.b16 %v1886, %v1882
    %v3363 = vpack.c.b16 %v1887, %v1883
    %v3364 = vpack.c.b16 %v1888, %v1884
    %v3365 = vpack.c.b16 %v1889, %v1885
    %v3366 = vpack.c.b16 %v1894, %v1890
    %v3367 = vpack.c.b16 %v1895, %v1891
    %v3368 = vpack.c.b16 %v1896, %v1892
    %v3369 = vpack.c.b16 %v1897, %v1893
    %v3370 = vpack.c.b16 %v1902, %v1898
    %v3371 = vpack.c.b16 %v1903, %v1899
    %v3372 = vpack.c.b16 %v1904, %v1900
    %v3373 = vpack.c.b16 %v1905, %v1901
    %v3374 = vpack.c.b16 %v1910, %v1906
    %v3375 = vpack.c.b16 %v1911, %v1907
    %v3376 = vpack.c.b16 %v1912, %v1908
    %v3377 = vpack.c.b16 %v1913, %v1909
    %v3378 = vpack.c.b16 %v1918, %v1914
    %v3379 = vpack.c.b16 %v1919, %v1915
    %v3380 = vpack.c.b16 %v1920, %v1916
    %v3381 = vpack.c.b16 %v1921, %v1917
    %v3382 = vpack.c.b16 %v1926, %v1922
    %v3383 = vpack.c.b16 %v1927, %v1923
    %v3384 = vpack.c.b16 %v1928, %v1924
    %v3385 = vpack.c.b16 %v1929, %v1925
    %v3386 = vpack.c.b16 %v1934, %v1930
    %v3387 = vpack.c.b16 %v1935, %v1931
    %v3388 = vpack.c.b16 %v1936, %v1932
    %v3389 = vpack.c.b16 %v1937, %v1933
    %v3390 = vpack.c.b16 %v1942, %v1938
    %v3391 = vpack.c.b16 %v1943, %v1939
    %v3392 = vpack.c.b16 %v1944, %v1940
    %v3393 = vpack.c.b16 %v1945, %v1941
    %v3394 = vpack.c.b16 %v1950, %v1946
    %v3395 = vpack.c.b16 %v1951, %v1947
    %v3396 = vpack.c.b16 %v1952, %v1948
    %v3397 = vpack.c.b16 %v1953, %v1949
    %v3398 = vpack.c.b16 %v1958, %v1954
    %v3399 = vpack.c.b16 %v1959, %v1955
    %v3400 = vpack.c.b16 %v1960, %v1956
    %v3401 = vpack.c.b16 %v1961, %v1957
    %v3402 = vpack.c.b16 %v1966, %v1962
    %v3403 = vpack.c.b16 %v1967, %v1963
    %v3404 = vpack.c.b16 %v1968, %v1964
    %v3405 = vpack.c.b16 %v1969, %v1965
    %v3406 = vpack.c.b16 %v1974, %v1970
    %v3407 = vpack.c.b16 %v1975, %v1971
    %v3408 = vpack.c.b16 %v1976, %v1972
    %v3409 = vpack.c.b16 %v1977, %v1973
    %v3410 = vpack.c.b16 %v1982, %v1978
    %v3411 = vpack.c.b16 %v1983, %v1979
    %v3412 = vpack.c.b16 %v1984, %v1980
    %v3413 = vpack.c.b16 %v1985, %v1981
    %v3414 = vpack.c.b16 %v1990, %v1986
    %v3415 = vpack.c.b16 %v1991, %v1987
    %v3416 = vpack.c.b16 %v1992, %v1988
    %v3417 = vpack.c.b16 %v1993, %v1989
    %v3418 = vpack.c.b16 %v1998, %v1994
    %v3419 = vpack.c.b16 %v1999, %v1995
    %v3420 = vpack.c.b16 %v2000, %v1996
    %v3421 = vpack.c.b16 %v2001, %v1997
    %v3422 = vpack.c.b16 %v2006, %v2002
    %v3423 = vpack.c.b16 %v2007, %v2003
    %v3424 = vpack.c.b16 %v2008, %v2004
    %v3425 = vpack.c.b16 %v2009, %v2005
    %v3426 = vpack.c.b16 %v2014, %v2010
    %v3427 = vpack.c.b16 %v2015, %v2011
    %v3428 = vpack.c.b16 %v2016, %v2012
    %v3429 = vpack.c.b16 %v2017, %v2013
    %v3430 = vpack.c.b16 %v2022, %v2018
    %v3431 = vpack.c.b16 %v2023, %v2019
    %v3432 = vpack.c.b16 %v2024, %v2020
    %v3433 = vpack.c.b16 %v2025, %v2021
    %v3434 = vpack.c.b16 %v2030, %v2026
    %v3435 = vpack.c.b16 %v2031, %v2027
    %v3436 = vpack.c.b16 %v2032, %v2028
    %v3437 = vpack.c.b16 %v2033, %v2029
    %v3438 = vpack.c.b16 %v2038, %v2034
    %v3439 = vpack.c.b16 %v2039, %v2035
    %v3440 = vpack.c.b16 %v2040, %v2036
    %v3441 = vpack.c.b16 %v2041, %v2037
    %v3442 = vpack.c.b16 %v2046, %v2042
    %v3443 = vpack.c.b16 %v2047, %v2043
    %v3444 = vpack.c.b16 %v2048, %v2044
    %v3445 = vpack.c.b16 %v2049, %v2045
    %v3446 = vpack.c.b16 %v2054, %v2050
    %v3447 = vpack.c.b16 %v2055, %v2051
    %v3448 = vpack.c.b16 %v2056, %v2052
    %v3449 = vpack.c.b16 %v2057, %v2053
    %v3450 = vpack.c.b16 %v2062, %v2058
    %v3451 = vpack.c.b16 %v2063, %v2059
    %v3452 = vpack.c.b16 %v2064, %v2060
    %v3453 = vpack.c.b16 %v2065, %v2061
    %v3454 = vpack.c.b16 %v2070, %v2066
    %v3455 = vpack.c.b16 %v2071, %v2067
    %v3456 = vpack.c.b16 %v2072, %v2068
    %v3457 = vpack.c.b16 %v2073, %v2069
    %v3458 = vpack.c.b16 %v2078, %v2074
    %v3459 = vpack.c.b16 %v2079, %v2075
    %v3460 = vpack.c.b16 %v2080, %v2076
    %v3461 = vpack.c.b16 %v2081, %v2077
    %v3462 = vpack.c.b16 %v2086, %v2082
    %v3463 = vpack.c.b16 %v2087, %v2083
    %v3464 = vpack.c.b16 %v2088, %v2084
    %v3465 = vpack.c.b16 %v2089, %v2085
    %v3466 = vpack.c.b16 %v2094, %v2090
    %v3467 = vpack.c.b16 %v2095, %v2091
    %v3468 = vpack.c.b16 %v2096, %v2092
    %v3469 = vpack.c.b16 %v2097, %v2093
    %v3470 = vpack.c.b16 %v2102, %v2098
    %v3471 = vpack.c.b16 %v2103, %v2099
    %v3472 = vpack.c.b16 %v2104, %v2100
    %v3473 = vpack.c.b16 %v2105, %v2101
    %v3474 = vpack.c.b16 %v2110, %v2106
    %v3475 = vpack.c.b16 %v2111, %v2107
    %v3476 = vpack.c.b16 %v2112, %v2108
    %v3477 = vpack.c.b16 %v2113, %v2109
    %v3478 = vpack.c.b16 %v2118, %v2114
    %v3479 = vpack.c.b16 %v2119, %v2115
    %v3480 = vpack.c.b16 %v2120, %v2116
    %v3481 = vpack.c.b16 %v2121, %v2117
    %v3482 = vpack.c.b16 %v2126, %v2122
    %v3483 = vpack.c.b16 %v2127, %v2123
    %v3484 = vpack.c.b16 %v2128, %v2124
    %v3485 = vpack.c.b16 %v2129, %v2125
    %v3486 = vpack.c.b16 %v2134, %v2130
    %v3487 = vpack.c.b16 %v2135, %v2131
    %v3488 = vpack.c.b16 %v2136, %v2132
    %v3489 = vpack.c.b16 %v2137, %v2133
    %v3490 = vpack.c.b16 %v2142, %v2138
    %v3491 = vpack.c.b16 %v2143, %v2139
    %v3492 = vpack.c.b16 %v2144, %v2140
    %v3493 = vpack.c.b16 %v2145, %v2141
    %v3494 = vpack.c.b16 %v2150, %v2146
    %v3495 = vpack.c.b16 %v2151, %v2147
    %v3496 = vpack.c.b16 %v2152, %v2148
    %v3497 = vpack.c.b16 %v2153, %v2149
    %v3498 = vpack.c.b16 %v2158, %v2154
    %v3499 = vpack.c.b16 %v2159, %v2155
    %v3500 = vpack.c.b16 %v2160, %v2156
    %v3501 = vpack.c.b16 %v2161, %v2157
    %v3502 = vpack.c.b16 %v2166, %v2162
    %v3503 = vpack.c.b16 %v2167, %v2163
    %v3504 = vpack.c.b16 %v2168, %v2164
    %v3505 = vpack.c.b16 %v2169, %v2165
    %v3506 = vpack.c.b16 %v2174, %v2170
    %v3507 = vpack.c.b16 %v2175, %v2171
    %v3508 = vpack.c.b16 %v2176, %v2172
    %v3509 = vpack.c.b16 %v2177, %v2173
    %v3510 = vpack.c.b16 %v2182, %v2178
    %v3511 = vpack.c.b16 %v2183, %v2179
    %v3512 = vpack.c.b16 %v2184, %v2180
    %v3513 = vpack.c.b16 %v2185, %v2181
    %v3514 = vpack.c.b16 %v2190, %v2186
    %v3515 = vpack.c.b16 %v2191, %v2187
    %v3516 = vpack.c.b16 %v2192, %v2188
    %v3517 = vpack.c.b16 %v2193, %v2189
    %v3518 = vpack.c.b16 %v2198, %v2194
    %v3519 = vpack.c.b16 %v2199, %v2195
    %v3520 = vpack.c.b16 %v2200, %v2196
    %v3521 = vpack.c.b16 %v2201, %v2197
    %v3522 = vpack.c.b16 %v2206, %v2202
    %v3523 = vpack.c.b16 %v2207, %v2203
    %v3524 = vpack.c.b16 %v2208, %v2204
    %v3525 = vpack.c.b16 %v2209, %v2205
    %v3526 = vpack.c.b16 %v2214, %v2210
    %v3527 = vpack.c.b16 %v2215, %v2211
    %v3528 = vpack.c.b16 %v2216, %v2212
    %v3529 = vpack.c.b16 %v2217, %v2213
    %v3530 = vpack.c.b16 %v2222, %v2218
    %v3531 = vpack.c.b16 %v2223, %v2219
    %v3532 = vpack.c.b16 %v2224, %v2220
    %v3533 = vpack.c.b16 %v2225, %v2221
    %v3534 = vpack.c.b16 %v2230, %v2226
    %v3535 = vpack.c.b16 %v2231, %v2227
    %v3536 = vpack.c.b16 %v2232, %v2228
    %v3537 = vpack.c.b16 %v2233, %v2229
    %v3538 = vpack.c.b16 %v2238, %v2234
    %v3539 = vpack.c.b16 %v2239, %v2235
    %v3540 = vpack.c.b16 %v2240, %v2236
    %v3541 = vpack.c.b16 %v2241, %v2237
    %v3542 = vpack.c.b16 %v2246, %v2242
    %v3543 = vpack.c.b16 %v2247, %v2243
    %v3544 = vpack.c.b16 %v2248, %v2244
    %v3545 = vpack.c.b16 %v2249, %v2245
    %v3546 = vpack.c.b16 %v2254, %v2250
    %v3547 = vpack.c.b16 %v2255, %v2251
    %v3548 = vpack.c.b16 %v2256, %v2252
    %v3549 = vpack.c.b16 %v2257, %v2253
    %v3550 = vpack.c.b16 %v2262, %v2258
    %v3551 = vpack.c.b16 %v2263, %v2259
    %v3552 = vpack.c.b16 %v2264, %v2260
    %v3553 = vpack.c.b16 %v2265, %v2261
    %v3554 = vpack.c.b16 %v2270, %v2266
    %v3555 = vpack.c.b16 %v2271, %v2267
    %v3556 = vpack.c.b16 %v2272, %v2268
    %v3557 = vpack.c.b16 %v2273, %v2269
    %v3558 = vpack.c.b16 %v2278, %v2274
    %v3559 = vpack.c.b16 %v2279, %v2275
    %v3560 = vpack.c.b16 %v2280, %v2276
    %v3561 = vpack.c.b16 %v2281, %v2277
    %v3562 = vpack.c.b16 %v2286, %v2282
    %v3563 = vpack.c.b16 %v2287, %v2283
    %v3564 = vpack.c.b16 %v2288, %v2284
    %v3565 = vpack.c.b16 %v2289, %v2285
    %v3566 = vpack.c.b16 %v2294, %v2290
    %v3567 = vpack.c.b16 %v2295, %v2291
    %v3568 = vpack.c.b16 %v2296, %v2292
    %v3569 = vpack.c.b16 %v2297, %v2293
    %v3570 = vpack.c.b16 %v2302, %v2298
    %v3571 = vpack.c.b16 %v2303, %v2299
    %v3572 = vpack.c.b16 %v2304, %v2300
    %v3573 = vpack.c.b16 %v2305, %v2301
    %v3574 = vpack.c.b16 %v2310, %v2306
    %v3575 = vpack.c.b16 %v2311, %v2307
    %v3576 = vpack.c.b16 %v2312, %v2308
    %v3577 = vpack.c.b16 %v2313, %v2309
    %v3578 = vpack.c.b16 %v2318, %v2314
    %v3579 = vpack.c.b16 %v2319, %v2315
    %v3580 = vpack.c.b16 %v2320, %v2316
    %v3581 = vpack.c.b16 %v2321, %v2317
    %v3582 = vpack.c.b16 %v2326, %v2322
    %v3583 = vpack.c.b16 %v2327, %v2323
    %v3584 = vpack.c.b16 %v2328, %v2324
    %v3585 = vpack.c.b16 %v2329, %v2325
    %v3586 = vpack.c.b16 %v2334, %v2330
    %v3587 = vpack.c.b16 %v2335, %v2331
    %v3588 = vpack.c.b16 %v2336, %v2332
    %v3589 = vpack.c.b16 %v2337, %v2333
    %v3590 = vpack.c.b16 %v2342, %v2338
    %v3591 = vpack.c.b16 %v2343, %v2339
    %v3592 = vpack.c.b16 %v2344, %v2340
    %v3593 = vpack.c.b16 %v2345, %v2341
    %v3594 = vpack.c.b16 %v2350, %v2346
    %v3595 = vpack.c.b16 %v2351, %v2347
    %v3596 = vpack.c.b16 %v2352, %v2348
    %v3597 = vpack.c.b16 %v2353, %v2349
    %v3598 = vpack.c.b16 %v2358, %v2354
    %v3599 = vpack.c.b16 %v2359, %v2355
    %v3600 = vpack.c.b16 %v2360, %v2356
    %v3601 = vpack.c.b16 %v2361, %v2357
    %v3602 = vpack.c.b16 %v2366, %v2362
    %v3603 = vpack.c.b16 %v2367, %v2363
    %v3604 = vpack.c.b16 %v2368, %v2364
    %v3605 = vpack.c.b16 %v2369, %v2365
    %v3606 = vpack.c.b16 %v2374, %v2370
    %v3607 = vpack.c.b16 %v2375, %v2371
    %v3608 = vpack.c.b16 %v2376, %v2372
    %v3609 = vpack.c.b16 %v2377, %v2373
    %v3610 = vpack.c.b16 %v2382, %v2378
    %v3611 = vpack.c.b16 %v2383, %v2379
    %v3612 = vpack.c.b16 %v2384, %v2380
    %v3613 = vpack.c.b16 %v2385, %v2381
    %v3614 = vpack.c.b16 %v2390, %v2386
    %v3615 = vpack.c.b16 %v2391, %v2387
    %v3616 = vpack.c.b16 %v2392, %v2388
    %v3617 = vpack.c.b16 %v2393, %v2389
    %v3618 = vpack.c.b16 %v2398, %v2394
    %v3619 = vpack.c.b16 %v2399, %v2395
    %v3620 = vpack.c.b16 %v2400, %v2396
    %v3621 = vpack.c.b16 %v2401, %v2397
    %v3622 = vpack.c.b16 %v2406, %v2402
    %v3623 = vpack.c.b16 %v2407, %v2403
    %v3624 = vpack.c.b16 %v2408, %v2404
    %v3625 = vpack.c.b16 %v2409, %v2405
    %v3626 = vpack.c.b16 %v2414, %v2410
    %v3627 = vpack.c.b16 %v2415, %v2411
    %v3628 = vpack.c.b16 %v2416, %v2412
    %v3629 = vpack.c.b16 %v2417, %v2413
    %v3630 = vpack.c.b16 %v2422, %v2418
    %v3631 = vpack.c.b16 %v2423, %v2419
    %v3632 = vpack.c.b16 %v2424, %v2420
    %v3633 = vpack.c.b16 %v2425, %v2421
    %v3634 = vpack.c.b16 %v2430, %v2426
    %v3635 = vpack.c.b16 %v2431, %v2427
    %v3636 = vpack.c.b16 %v2432, %v2428
    %v3637 = vpack.c.b16 %v2433, %v2429
    %v3638 = vpack.c.b16 %v2438, %v2434
    %v3639 = vpack.c.b16 %v2439, %v2435
    %v3640 = vpack.c.b16 %v2440, %v2436
    %v3641 = vpack.c.b16 %v2441, %v2437
    %v3642 = vpack.c.b16 %v2446, %v2442
    %v3643 = vpack.c.b16 %v2447, %v2443
    %v3644 = vpack.c.b16 %v2448, %v2444
    %v3645 = vpack.c.b16 %v2449, %v2445
    %v3646 = vpack.c.b16 %v2454, %v2450
    %v3647 = vpack.c.b16 %v2455, %v2451
    %v3648 = vpack.c.b16 %v2456, %v2452
    %v3649 = vpack.c.b16 %v2457, %v2453
    %v3650 = vpack.c.b16 %v2462, %v2458
    %v3651 = vpack.c.b16 %v2463, %v2459
    %v3652 = vpack.c.b16 %v2464, %v2460
    %v3653 = vpack.c.b16 %v2465, %v2461
    %v3654 = vpack.c.b16 %v2470, %v2466
    %v3655 = vpack.c.b16 %v2471, %v2467
    %v3656 = vpack.c.b16 %v2472, %v2468
    %v3657 = vpack.c.b16 %v2473, %v2469
    %v3658 = vpack.c.b16 %v2478, %v2474
    %v3659 = vpack.c.b16 %v2479, %v2475
    %v3660 = vpack.c.b16 %v2480, %v2476
    %v3661 = vpack.c.b16 %v2481, %v2477
    %v3662 = vpack.c.b16 %v2486, %v2482
    %v3663 = vpack.c.b16 %v2487, %v2483
    %v3664 = vpack.c.b16 %v2488, %v2484
    %v3665 = vpack.c.b16 %v2489, %v2485
    %v3666 = vpack.c.b16 %v2494, %v2490
    %v3667 = vpack.c.b16 %v2495, %v2491
    %v3668 = vpack.c.b16 %v2496, %v2492
    %v3669 = vpack.c.b16 %v2497, %v2493
    %v3670 = vpack.c.b16 %v2502, %v2498
    %v3671 = vpack.c.b16 %v2503, %v2499
    %v3672 = vpack.c.b16 %v2504, %v2500
    %v3673 = vpack.c.b16 %v2505, %v2501
    %v3674 = vpack.c.b16 %v2510, %v2506
    %v3675 = vpack.c.b16 %v2511, %v2507
    %v3676 = vpack.c.b16 %v2512, %v2508
    %v3677 = vpack.c.b16 %v2513, %v2509
    %v3678 = vpack.c.b16 %v2518, %v2514
    %v3679 = vpack.c.b16 %v2519, %v2515
    %v3680 = vpack.c.b16 %v2520, %v2516
    %v3681 = vpack.c.b16 %v2521, %v2517
    %v3682 = vpack.c.b16 %v2526, %v2522
    %v3683 = vpack.c.b16 %v2527, %v2523
    %v3684 = vpack.c.b16 %v2528, %v2524
    %v3685 = vpack.c.b16 %v2529, %v2525
    %v3686 = vpack.c.b16 %v2534, %v2530
    %v3687 = vpack.c.b16 %v2535, %v2531
    %v3688 = vpack.c.b16 %v2536, %v2532
    %v3689 = vpack.c.b16 %v2537, %v2533
    %v3690 = vpack.c.b16 %v2542, %v2538
    %v3691 = vpack.c.b16 %v2543, %v2539
    %v3692 = vpack.c.b16 %v2544, %v2540
    %v3693 = vpack.c.b16 %v2545, %v2541
    %v3694 = vpack.c.b16 %v2550, %v2546
    %v3695 = vpack.c.b16 %v2551, %v2547
    %v3696 = vpack.c.b16 %v2552, %v2548
    %v3697 = vpack.c.b16 %v2553, %v2549
    %v3698 = vpack.c.b16 %v2558, %v2554
    %v3699 = vpack.c.b16 %v2559, %v2555
    %v3700 = vpack.c.b16 %v2560, %v2556
    %v3701 = vpack.c.b16 %v2561, %v2557
    %v3702 = vpack.c.b16 %v2566, %v2562
    %v3703 = vpack.c.b16 %v2567, %v2563
    %v3704 = vpack.c.b16 %v2568, %v2564
    %v3705 = vpack.c.b16 %v2569, %v2565
    %v3706 = vpack.c.b16 %v2574, %v2570
    %v3707 = vpack.c.b16 %v2575, %v2571
    %v3708 = vpack.c.b16 %v2576, %v2572
    %v3709 = vpack.c.b16 %v2577, %v2573
    %v3710 = vpack.c.b16 %v2582, %v2578
    %v3711 = vpack.c.b16 %v2583, %v2579
    %v3712 = vpack.c.b16 %v2584, %v2580
    %v3713 = vpack.c.b16 %v2585, %v2581
    %v3714 = vpack.c.b16 %v2590, %v2586
    %v3715 = vpack.c.b16 %v2591, %v2587
    %v3716 = vpack.c.b16 %v2592, %v2588
    %v3717 = vpack.c.b16 %v2593, %v2589
    %v3718 = vpack.c.b16 %v2598, %v2594
    %v3719 = vpack.c.b16 %v2599, %v2595
    %v3720 = vpack.c.b16 %v2600, %v2596
    %v3721 = vpack.c.b16 %v2601, %v2597
    %v3722 = vpack.c.b16 %v2606, %v2602
    %v3723 = vpack.c.b16 %v2607, %v2603
    %v3724 = vpack.c.b16 %v2608, %v2604
    %v3725 = vpack.c.b16 %v2609, %v2605
    %v3726 = vpack.c.b16 %v2614, %v2610
    %v3727 = vpack.c.b16 %v2615, %v2611
    %v3728 = vpack.c.b16 %v2616, %v2612
    %v3729 = vpack.c.b16 %v2617, %v2613
    %v3730 = vpack.c.b16 %v2622, %v2618
    %v3731 = vpack.c.b16 %v2623, %v2619
    %v3732 = vpack.c.b16 %v2624, %v2620
    %v3733 = vpack.c.b16 %v2625, %v2621
    %v3734 = vpack.c.b16 %v2630, %v2626
    %v3735 = vpack.c.b16 %v2631, %v2627
    %v3736 = vpack.c.b16 %v2632, %v2628
    %v3737 = vpack.c.b16 %v2633, %v2629
    %v3738 = vpack.c.b16 %v2638, %v2634
    %v3739 = vpack.c.b16 %v2639, %v2635
    %v3740 = vpack.c.b16 %v2640, %v2636
    %v3741 = vpack.c.b16 %v2641, %v2637
    %v3742 = vpack.c.b16 %v2646, %v2642
    %v3743 = vpack.c.b16 %v2647, %v2643
    %v3744 = vpack.c.b16 %v2648, %v2644
    %v3745 = vpack.c.b16 %v2649, %v2645
    %v3746 = vpack.c.b16 %v2654, %v2650
    %v3747 = vpack.c.b16 %v2655, %v2651
    %v3748 = vpack.c.b16 %v2656, %v2652
    %v3749 = vpack.c.b16 %v2657, %v2653
    %v3750 = vpack.c.b16 %v2662, %v2658
    %v3751 = vpack.c.b16 %v2663, %v2659
    %v3752 = vpack.c.b16 %v2664, %v2660
    %v3753 = vpack.c.b16 %v2665, %v2661
    %v3754 = vpack.c.b16 %v2670, %v2666
    %v3755 = vpack.c.b16 %v2671, %v2667
    %v3756 = vpack.c.b16 %v2672, %v2668
    %v3757 = vpack.c.b16 %v2673, %v2669
    %v3758 = vpack.c.b16 %v2678, %v2674
    %v3759 = vpack.c.b16 %v2679, %v2675
    %v3760 = vpack.c.b16 %v2680, %v2676
    %v3761 = vpack.c.b16 %v2681, %v2677
    %v3762 = vpack.c.b16 %v2686, %v2682
    %v3763 = vpack.c.b16 %v2687, %v2683
    %v3764 = vpack.c.b16 %v2688, %v2684
    %v3765 = vpack.c.b16 %v2689, %v2685
    %v3766 = vpack.c.b16 %v2694, %v2690
    %v3767 = vpack.c.b16 %v2695, %v2691
    %v3768 = vpack.c.b16 %v2696, %v2692
    %v3769 = vpack.c.b16 %v2697, %v2693
    %v3770 = vpack.c.b16 %v2702, %v2698
    %v3771 = vpack.c.b16 %v2703, %v2699
    %v3772 = vpack.c.b16 %v2704, %v2700
    %v3773 = vpack.c.b16 %v2705, %v2701
    %v3774 = vpack.c.b16 %v2710, %v2706
    %v3775 = vpack.c.b16 %v2711, %v2707
    %v3776 = vpack.c.b16 %v2712, %v2708
    %v3777 = vpack.c.b16 %v2713, %v2709
    %v3778 = vpack.c.b16 %v2718, %v2714
    %v3779 = vpack.c.b16 %v2719, %v2715
    %v3780 = vpack.c.b16 %v2720, %v2716
    %v3781 = vpack.c.b16 %v2721, %v2717
    %v3782 = vpack.c.b16 %v2726, %v2722
    %v3783 = vpack.c.b16 %v2727, %v2723
    %v3784 = vpack.c.b16 %v2728, %v2724
    %v3785 = vpack.c.b16 %v2729, %v2725
    %v3786 = vpack.c.b16 %v2734, %v2730
    %v3787 = vpack.c.b16 %v2735, %v2731
    %v3788 = vpack.c.b16 %v2736, %v2732
    %v3789 = vpack.c.b16 %v2737, %v2733
    %v3790 = vpack.c.b16 %v2742, %v2738
    %v3791 = vpack.c.b16 %v2743, %v2739
    %v3792 = vpack.c.b16 %v2744, %v2740
    %v3793 = vpack.c.b16 %v2745, %v2741
    %v3794 = vpack.c.b16 %v2750, %v2746
    %v3795 = vpack.c.b16 %v2751, %v2747
    %v3796 = vpack.c.b16 %v2752, %v2748
    %v3797 = vpack.c.b16 %v2753, %v2749
    %v3798 = vpack.c.b16 %v2758, %v2754
    %v3799 = vpack.c.b16 %v2759, %v2755
    %v3800 = vpack.c.b16 %v2760, %v2756
    %v3801 = vpack.c.b16 %v2761, %v2757
    %v3802 = vpack.c.b16 %v2766, %v2762
    %v3803 = vpack.c.b16 %v2767, %v2763
    %v3804 = vpack.c.b16 %v2768, %v2764
    %v3805 = vpack.c.b16 %v2769, %v2765
    %v3806 = vpack.c.b16 %v2774, %v2770
    %v3807 = vpack.c.b16 %v2775, %v2771
    %v3808 = vpack.c.b16 %v2776, %v2772
    %v3809 = vpack.c.b16 %v2777, %v2773
    %v3810 = vpack.c.b16 %v2782, %v2778
    %v3811 = vpack.c.b16 %v2783, %v2779
    %v3812 = vpack.c.b16 %v2784, %v2780
    %v3813 = vpack.c.b16 %v2785, %v2781
    %v3814 = vpack.c.b16 %v2790, %v2786
    %v3815 = vpack.c.b16 %v2791, %v2787
    %v3816 = vpack.c.b16 %v2792, %v2788
    %v3817 = vpack.c.b16 %v2793, %v2789
    %v3818 = vpack.c.b16 %v2798, %v2794
    %v3819 = vpack.c.b16 %v2799, %v2795
    %v3820 = vpack.c.b16 %v2800, %v2796
    %v3821 = vpack.c.b16 %v2801, %v2797
    %v3822 = vpack.c.b16 %v2806, %v2802
    %v3823 = vpack.c.b16 %v2807, %v2803
    %v3824 = vpack.c.b16 %v2808, %v2804
    %v3825 = vpack.c.b16 %v2809, %v2805
    %v3826 = vpack.c.b16 %v2814, %v2810
    %v3827 = vpack.c.b16 %v2815, %v2811
    %v3828 = vpack.c.b16 %v2816, %v2812
    %v3829 = vpack.c.b16 %v2817, %v2813
    %v3830 = vpack.c.b16 %v2822, %v2818
    %v3831 = vpack.c.b16 %v2823, %v2819
    %v3832 = vpack.c.b16 %v2824, %v2820
    %v3833 = vpack.c.b16 %v2825, %v2821
    %v3834 = vpack.c.b16 %v2830, %v2826
    %v3835 = vpack.c.b16 %v2831, %v2827
    %v3836 = vpack.c.b16 %v2832, %v2828
    %v3837 = vpack.c.b16 %v2833, %v2829
    %v3838 = vpack.c.b16 %v2838, %v2834
    %v3839 = vpack.c.b16 %v2839, %v2835
    %v3840 = vpack.c.b16 %v2840, %v2836
    %v3841 = vpack.c.b16 %v2841, %v2837
    %v3842 = vpack.c.b16 %v2846, %v2842
    %v3843 = vpack.c.b16 %v2847, %v2843
    %v3844 = vpack.c.b16 %v2848, %v2844
    %v3845 = vpack.c.b16 %v2849, %v2845
    %v3846 = vpack.c.b16 %v2854, %v2850
    %v3847 = vpack.c.b16 %v2855, %v2851
    %v3848 = vpack.c.b16 %v2856, %v2852
    %v3849 = vpack.c.b16 %v2857, %v2853
    %v3850 = vpack.c.b16 %v2862, %v2858
    %v3851 = vpack.c.b16 %v2863, %v2859
    %v3852 = vpack.c.b16 %v2864, %v2860
    %v3853 = vpack.c.b16 %v2865, %v2861
    %v3854 = vpack.c.b16 %v2870, %v2866
    %v3855 = vpack.c.b16 %v2871, %v2867
    %v3856 = vpack.c.b16 %v2872, %v2868
    %v3857 = vpack.c.b16 %v2873, %v2869
    %v3858 = vpack.c.b16 %v2878, %v2874
    %v3859 = vpack.c.b16 %v2879, %v2875
    %v3860 = vpack.c.b16 %v2880, %v2876
    %v3861 = vpack.c.b16 %v2881, %v2877
    %v3862 = vpack.c.b16 %v2886, %v2882
    %v3863 = vpack.c.b16 %v2887, %v2883
    %v3864 = vpack.c.b16 %v2888, %v2884
    %v3865 = vpack.c.b16 %v2889, %v2885
    %v3866 = vpack.c.b16 %v2894, %v2890
    %v3867 = vpack.c.b16 %v2895, %v2891
    %v3868 = vpack.c.b16 %v2896, %v2892
    %v3869 = vpack.c.b16 %v2897, %v2893
    %v3870 = vpack.c.b16 %v2902, %v2898
    %v3871 = vpack.c.b16 %v2903, %v2899
    %v3872 = vpack.c.b16 %v2904, %v2900
    %v3873 = vpack.c.b16 %v2905, %v2901
    %v3874 = vpack.c.b16 %v2910, %v2906
    %v3875 = vpack.c.b16 %v2911, %v2907
    %v3876 = vpack.c.b16 %v2912, %v2908
    %v3877 = vpack.c.b16 %v2913, %v2909
    %v3878 = vpack.c.b16 %v2918, %v2914
    %v3879 = vpack.c.b16 %v2919, %v2915
    %v3880 = vpack.c.b16 %v2920, %v2916
    %v3881 = vpack.c.b16 %v2921, %v2917
    %v3882 = vpack.c.b16 %v2926, %v2922
    %v3883 = vpack.c.b16 %v2927, %v2923
    %v3884 = vpack.c.b16 %v2928, %v2924
    %v3885 = vpack.c.b16 %v2929, %v2925
    %v3886 = vpack.c.b16 %v2934, %v2930
    %v3887 = vpack.c.b16 %v2935, %v2931
    %v3888 = vpack.c.b16 %v2936, %v2932
    %v3889 = vpack.c.b16 %v2937, %v2933
    %v3890 = vpack.c.b16 %v2942, %v2938
    %v3891 = vpack.c.b16 %v2943, %v2939
    %v3892 = vpack.c.b16 %v2944, %v2940
    %v3893 = vpack.c.b16 %v2945, %v2941
    %v3894 = vpack.c.b16 %v2950, %v2946
    %v3895 = vpack.c.b16 %v2951, %v2947
    %v3896 = vpack.c.b16 %v2952, %v2948
    %v3897 = vpack.c.b16 %v2953, %v2949
    %v3898 = vpack.c.b16 %v2958, %v2954
    %v3899 = vpack.c.b16 %v2959, %v2955
    %v3900 = vpack.c.b16 %v2960, %v2956
    %v3901 = vpack.c.b16 %v2961, %v2957
    %v3902 = vpack.c.b16 %v2966, %v2962
    %v3903 = vpack.c.b16 %v2967, %v2963
    %v3904 = vpack.c.b16 %v2968, %v2964
    %v3905 = vpack.c.b16 %v2969, %v2965
    %v3906 = vpack.c.b16 %v2974, %v2970
    %v3907 = vpack.c.b16 %v2975, %v2971
    %v3908 = vpack.c.b16 %v2976, %v2972
    %v3909 = vpack.c.b16 %v2977, %v2973
    %v3910 = vpack.c.b16 %v2982, %v2978
    %v3911 = vpack.c.b16 %v2983, %v2979
    %v3912 = vpack.c.b16 %v2984, %v2980
    %v3913 = vpack.c.b16 %v2985, %v2981
    %v3914 = vpack.c.b16 %v2990, %v2986
    %v3915 = vpack.c.b16 %v2991, %v2987
    %v3916 = vpack.c.b16 %v2992, %v2988
    %v3917 = vpack.c.b16 %v2993, %v2989
    %v3918 = vpack.c.b16 %v2998, %v2994
    %v3919 = vpack.c.b16 %v2999, %v2995
    %v3920 = vpack.c.b16 %v3000, %v2996
    %v3921 = vpack.c.b16 %v3001, %v2997
    %v3922 = vpack.c.b16 %v3006, %v3002
    %v3923 = vpack.c.b16 %v3007, %v3003
    %v3924 = vpack.c.b16 %v3008, %v3004
    %v3925 = vpack.c.b16 %v3009, %v3005
    %v3926 = vpack.c.b16 %v3014, %v3010
    %v3927 = vpack.c.b16 %v3015, %v3011
    %v3928 = vpack.c.b16 %v3016, %v3012
    %v3929 = vpack.c.b16 %v3017, %v3013
    %v3930 = vpack.c.b16 %v3022, %v3018
    %v3931 = vpack.c.b16 %v3023, %v3019
    %v3932 = vpack.c.b16 %v3024, %v3020
    %v3933 = vpack.c.b16 %v3025, %v3021
    %v3934 = vpack.c.b16 %v3030, %v3026
    %v3935 = vpack.c.b16 %v3031, %v3027
    %v3936 = vpack.c.b16 %v3032, %v3028
    %v3937 = vpack.c.b16 %v3033, %v3029
    %v3938 = vpack.c.b16 %v3038, %v3034
    %v3939 = vpack.c.b16 %v3039, %v3035
    %v3940 = vpack.c.b16 %v3040, %v3036
    %v3941 = vpack.c.b16 %v3041, %v3037
    %v3942 = vpack.c.b16 %v3046, %v3042
    %v3943 = vpack.c.b16 %v3047, %v3043
    %v3944 = vpack.c.b16 %v3048, %v3044
    %v3945 = vpack.c.b16 %v3049, %v3045
    %v3946 = vpack.c.b16 %v3054, %v3050
    %v3947 = vpack.c.b16 %v3055, %v3051
    %v3948 = vpack.c.b16 %v3056, %v3052
    %v3949 = vpack.c.b16 %v3057, %v3053
    %v3950 = vpack.c.b16 %v3062, %v3058
    %v3951 = vpack.c.b16 %v3063, %v3059
    %v3952 = vpack.c.b16 %v3064, %v3060
    %v3953 = vpack.c.b16 %v3065, %v3061
    %v3954 = vpack.c.b16 %v3070, %v3066
    %v3955 = vpack.c.b16 %v3071, %v3067
    %v3956 = vpack.c.b16 %v3072, %v3068
    %v3957 = vpack.c.b16 %v3073, %v3069
    %v3958 = vpack.c.b16 %v3078, %v3074
    %v3959 = vpack.c.b16 %v3079, %v3075
    %v3960 = vpack.c.b16 %v3080, %v3076
    %v3961 = vpack.c.b16 %v3081, %v3077
    %v3962 = vpack.c.b16 %v3086, %v3082
    %v3963 = vpack.c.b16 %v3087, %v3083
    %v3964 = vpack.c.b16 %v3088, %v3084
    %v3965 = vpack.c.b16 %v3089, %v3085
    %v3966 = vpack.c.b16 %v3094, %v3090
    %v3967 = vpack.c.b16 %v3095, %v3091
    %v3968 = vpack.c.b16 %v3096, %v3092
    %v3969 = vpack.c.b16 %v3097, %v3093
    %v3970 = vpack.c.b16 %v3102, %v3098
    %v3971 = vpack.c.b16 %v3103, %v3099
    %v3972 = vpack.c.b16 %v3104, %v3100
    %v3973 = vpack.c.b16 %v3105, %v3101
    %v3974 = vpack.c.b16 %v3110, %v3106
    %v3975 = vpack.c.b16 %v3111, %v3107
    %v3976 = vpack.c.b16 %v3112, %v3108
    %v3977 = vpack.c.b16 %v3113, %v3109
    %v3978 = vpack.c.b16 %v3118, %v3114
    %v3979 = vpack.c.b16 %v3119, %v3115
    %v3980 = vpack.c.b16 %v3120, %v3116
    %v3981 = vpack.c.b16 %v3121, %v3117
    %v3982 = vpack.c.b16 %v3126, %v3122
    %v3983 = vpack.c.b16 %v3127, %v3123
    %v3984 = vpack.c.b16 %v3128, %v3124
    %v3985 = vpack.c.b16 %v3129, %v3125
    %v3986 = vpack.c.b16 %v3134, %v3130
    %v3987 = vpack.c.b16 %v3135, %v3131
    %v3988 = vpack.c.b16 %v3136, %v3132
    %v3989 = vpack.c.b16 %v3137, %v3133
    %v3990 = vpack.c.b16 %v3142, %v3138
    %v3991 = vpack.c.b16 %v3143, %v3139
    %v3992 = vpack.c.b16 %v3144, %v3140
    %v3993 = vpack.c.b16 %v3145, %v3141
    %v3994 = vpack.c.b16 %v3150, %v3146
    %v3995 = vpack.c.b16 %v3151, %v3147
    %v3996 = vpack.c.b16 %v3152, %v3148
    %v3997 = vpack.c.b16 %v3153, %v3149
    %v3998 = vpack.c.b16 %v3158, %v3154
    %v3999 = vpack.c.b16 %v3159, %v3155
    %v4000 = vpack.c.b16 %v3160, %v3156
    %v4001 = vpack.c.b16 %v3161, %v3157
    %v4002 = vpack.c.b16 %v3166, %v3162
    %v4003 = vpack.c.b16 %v3167, %v3163
    %v4004 = vpack.c.b16 %v3168, %v3164
    %v4005 = vpack.c.b16 %v3169, %v3165
    %v4006 = vpack.c.b16 %v3174, %v3170
    %v4007 = vpack.c.b16 %v3175, %v3171
    %v4008 = vpack.c.b16 %v3176, %v3172
    %v4009 = vpack.c.b16 %v3177, %v3173
    %v4010 = vpack.c.b16 %v3182, %v3178
    %v4011 = vpack.c.b16 %v3183, %v3179
    %v4012 = vpack.c.b16 %v3184, %v3180
    %v4013 = vpack.c.b16 %v3185, %v3181
    %v4014 = vpack.c.b16 %v3190, %v3186
    %v4015 = vpack.c.b16 %v3191, %v3187
    %v4016 = vpack.c.b16 %v3192, %v3188
    %v4017 = vpack.c.b16 %v3193, %v3189
    %v4018 = vpack.c.b16 %v3198, %v3194
    %v4019 = vpack.c.b16 %v3199, %v3195
    %v4020 = vpack.c.b16 %v3200, %v3196
    %v4021 = vpack.c.b16 %v3201, %v3197
    %v4022 = vpack.c.b16 %v3206, %v3202
    %v4023 = vpack.c.b16 %v3207, %v3203
    %v4024 = vpack.c.b16 %v3208, %v3204
    %v4025 = vpack.c.b16 %v3209, %v3205
    %v4026 = vpack.c.b16 %v3214, %v3210
    %v4027 = vpack.c.b16 %v3215, %v3211
    %v4028 = vpack.c.b16 %v3216, %v3212
    %v4029 = vpack.c.b16 %v3217, %v3213
    %v4030 = vpack.c.b16 %v3222, %v3218
    %v4031 = vpack.c.b16 %v3223, %v3219
    %v4032 = vpack.c.b16 %v3224, %v3220
    %v4033 = vpack.c.b16 %v3225, %v3221
    %v4034 = vpack.c.b16 %v3230, %v3226
    %v4035 = vpack.c.b16 %v3231, %v3227
    %v4036 = vpack.c.b16 %v3232, %v3228
    %v4037 = vpack.c.b16 %v3233, %v3229
    %v4038 = vpack.c.b16 %v3238, %v3234
    %v4039 = vpack.c.b16 %v3239, %v3235
    %v4040 = vpack.c.b16 %v3240, %v3236
    %v4041 = vpack.c.b16 %v3241, %v3237
    %v4042 = vpack.c.b16 %v3246, %v3242
    %v4043 = vpack.c.b16 %v3247, %v3243
    %v4044 = vpack.c.b16 %v3248, %v3244
    %v4045 = vpack.c.b16 %v3249, %v3245
    %v4046 = vpack.c.b16 %v3254, %v3250
    %v4047 = vpack.c.b16 %v3255, %v3251
    %v4048 = vpack.c.b16 %v3256, %v3252
    %v4049 = vpack.c.b16 %v3257, %v3253
    %v4050 = vpack.c.b16 %v3262, %v3258
    %v4051 = vpack.c.b16 %v3263, %v3259
    %v4052 = vpack.c.b16 %v3264, %v3260
    %v4053 = vpack.c.b16 %v3265, %v3261
    %v4054 = vpack.c.b16 %v3270, %v3266
    %v4055 = vpack.c.b16 %v3271, %v3267
    %v4056 = vpack.c.b16 %v3272, %v3268
    %v4057 = vpack.c.b16 %v3273, %v3269
    %v4058 = vpack.c.b16 %v3278, %v3274
    %v4059 = vpack.c.b16 %v3279, %v3275
    %v4060 = vpack.c.b16 %v3280, %v3276
    %v4061 = vpack.c.b16 %v3281, %v3277
    %v4062 = vpack.c.b16 %v3286, %v3282
    %v4063 = vpack.c.b16 %v3287, %v3283
    %v4064 = vpack.c.b16 %v3288, %v3284
    %v4065 = vpack.c.b16 %v3289, %v3285
    %v4066 = vpack.c.b16 %v3294, %v3290
    %v4067 = vpack.c.b16 %v3295, %v3291
    %v4068 = vpack.c.b16 %v3296, %v3292
    %v4069 = vpack.c.b16 %v3297, %v3293
    %v4070 = vpack.c.b16 %v3302, %v3298
    %v4071 = vpack.c.b16 %v3303, %v3299
    %v4072 = vpack.c.b16 %v3304, %v3300
    %v4073 = vpack.c.b16 %v3305, %v3301
    %4842 = vmatpush.bf16.msra.mxu0 %v3334
    %4843 = vmatpush.bf16.msra.mxu0 %v3330
    %4844 = vmatpush.bf16.msra.mxu0 %v3326
    %4845 = vmatpush.bf16.msra.mxu0 %v3322
    %4846 = vmatpush.bf16.msra.mxu0 %v3318
    %4847 = vmatpush.bf16.msra.mxu0 %v3314
    %4848 = vmatpush.bf16.msra.mxu0 %v3310
    %4849 = vmatpush.bf16.msra.mxu0 %v3306
    %4850 = vmatmul.bf16.gmra.mxu0 %v954
    %v4851 = vpop.f32.mrf.mxu0
    %v4852 = vadd.f32 %v910, %v4851
    %v4853 = vpop.f32.mrf.mxu0
    %4854 = vdwg.mxu0
    %4855 = vmatpush.bf16.msra.mxu0 %v3366
    %4856 = vmatpush.bf16.msra.mxu0 %v3362
    %4857 = vmatpush.bf16.msra.mxu0 %v3358
    %4858 = vmatpush.bf16.msra.mxu0 %v3354
    %4859 = vmatpush.bf16.msra.mxu0 %v3350
    %4860 = vmatpush.bf16.msra.mxu0 %v3346
    %4861 = vmatpush.bf16.msra.mxu0 %v3342
    %4862 = vmatpush.bf16.msra.mxu0 %v3338
    %4863 = vmatmul.bf16.gmra.mxu0 %v955
    %v4864 = vpop.f32.mrf.mxu0
    %v4865 = vadd.f32 %v4852, %v4864
    %v4866 = vpop.f32.mrf.mxu0
    %4867 = vdwg.mxu0
    %4868 = vmatpush.bf16.msra.mxu0 %v3398
    %4869 = vmatpush.bf16.msra.mxu0 %v3394
    %4870 = vmatpush.bf16.msra.mxu0 %v3390
    %4871 = vmatpush.bf16.msra.mxu0 %v3386
    %4872 = vmatpush.bf16.msra.mxu0 %v3382
    %4873 = vmatpush.bf16.msra.mxu0 %v3378
    %4874 = vmatpush.bf16.msra.mxu0 %v3374
    %4875 = vmatpush.bf16.msra.mxu0 %v3370
    %4876 = vmatmul.bf16.gmra.mxu0 %v956
    %v4877 = vpop.f32.mrf.mxu0
    %v4878 = vadd.f32 %v4865, %v4877
    %v4879 = vpop.f32.mrf.mxu0
    %4880 = vdwg.mxu0
    %4881 = vmatpush.bf16.msra.mxu0 %v3430
    %4882 = vmatpush.bf16.msra.mxu0 %v3426
    %4883 = vmatpush.bf16.msra.mxu0 %v3422
    %4884 = vmatpush.bf16.msra.mxu0 %v3418
    %4885 = vmatpush.bf16.msra.mxu0 %v3414
    %4886 = vmatpush.bf16.msra.mxu0 %v3410
    %4887 = vmatpush.bf16.msra.mxu0 %v3406
    %4888 = vmatpush.bf16.msra.mxu0 %v3402
    %4889 = vmatmul.bf16.gmra.mxu0 %v957
    %v4890 = vpop.f32.mrf.mxu0
    %v4891 = vadd.f32 %v4878, %v4890
    %v4892 = vpop.f32.mrf.mxu0
    %4893 = vdwg.mxu0
    %4894 = vmatpush.bf16.msra.mxu0 %v3462
    %4895 = vmatpush.bf16.msra.mxu0 %v3458
    %4896 = vmatpush.bf16.msra.mxu0 %v3454
    %4897 = vmatpush.bf16.msra.mxu0 %v3450
    %4898 = vmatpush.bf16.msra.mxu0 %v3446
    %4899 = vmatpush.bf16.msra.mxu0 %v3442
    %4900 = vmatpush.bf16.msra.mxu0 %v3438
    %4901 = vmatpush.bf16.msra.mxu0 %v3434
    %4902 = vmatmul.bf16.gmra.mxu0 %v958
    %v4903 = vpop.f32.mrf.mxu0
    %v4904 = vadd.f32 %v4891, %v4903
    %v4905 = vpop.f32.mrf.mxu0
    %4906 = vdwg.mxu0
    %4907 = vmatpush.bf16.msra.mxu0 %v3494
    %4908 = vmatpush.bf16.msra.mxu0 %v3490
    %4909 = vmatpush.bf16.msra.mxu0 %v3486
    %4910 = vmatpush.bf16.msra.mxu0 %v3482
    %4911 = vmatpush.bf16.msra.mxu0 %v3478
    %4912 = vmatpush.bf16.msra.mxu0 %v3474
    %4913 = vmatpush.bf16.msra.mxu0 %v3470
    %4914 = vmatpush.bf16.msra.mxu0 %v3466
    %4915 = vmatmul.bf16.gmra.mxu0 %v959
    %v4916 = vpop.f32.mrf.mxu0
    %v4917 = vadd.f32 %v4904, %v4916
    %v4918 = vpop.f32.mrf.mxu0
    %4919 = vdwg.mxu0
    %4920 = vmatpush.bf16.msra.mxu0 %v3526
    %4921 = vmatpush.bf16.msra.mxu0 %v3522
    %4922 = vmatpush.bf16.msra.mxu0 %v3518
    %4923 = vmatpush.bf16.msra.mxu0 %v3514
    %4924 = vmatpush.bf16.msra.mxu0 %v3510
    %4925 = vmatpush.bf16.msra.mxu0 %v3506
    %4926 = vmatpush.bf16.msra.mxu0 %v3502
    %4927 = vmatpush.bf16.msra.mxu0 %v3498
    %4928 = vmatmul.bf16.gmra.mxu0 %v960
    %v4929 = vpop.f32.mrf.mxu0
    %v4930 = vadd.f32 %v4917, %v4929
    %v4931 = vpop.f32.mrf.mxu0
    %4932 = vdwg.mxu0
    %4933 = vmatpush.bf16.msra.mxu0 %v3558
    %4934 = vmatpush.bf16.msra.mxu0 %v3554
    %4935 = vmatpush.bf16.msra.mxu0 %v3550
    %4936 = vmatpush.bf16.msra.mxu0 %v3546
    %4937 = vmatpush.bf16.msra.mxu0 %v3542
    %4938 = vmatpush.bf16.msra.mxu0 %v3538
    %4939 = vmatpush.bf16.msra.mxu0 %v3534
    %4940 = vmatpush.bf16.msra.mxu0 %v3530
    %4941 = vmatmul.bf16.gmra.mxu0 %v961
    %v4942 = vpop.f32.mrf.mxu0
    %v4943 = vadd.f32 %v4930, %v4942
    %v4944 = vpop.f32.mrf.mxu0
    %4945 = vdwg.mxu0
    %4946 = vmatpush.bf16.msra.mxu0 %v3590
    %4947 = vmatpush.bf16.msra.mxu0 %v3586
    %4948 = vmatpush.bf16.msra.mxu0 %v3582
    %4949 = vmatpush.bf16.msra.mxu0 %v3578
    %4950 = vmatpush.bf16.msra.mxu0 %v3574
    %4951 = vmatpush.bf16.msra.mxu0 %v3570
    %4952 = vmatpush.bf16.msra.mxu0 %v3566
    %4953 = vmatpush.bf16.msra.mxu0 %v3562
    %4954 = vmatmul.bf16.gmra.mxu0 %v962
    %v4955 = vpop.f32.mrf.mxu0
    %v4956 = vadd.f32 %v4943, %v4955
    %v4957 = vpop.f32.mrf.mxu0
    %4958 = vdwg.mxu0
    %4959 = vmatpush.bf16.msra.mxu0 %v3622
    %4960 = vmatpush.bf16.msra.mxu0 %v3618
    %4961 = vmatpush.bf16.msra.mxu0 %v3614
    %4962 = vmatpush.bf16.msra.mxu0 %v3610
    %4963 = vmatpush.bf16.msra.mxu0 %v3606
    %4964 = vmatpush.bf16.msra.mxu0 %v3602
    %4965 = vmatpush.bf16.msra.mxu0 %v3598
    %4966 = vmatpush.bf16.msra.mxu0 %v3594
    %4967 = vmatmul.bf16.gmra.mxu0 %v963
    %v4968 = vpop.f32.mrf.mxu0
    %v4969 = vadd.f32 %v4956, %v4968
    %v4970 = vpop.f32.mrf.mxu0
    %4971 = vdwg.mxu0
    %4972 = vmatpush.bf16.msra.mxu0 %v3654
    %4973 = vmatpush.bf16.msra.mxu0 %v3650
    %4974 = vmatpush.bf16.msra.mxu0 %v3646
    %4975 = vmatpush.bf16.msra.mxu0 %v3642
    %4976 = vmatpush.bf16.msra.mxu0 %v3638
    %4977 = vmatpush.bf16.msra.mxu0 %v3634
    %4978 = vmatpush.bf16.msra.mxu0 %v3630
    %4979 = vmatpush.bf16.msra.mxu0 %v3626
    %4980 = vmatmul.bf16.gmra.mxu0 %v964
    %v4981 = vpop.f32.mrf.mxu0
    %v4982 = vadd.f32 %v4969, %v4981
    %v4983 = vpop.f32.mrf.mxu0
    %4984 = vdwg.mxu0
    %4985 = vmatpush.bf16.msra.mxu0 %v3686
    %4986 = vmatpush.bf16.msra.mxu0 %v3682
    %4987 = vmatpush.bf16.msra.mxu0 %v3678
    %4988 = vmatpush.bf16.msra.mxu0 %v3674
    %4989 = vmatpush.bf16.msra.mxu0 %v3670
    %4990 = vmatpush.bf16.msra.mxu0 %v3666
    %4991 = vmatpush.bf16.msra.mxu0 %v3662
    %4992 = vmatpush.bf16.msra.mxu0 %v3658
    %4993 = vmatmul.bf16.gmra.mxu0 %v965
    %v4994 = vpop.f32.mrf.mxu0
    %v4995 = vadd.f32 %v4982, %v4994
    %v4996 = vpop.f32.mrf.mxu0
    %4997 = vdwg.mxu0
    %4998 = vmatpush.bf16.msra.mxu0 %v3718
    %4999 = vmatpush.bf16.msra.mxu0 %v3714
    %5000 = vmatpush.bf16.msra.mxu0 %v3710
    %5001 = vmatpush.bf16.msra.mxu0 %v3706
    %5002 = vmatpush.bf16.msra.mxu0 %v3702
    %5003 = vmatpush.bf16.msra.mxu0 %v3698
    %5004 = vmatpush.bf16.msra.mxu0 %v3694
    %5005 = vmatpush.bf16.msra.mxu0 %v3690
    %5006 = vmatmul.bf16.gmra.mxu0 %v966
    %v5007 = vpop.f32.mrf.mxu0
    %v5008 = vadd.f32 %v4995, %v5007
    %v5009 = vpop.f32.mrf.mxu0
    %5010 = vdwg.mxu0
    %5011 = vmatpush.bf16.msra.mxu0 %v3750
    %5012 = vmatpush.bf16.msra.mxu0 %v3746
    %5013 = vmatpush.bf16.msra.mxu0 %v3742
    %5014 = vmatpush.bf16.msra.mxu0 %v3738
    %5015 = vmatpush.bf16.msra.mxu0 %v3734
    %5016 = vmatpush.bf16.msra.mxu0 %v3730
    %5017 = vmatpush.bf16.msra.mxu0 %v3726
    %5018 = vmatpush.bf16.msra.mxu0 %v3722
    %5019 = vmatmul.bf16.gmra.mxu0 %v967
    %v5020 = vpop.f32.mrf.mxu0
    %v5021 = vadd.f32 %v5008, %v5020
    %v5022 = vpop.f32.mrf.mxu0
    %5023 = vdwg.mxu0
    %5024 = vmatpush.bf16.msra.mxu0 %v3782
    %5025 = vmatpush.bf16.msra.mxu0 %v3778
    %5026 = vmatpush.bf16.msra.mxu0 %v3774
    %5027 = vmatpush.bf16.msra.mxu0 %v3770
    %5028 = vmatpush.bf16.msra.mxu0 %v3766
    %5029 = vmatpush.bf16.msra.mxu0 %v3762
    %5030 = vmatpush.bf16.msra.mxu0 %v3758
    %5031 = vmatpush.bf16.msra.mxu0 %v3754
    %5032 = vmatmul.bf16.gmra.mxu0 %v968
    %v5033 = vpop.f32.mrf.mxu0
    %v5034 = vadd.f32 %v5021, %v5033
    %v5035 = vpop.f32.mrf.mxu0
    %5036 = vdwg.mxu0
    %5037 = vmatpush.bf16.msra.mxu0 %v3814
    %5038 = vmatpush.bf16.msra.mxu0 %v3810
    %5039 = vmatpush.bf16.msra.mxu0 %v3806
    %5040 = vmatpush.bf16.msra.mxu0 %v3802
    %5041 = vmatpush.bf16.msra.mxu0 %v3798
    %5042 = vmatpush.bf16.msra.mxu0 %v3794
    %5043 = vmatpush.bf16.msra.mxu0 %v3790
    %5044 = vmatpush.bf16.msra.mxu0 %v3786
    %5045 = vmatmul.bf16.gmra.mxu0 %v969
    %v5046 = vpop.f32.mrf.mxu0
    %v5047 = vadd.f32 %v5034, %v5046
    %v5048 = vpop.f32.mrf.mxu0
    %5049 = vdwg.mxu0
    %5050 = vmatpush.bf16.msra.mxu0 %v3846
    %5051 = vmatpush.bf16.msra.mxu0 %v3842
    %5052 = vmatpush.bf16.msra.mxu0 %v3838
    %5053 = vmatpush.bf16.msra.mxu0 %v3834
    %5054 = vmatpush.bf16.msra.mxu0 %v3830
    %5055 = vmatpush.bf16.msra.mxu0 %v3826
    %5056 = vmatpush.bf16.msra.mxu0 %v3822
    %5057 = vmatpush.bf16.msra.mxu0 %v3818
    %5058 = vmatmul.bf16.gmra.mxu0 %v970
    %v5059 = vpop.f32.mrf.mxu0
    %v5060 = vadd.f32 %v5047, %v5059
    %v5061 = vpop.f32.mrf.mxu0
    %5062 = vdwg.mxu0
    %5063 = vmatpush.bf16.msra.mxu0 %v3878
    %5064 = vmatpush.bf16.msra.mxu0 %v3874
    %5065 = vmatpush.bf16.msra.mxu0 %v3870
    %5066 = vmatpush.bf16.msra.mxu0 %v3866
    %5067 = vmatpush.bf16.msra.mxu0 %v3862
    %5068 = vmatpush.bf16.msra.mxu0 %v3858
    %5069 = vmatpush.bf16.msra.mxu0 %v3854
    %5070 = vmatpush.bf16.msra.mxu0 %v3850
    %5071 = vmatmul.bf16.gmra.mxu0 %v971
    %v5072 = vpop.f32.mrf.mxu0
    %v5073 = vadd.f32 %v5060, %v5072
    %v5074 = vpop.f32.mrf.mxu0
    %5075 = vdwg.mxu0
    %5076 = vmatpush.bf16.msra.mxu0 %v3910
    %5077 = vmatpush.bf16.msra.mxu0 %v3906
    %5078 = vmatpush.bf16.msra.mxu0 %v3902
    %5079 = vmatpush.bf16.msra.mxu0 %v3898
    %5080 = vmatpush.bf16.msra.mxu0 %v3894
    %5081 = vmatpush.bf16.msra.mxu0 %v3890
    %5082 = vmatpush.bf16.msra.mxu0 %v3886
    %5083 = vmatpush.bf16.msra.mxu0 %v3882
    %5084 = vmatmul.bf16.gmra.mxu0 %v972
    %v5085 = vpop.f32.mrf.mxu0
    %v5086 = vadd.f32 %v5073, %v5085
    %v5087 = vpop.f32.mrf.mxu0
    %5088 = vdwg.mxu0
    %5089 = vmatpush.bf16.msra.mxu0 %v3942
    %5090 = vmatpush.bf16.msra.mxu0 %v3938
    %5091 = vmatpush.bf16.msra.mxu0 %v3934
    %5092 = vmatpush.bf16.msra.mxu0 %v3930
    %5093 = vmatpush.bf16.msra.mxu0 %v3926
    %5094 = vmatpush.bf16.msra.mxu0 %v3922
    %5095 = vmatpush.bf16.msra.mxu0 %v3918
    %5096 = vmatpush.bf16.msra.mxu0 %v3914
    %5097 = vmatmul.bf16.gmra.mxu0 %v973
    %v5098 = vpop.f32.mrf.mxu0
    %v5099 = vadd.f32 %v5086, %v5098
    %v5100 = vpop.f32.mrf.mxu0
    %5101 = vdwg.mxu0
    %5102 = vmatpush.bf16.msra.mxu0 %v3974
    %5103 = vmatpush.bf16.msra.mxu0 %v3970
    %5104 = vmatpush.bf16.msra.mxu0 %v3966
    %5105 = vmatpush.bf16.msra.mxu0 %v3962
    %5106 = vmatpush.bf16.msra.mxu0 %v3958
    %5107 = vmatpush.bf16.msra.mxu0 %v3954
    %5108 = vmatpush.bf16.msra.mxu0 %v3950
    %5109 = vmatpush.bf16.msra.mxu0 %v3946
    %5110 = vmatmul.bf16.gmra.mxu0 %v974
    %v5111 = vpop.f32.mrf.mxu0
    %v5112 = vadd.f32 %v5099, %v5111
    %v5113 = vpop.f32.mrf.mxu0
    %5114 = vdwg.mxu0
    %5115 = vmatpush.bf16.msra.mxu0 %v4006
    %5116 = vmatpush.bf16.msra.mxu0 %v4002
    %5117 = vmatpush.bf16.msra.mxu0 %v3998
    %5118 = vmatpush.bf16.msra.mxu0 %v3994
    %5119 = vmatpush.bf16.msra.mxu0 %v3990
    %5120 = vmatpush.bf16.msra.mxu0 %v3986
    %5121 = vmatpush.bf16.msra.mxu0 %v3982
    %5122 = vmatpush.bf16.msra.mxu0 %v3978
    %5123 = vmatmul.bf16.gmra.mxu0 %v975
    %v5124 = vpop.f32.mrf.mxu0
    %v5125 = vadd.f32 %v5112, %v5124
    %v5126 = vpop.f32.mrf.mxu0
    %5127 = vdwg.mxu0
    %5128 = vmatpush.bf16.msra.mxu0 %v4038
    %5129 = vmatpush.bf16.msra.mxu0 %v4034
    %5130 = vmatpush.bf16.msra.mxu0 %v4030
    %5131 = vmatpush.bf16.msra.mxu0 %v4026
    %5132 = vmatpush.bf16.msra.mxu0 %v4022
    %5133 = vmatpush.bf16.msra.mxu0 %v4018
    %5134 = vmatpush.bf16.msra.mxu0 %v4014
    %5135 = vmatpush.bf16.msra.mxu0 %v4010
    %5136 = vmatmul.bf16.gmra.mxu0 %v976
    %v5137 = vpop.f32.mrf.mxu0
    %v5138 = vadd.f32 %v5125, %v5137
    %v5139 = vpop.f32.mrf.mxu0
    %5140 = vdwg.mxu0
    %5141 = vmatpush.bf16.msra.mxu0 %v4070
    %5142 = vmatpush.bf16.msra.mxu0 %v4066
    %5143 = vmatpush.bf16.msra.mxu0 %v4062
    %5144 = vmatpush.bf16.msra.mxu0 %v4058
    %5145 = vmatpush.bf16.msra.mxu0 %v4054
    %5146 = vmatpush.bf16.msra.mxu0 %v4050
    %5147 = vmatpush.bf16.msra.mxu0 %v4046
    %5148 = vmatpush.bf16.msra.mxu0 %v4042
    %5149 = vmatmul.bf16.gmra.mxu0 %v977
    %v5150 = vpop.f32.mrf.mxu0
    %v5151 = vadd.f32 %v5138, %v5150
    %v5152 = vpop.f32.mrf.mxu0
    %5153 = vdwg.mxu0
    %5154 = vmatpush.bf16.msra.mxu0 %v3335
    %5155 = vmatpush.bf16.msra.mxu0 %v3331
    %5156 = vmatpush.bf16.msra.mxu0 %v3327
    %5157 = vmatpush.bf16.msra.mxu0 %v3323
    %5158 = vmatpush.bf16.msra.mxu0 %v3319
    %5159 = vmatpush.bf16.msra.mxu0 %v3315
    %5160 = vmatpush.bf16.msra.mxu0 %v3311
    %5161 = vmatpush.bf16.msra.mxu0 %v3307
    %5162 = vmatmul.bf16.gmra.mxu0 %v954
    %v5163 = vpop.f32.mrf.mxu0
    %v5164 = vadd.f32 %v911, %v5163
    %v5165 = vpop.f32.mrf.mxu0
    %5166 = vdwg.mxu0
    %5167 = vmatpush.bf16.msra.mxu0 %v3367
    %5168 = vmatpush.bf16.msra.mxu0 %v3363
    %5169 = vmatpush.bf16.msra.mxu0 %v3359
    %5170 = vmatpush.bf16.msra.mxu0 %v3355
    %5171 = vmatpush.bf16.msra.mxu0 %v3351
    %5172 = vmatpush.bf16.msra.mxu0 %v3347
    %5173 = vmatpush.bf16.msra.mxu0 %v3343
    %5174 = vmatpush.bf16.msra.mxu0 %v3339
    %5175 = vmatmul.bf16.gmra.mxu0 %v955
    %v5176 = vpop.f32.mrf.mxu0
    %v5177 = vadd.f32 %v5164, %v5176
    %v5178 = vpop.f32.mrf.mxu0
    %5179 = vdwg.mxu0
    %5180 = vmatpush.bf16.msra.mxu0 %v3399
    %5181 = vmatpush.bf16.msra.mxu0 %v3395
    %5182 = vmatpush.bf16.msra.mxu0 %v3391
    %5183 = vmatpush.bf16.msra.mxu0 %v3387
    %5184 = vmatpush.bf16.msra.mxu0 %v3383
    %5185 = vmatpush.bf16.msra.mxu0 %v3379
    %5186 = vmatpush.bf16.msra.mxu0 %v3375
    %5187 = vmatpush.bf16.msra.mxu0 %v3371
    %5188 = vmatmul.bf16.gmra.mxu0 %v956
    %v5189 = vpop.f32.mrf.mxu0
    %v5190 = vadd.f32 %v5177, %v5189
    %v5191 = vpop.f32.mrf.mxu0
    %5192 = vdwg.mxu0
    %5193 = vmatpush.bf16.msra.mxu0 %v3431
    %5194 = vmatpush.bf16.msra.mxu0 %v3427
    %5195 = vmatpush.bf16.msra.mxu0 %v3423
    %5196 = vmatpush.bf16.msra.mxu0 %v3419
    %5197 = vmatpush.bf16.msra.mxu0 %v3415
    %5198 = vmatpush.bf16.msra.mxu0 %v3411
    %5199 = vmatpush.bf16.msra.mxu0 %v3407
    %5200 = vmatpush.bf16.msra.mxu0 %v3403
    %5201 = vmatmul.bf16.gmra.mxu0 %v957
    %v5202 = vpop.f32.mrf.mxu0
    %v5203 = vadd.f32 %v5190, %v5202
    %v5204 = vpop.f32.mrf.mxu0
    %5205 = vdwg.mxu0
    %5206 = vmatpush.bf16.msra.mxu0 %v3463
    %5207 = vmatpush.bf16.msra.mxu0 %v3459
    %5208 = vmatpush.bf16.msra.mxu0 %v3455
    %5209 = vmatpush.bf16.msra.mxu0 %v3451
    %5210 = vmatpush.bf16.msra.mxu0 %v3447
    %5211 = vmatpush.bf16.msra.mxu0 %v3443
    %5212 = vmatpush.bf16.msra.mxu0 %v3439
    %5213 = vmatpush.bf16.msra.mxu0 %v3435
    %5214 = vmatmul.bf16.gmra.mxu0 %v958
    %v5215 = vpop.f32.mrf.mxu0
    %v5216 = vadd.f32 %v5203, %v5215
    %v5217 = vpop.f32.mrf.mxu0
    %5218 = vdwg.mxu0
    %5219 = vmatpush.bf16.msra.mxu0 %v3495
    %5220 = vmatpush.bf16.msra.mxu0 %v3491
    %5221 = vmatpush.bf16.msra.mxu0 %v3487
    %5222 = vmatpush.bf16.msra.mxu0 %v3483
    %5223 = vmatpush.bf16.msra.mxu0 %v3479
    %5224 = vmatpush.bf16.msra.mxu0 %v3475
    %5225 = vmatpush.bf16.msra.mxu0 %v3471
    %5226 = vmatpush.bf16.msra.mxu0 %v3467
    %5227 = vmatmul.bf16.gmra.mxu0 %v959
    %v5228 = vpop.f32.mrf.mxu0
    %v5229 = vadd.f32 %v5216, %v5228
    %v5230 = vpop.f32.mrf.mxu0
    %5231 = vdwg.mxu0
    %5232 = vmatpush.bf16.msra.mxu0 %v3527
    %5233 = vmatpush.bf16.msra.mxu0 %v3523
    %5234 = vmatpush.bf16.msra.mxu0 %v3519
    %5235 = vmatpush.bf16.msra.mxu0 %v3515
    %5236 = vmatpush.bf16.msra.mxu0 %v3511
    %5237 = vmatpush.bf16.msra.mxu0 %v3507
    %5238 = vmatpush.bf16.msra.mxu0 %v3503
    %5239 = vmatpush.bf16.msra.mxu0 %v3499
    %5240 = vmatmul.bf16.gmra.mxu0 %v960
    %v5241 = vpop.f32.mrf.mxu0
    %v5242 = vadd.f32 %v5229, %v5241
    %v5243 = vpop.f32.mrf.mxu0
    %5244 = vdwg.mxu0
    %5245 = vmatpush.bf16.msra.mxu0 %v3559
    %5246 = vmatpush.bf16.msra.mxu0 %v3555
    %5247 = vmatpush.bf16.msra.mxu0 %v3551
    %5248 = vmatpush.bf16.msra.mxu0 %v3547
    %5249 = vmatpush.bf16.msra.mxu0 %v3543
    %5250 = vmatpush.bf16.msra.mxu0 %v3539
    %5251 = vmatpush.bf16.msra.mxu0 %v3535
    %5252 = vmatpush.bf16.msra.mxu0 %v3531
    %5253 = vmatmul.bf16.gmra.mxu0 %v961
    %v5254 = vpop.f32.mrf.mxu0
    %v5255 = vadd.f32 %v5242, %v5254
    %v5256 = vpop.f32.mrf.mxu0
    %5257 = vdwg.mxu0
    %5258 = vmatpush.bf16.msra.mxu0 %v3591
    %5259 = vmatpush.bf16.msra.mxu0 %v3587
    %5260 = vmatpush.bf16.msra.mxu0 %v3583
    %5261 = vmatpush.bf16.msra.mxu0 %v3579
    %5262 = vmatpush.bf16.msra.mxu0 %v3575
    %5263 = vmatpush.bf16.msra.mxu0 %v3571
    %5264 = vmatpush.bf16.msra.mxu0 %v3567
    %5265 = vmatpush.bf16.msra.mxu0 %v3563
    %5266 = vmatmul.bf16.gmra.mxu0 %v962
    %v5267 = vpop.f32.mrf.mxu0
    %v5268 = vadd.f32 %v5255, %v5267
    %v5269 = vpop.f32.mrf.mxu0
    %5270 = vdwg.mxu0
    %5271 = vmatpush.bf16.msra.mxu0 %v3623
    %5272 = vmatpush.bf16.msra.mxu0 %v3619
    %5273 = vmatpush.bf16.msra.mxu0 %v3615
    %5274 = vmatpush.bf16.msra.mxu0 %v3611
    %5275 = vmatpush.bf16.msra.mxu0 %v3607
    %5276 = vmatpush.bf16.msra.mxu0 %v3603
    %5277 = vmatpush.bf16.msra.mxu0 %v3599
    %5278 = vmatpush.bf16.msra.mxu0 %v3595
    %5279 = vmatmul.bf16.gmra.mxu0 %v963
    %v5280 = vpop.f32.mrf.mxu0
    %v5281 = vadd.f32 %v5268, %v5280
    %v5282 = vpop.f32.mrf.mxu0
    %5283 = vdwg.mxu0
    %5284 = vmatpush.bf16.msra.mxu0 %v3655
    %5285 = vmatpush.bf16.msra.mxu0 %v3651
    %5286 = vmatpush.bf16.msra.mxu0 %v3647
    %5287 = vmatpush.bf16.msra.mxu0 %v3643
    %5288 = vmatpush.bf16.msra.mxu0 %v3639
    %5289 = vmatpush.bf16.msra.mxu0 %v3635
    %5290 = vmatpush.bf16.msra.mxu0 %v3631
    %5291 = vmatpush.bf16.msra.mxu0 %v3627
    %5292 = vmatmul.bf16.gmra.mxu0 %v964
    %v5293 = vpop.f32.mrf.mxu0
    %v5294 = vadd.f32 %v5281, %v5293
    %v5295 = vpop.f32.mrf.mxu0
    %5296 = vdwg.mxu0
    %5297 = vmatpush.bf16.msra.mxu0 %v3687
    %5298 = vmatpush.bf16.msra.mxu0 %v3683
    %5299 = vmatpush.bf16.msra.mxu0 %v3679
    %5300 = vmatpush.bf16.msra.mxu0 %v3675
    %5301 = vmatpush.bf16.msra.mxu0 %v3671
    %5302 = vmatpush.bf16.msra.mxu0 %v3667
    %5303 = vmatpush.bf16.msra.mxu0 %v3663
    %5304 = vmatpush.bf16.msra.mxu0 %v3659
    %5305 = vmatmul.bf16.gmra.mxu0 %v965
    %v5306 = vpop.f32.mrf.mxu0
    %v5307 = vadd.f32 %v5294, %v5306
    %v5308 = vpop.f32.mrf.mxu0
    %5309 = vdwg.mxu0
    %5310 = vmatpush.bf16.msra.mxu0 %v3719
    %5311 = vmatpush.bf16.msra.mxu0 %v3715
    %5312 = vmatpush.bf16.msra.mxu0 %v3711
    %5313 = vmatpush.bf16.msra.mxu0 %v3707
    %5314 = vmatpush.bf16.msra.mxu0 %v3703
    %5315 = vmatpush.bf16.msra.mxu0 %v3699
    %5316 = vmatpush.bf16.msra.mxu0 %v3695
    %5317 = vmatpush.bf16.msra.mxu0 %v3691
    %5318 = vmatmul.bf16.gmra.mxu0 %v966
    %v5319 = vpop.f32.mrf.mxu0
    %v5320 = vadd.f32 %v5307, %v5319
    %v5321 = vpop.f32.mrf.mxu0
    %5322 = vdwg.mxu0
    %5323 = vmatpush.bf16.msra.mxu0 %v3751
    %5324 = vmatpush.bf16.msra.mxu0 %v3747
    %5325 = vmatpush.bf16.msra.mxu0 %v3743
    %5326 = vmatpush.bf16.msra.mxu0 %v3739
    %5327 = vmatpush.bf16.msra.mxu0 %v3735
    %5328 = vmatpush.bf16.msra.mxu0 %v3731
    %5329 = vmatpush.bf16.msra.mxu0 %v3727
    %5330 = vmatpush.bf16.msra.mxu0 %v3723
    %5331 = vmatmul.bf16.gmra.mxu0 %v967
    %v5332 = vpop.f32.mrf.mxu0
    %v5333 = vadd.f32 %v5320, %v5332
    %v5334 = vpop.f32.mrf.mxu0
    %5335 = vdwg.mxu0
    %5336 = vmatpush.bf16.msra.mxu0 %v3783
    %5337 = vmatpush.bf16.msra.mxu0 %v3779
    %5338 = vmatpush.bf16.msra.mxu0 %v3775
    %5339 = vmatpush.bf16.msra.mxu0 %v3771
    %5340 = vmatpush.bf16.msra.mxu0 %v3767
    %5341 = vmatpush.bf16.msra.mxu0 %v3763
    %5342 = vmatpush.bf16.msra.mxu0 %v3759
    %5343 = vmatpush.bf16.msra.mxu0 %v3755
    %5344 = vmatmul.bf16.gmra.mxu0 %v968
    %v5345 = vpop.f32.mrf.mxu0
    %v5346 = vadd.f32 %v5333, %v5345
    %v5347 = vpop.f32.mrf.mxu0
    %5348 = vdwg.mxu0
    %5349 = vmatpush.bf16.msra.mxu0 %v3815
    %5350 = vmatpush.bf16.msra.mxu0 %v3811
    %5351 = vmatpush.bf16.msra.mxu0 %v3807
    %5352 = vmatpush.bf16.msra.mxu0 %v3803
    %5353 = vmatpush.bf16.msra.mxu0 %v3799
    %5354 = vmatpush.bf16.msra.mxu0 %v3795
    %5355 = vmatpush.bf16.msra.mxu0 %v3791
    %5356 = vmatpush.bf16.msra.mxu0 %v3787
    %5357 = vmatmul.bf16.gmra.mxu0 %v969
    %v5358 = vpop.f32.mrf.mxu0
    %v5359 = vadd.f32 %v5346, %v5358
    %v5360 = vpop.f32.mrf.mxu0
    %5361 = vdwg.mxu0
    %5362 = vmatpush.bf16.msra.mxu0 %v3847
    %5363 = vmatpush.bf16.msra.mxu0 %v3843
    %5364 = vmatpush.bf16.msra.mxu0 %v3839
    %5365 = vmatpush.bf16.msra.mxu0 %v3835
    %5366 = vmatpush.bf16.msra.mxu0 %v3831
    %5367 = vmatpush.bf16.msra.mxu0 %v3827
    %5368 = vmatpush.bf16.msra.mxu0 %v3823
    %5369 = vmatpush.bf16.msra.mxu0 %v3819
    %5370 = vmatmul.bf16.gmra.mxu0 %v970
    %v5371 = vpop.f32.mrf.mxu0
    %v5372 = vadd.f32 %v5359, %v5371
    %v5373 = vpop.f32.mrf.mxu0
    %5374 = vdwg.mxu0
    %5375 = vmatpush.bf16.msra.mxu0 %v3879
    %5376 = vmatpush.bf16.msra.mxu0 %v3875
    %5377 = vmatpush.bf16.msra.mxu0 %v3871
    %5378 = vmatpush.bf16.msra.mxu0 %v3867
    %5379 = vmatpush.bf16.msra.mxu0 %v3863
    %5380 = vmatpush.bf16.msra.mxu0 %v3859
    %5381 = vmatpush.bf16.msra.mxu0 %v3855
    %5382 = vmatpush.bf16.msra.mxu0 %v3851
    %5383 = vmatmul.bf16.gmra.mxu0 %v971
    %v5384 = vpop.f32.mrf.mxu0
    %v5385 = vadd.f32 %v5372, %v5384
    %v5386 = vpop.f32.mrf.mxu0
    %5387 = vdwg.mxu0
    %5388 = vmatpush.bf16.msra.mxu0 %v3911
    %5389 = vmatpush.bf16.msra.mxu0 %v3907
    %5390 = vmatpush.bf16.msra.mxu0 %v3903
    %5391 = vmatpush.bf16.msra.mxu0 %v3899
    %5392 = vmatpush.bf16.msra.mxu0 %v3895
    %5393 = vmatpush.bf16.msra.mxu0 %v3891
    %5394 = vmatpush.bf16.msra.mxu0 %v3887
    %5395 = vmatpush.bf16.msra.mxu0 %v3883
    %5396 = vmatmul.bf16.gmra.mxu0 %v972
    %v5397 = vpop.f32.mrf.mxu0
    %v5398 = vadd.f32 %v5385, %v5397
    %v5399 = vpop.f32.mrf.mxu0
    %5400 = vdwg.mxu0
    %5401 = vmatpush.bf16.msra.mxu0 %v3943
    %5402 = vmatpush.bf16.msra.mxu0 %v3939
    %5403 = vmatpush.bf16.msra.mxu0 %v3935
    %5404 = vmatpush.bf16.msra.mxu0 %v3931
    %5405 = vmatpush.bf16.msra.mxu0 %v3927
    %5406 = vmatpush.bf16.msra.mxu0 %v3923
    %5407 = vmatpush.bf16.msra.mxu0 %v3919
    %5408 = vmatpush.bf16.msra.mxu0 %v3915
    %5409 = vmatmul.bf16.gmra.mxu0 %v973
    %v5410 = vpop.f32.mrf.mxu0
    %v5411 = vadd.f32 %v5398, %v5410
    %v5412 = vpop.f32.mrf.mxu0
    %5413 = vdwg.mxu0
    %5414 = vmatpush.bf16.msra.mxu0 %v3975
    %5415 = vmatpush.bf16.msra.mxu0 %v3971
    %5416 = vmatpush.bf16.msra.mxu0 %v3967
    %5417 = vmatpush.bf16.msra.mxu0 %v3963
    %5418 = vmatpush.bf16.msra.mxu0 %v3959
    %5419 = vmatpush.bf16.msra.mxu0 %v3955
    %5420 = vmatpush.bf16.msra.mxu0 %v3951
    %5421 = vmatpush.bf16.msra.mxu0 %v3947
    %5422 = vmatmul.bf16.gmra.mxu0 %v974
    %v5423 = vpop.f32.mrf.mxu0
    %v5424 = vadd.f32 %v5411, %v5423
    %v5425 = vpop.f32.mrf.mxu0
    %5426 = vdwg.mxu0
    %5427 = vmatpush.bf16.msra.mxu0 %v4007
    %5428 = vmatpush.bf16.msra.mxu0 %v4003
    %5429 = vmatpush.bf16.msra.mxu0 %v3999
    %5430 = vmatpush.bf16.msra.mxu0 %v3995
    %5431 = vmatpush.bf16.msra.mxu0 %v3991
    %5432 = vmatpush.bf16.msra.mxu0 %v3987
    %5433 = vmatpush.bf16.msra.mxu0 %v3983
    %5434 = vmatpush.bf16.msra.mxu0 %v3979
    %5435 = vmatmul.bf16.gmra.mxu0 %v975
    %v5436 = vpop.f32.mrf.mxu0
    %v5437 = vadd.f32 %v5424, %v5436
    %v5438 = vpop.f32.mrf.mxu0
    %5439 = vdwg.mxu0
    %5440 = vmatpush.bf16.msra.mxu0 %v4039
    %5441 = vmatpush.bf16.msra.mxu0 %v4035
    %5442 = vmatpush.bf16.msra.mxu0 %v4031
    %5443 = vmatpush.bf16.msra.mxu0 %v4027
    %5444 = vmatpush.bf16.msra.mxu0 %v4023
    %5445 = vmatpush.bf16.msra.mxu0 %v4019
    %5446 = vmatpush.bf16.msra.mxu0 %v4015
    %5447 = vmatpush.bf16.msra.mxu0 %v4011
    %5448 = vmatmul.bf16.gmra.mxu0 %v976
    %v5449 = vpop.f32.mrf.mxu0
    %v5450 = vadd.f32 %v5437, %v5449
    %v5451 = vpop.f32.mrf.mxu0
    %5452 = vdwg.mxu0
    %5453 = vmatpush.bf16.msra.mxu0 %v4071
    %5454 = vmatpush.bf16.msra.mxu0 %v4067
    %5455 = vmatpush.bf16.msra.mxu0 %v4063
    %5456 = vmatpush.bf16.msra.mxu0 %v4059
    %5457 = vmatpush.bf16.msra.mxu0 %v4055
    %5458 = vmatpush.bf16.msra.mxu0 %v4051
    %5459 = vmatpush.bf16.msra.mxu0 %v4047
    %5460 = vmatpush.bf16.msra.mxu0 %v4043
    %5461 = vmatmul.bf16.gmra.mxu0 %v977
    %v5462 = vpop.f32.mrf.mxu0
    %v5463 = vadd.f32 %v5450, %v5462
    %v5464 = vpop.f32.mrf.mxu0
    %5465 = vdwg.mxu0
    %5466 = vmatpush.bf16.msra.mxu0 %v3336
    %5467 = vmatpush.bf16.msra.mxu0 %v3332
    %5468 = vmatpush.bf16.msra.mxu0 %v3328
    %5469 = vmatpush.bf16.msra.mxu0 %v3324
    %5470 = vmatpush.bf16.msra.mxu0 %v3320
    %5471 = vmatpush.bf16.msra.mxu0 %v3316
    %5472 = vmatpush.bf16.msra.mxu0 %v3312
    %5473 = vmatpush.bf16.msra.mxu0 %v3308
    %5474 = vmatmul.bf16.gmra.mxu0 %v954
    %v5475 = vpop.f32.mrf.mxu0
    %v5476 = vadd.f32 %v912, %v5475
    %v5477 = vpop.f32.mrf.mxu0
    %5478 = vdwg.mxu0
    %5479 = vmatpush.bf16.msra.mxu0 %v3368
    %5480 = vmatpush.bf16.msra.mxu0 %v3364
    %5481 = vmatpush.bf16.msra.mxu0 %v3360
    %5482 = vmatpush.bf16.msra.mxu0 %v3356
    %5483 = vmatpush.bf16.msra.mxu0 %v3352
    %5484 = vmatpush.bf16.msra.mxu0 %v3348
    %5485 = vmatpush.bf16.msra.mxu0 %v3344
    %5486 = vmatpush.bf16.msra.mxu0 %v3340
    %5487 = vmatmul.bf16.gmra.mxu0 %v955
    %v5488 = vpop.f32.mrf.mxu0
    %v5489 = vadd.f32 %v5476, %v5488
    %v5490 = vpop.f32.mrf.mxu0
    %5491 = vdwg.mxu0
    %5492 = vmatpush.bf16.msra.mxu0 %v3400
    %5493 = vmatpush.bf16.msra.mxu0 %v3396
    %5494 = vmatpush.bf16.msra.mxu0 %v3392
    %5495 = vmatpush.bf16.msra.mxu0 %v3388
    %5496 = vmatpush.bf16.msra.mxu0 %v3384
    %5497 = vmatpush.bf16.msra.mxu0 %v3380
    %5498 = vmatpush.bf16.msra.mxu0 %v3376
    %5499 = vmatpush.bf16.msra.mxu0 %v3372
    %5500 = vmatmul.bf16.gmra.mxu0 %v956
    %v5501 = vpop.f32.mrf.mxu0
    %v5502 = vadd.f32 %v5489, %v5501
    %v5503 = vpop.f32.mrf.mxu0
    %5504 = vdwg.mxu0
    %5505 = vmatpush.bf16.msra.mxu0 %v3432
    %5506 = vmatpush.bf16.msra.mxu0 %v3428
    %5507 = vmatpush.bf16.msra.mxu0 %v3424
    %5508 = vmatpush.bf16.msra.mxu0 %v3420
    %5509 = vmatpush.bf16.msra.mxu0 %v3416
    %5510 = vmatpush.bf16.msra.mxu0 %v3412
    %5511 = vmatpush.bf16.msra.mxu0 %v3408
    %5512 = vmatpush.bf16.msra.mxu0 %v3404
    %5513 = vmatmul.bf16.gmra.mxu0 %v957
    %v5514 = vpop.f32.mrf.mxu0
    %v5515 = vadd.f32 %v5502, %v5514
    %v5516 = vpop.f32.mrf.mxu0
    %5517 = vdwg.mxu0
    %5518 = vmatpush.bf16.msra.mxu0 %v3464
    %5519 = vmatpush.bf16.msra.mxu0 %v3460
    %5520 = vmatpush.bf16.msra.mxu0 %v3456
    %5521 = vmatpush.bf16.msra.mxu0 %v3452
    %5522 = vmatpush.bf16.msra.mxu0 %v3448
    %5523 = vmatpush.bf16.msra.mxu0 %v3444
    %5524 = vmatpush.bf16.msra.mxu0 %v3440
    %5525 = vmatpush.bf16.msra.mxu0 %v3436
    %5526 = vmatmul.bf16.gmra.mxu0 %v958
    %v5527 = vpop.f32.mrf.mxu0
    %v5528 = vadd.f32 %v5515, %v5527
    %v5529 = vpop.f32.mrf.mxu0
    %5530 = vdwg.mxu0
    %5531 = vmatpush.bf16.msra.mxu0 %v3496
    %5532 = vmatpush.bf16.msra.mxu0 %v3492
    %5533 = vmatpush.bf16.msra.mxu0 %v3488
    %5534 = vmatpush.bf16.msra.mxu0 %v3484
    %5535 = vmatpush.bf16.msra.mxu0 %v3480
    %5536 = vmatpush.bf16.msra.mxu0 %v3476
    %5537 = vmatpush.bf16.msra.mxu0 %v3472
    %5538 = vmatpush.bf16.msra.mxu0 %v3468
    %5539 = vmatmul.bf16.gmra.mxu0 %v959
    %v5540 = vpop.f32.mrf.mxu0
    %v5541 = vadd.f32 %v5528, %v5540
    %v5542 = vpop.f32.mrf.mxu0
    %5543 = vdwg.mxu0
    %5544 = vmatpush.bf16.msra.mxu0 %v3528
    %5545 = vmatpush.bf16.msra.mxu0 %v3524
    %5546 = vmatpush.bf16.msra.mxu0 %v3520
    %5547 = vmatpush.bf16.msra.mxu0 %v3516
    %5548 = vmatpush.bf16.msra.mxu0 %v3512
    %5549 = vmatpush.bf16.msra.mxu0 %v3508
    %5550 = vmatpush.bf16.msra.mxu0 %v3504
    %5551 = vmatpush.bf16.msra.mxu0 %v3500
    %5552 = vmatmul.bf16.gmra.mxu0 %v960
    %v5553 = vpop.f32.mrf.mxu0
    %v5554 = vadd.f32 %v5541, %v5553
    %v5555 = vpop.f32.mrf.mxu0
    %5556 = vdwg.mxu0
    %5557 = vmatpush.bf16.msra.mxu0 %v3560
    %5558 = vmatpush.bf16.msra.mxu0 %v3556
    %5559 = vmatpush.bf16.msra.mxu0 %v3552
    %5560 = vmatpush.bf16.msra.mxu0 %v3548
    %5561 = vmatpush.bf16.msra.mxu0 %v3544
    %5562 = vmatpush.bf16.msra.mxu0 %v3540
    %5563 = vmatpush.bf16.msra.mxu0 %v3536
    %5564 = vmatpush.bf16.msra.mxu0 %v3532
    %5565 = vmatmul.bf16.gmra.mxu0 %v961
    %v5566 = vpop.f32.mrf.mxu0
    %v5567 = vadd.f32 %v5554, %v5566
    %v5568 = vpop.f32.mrf.mxu0
    %5569 = vdwg.mxu0
    %5570 = vmatpush.bf16.msra.mxu0 %v3592
    %5571 = vmatpush.bf16.msra.mxu0 %v3588
    %5572 = vmatpush.bf16.msra.mxu0 %v3584
    %5573 = vmatpush.bf16.msra.mxu0 %v3580
    %5574 = vmatpush.bf16.msra.mxu0 %v3576
    %5575 = vmatpush.bf16.msra.mxu0 %v3572
    %5576 = vmatpush.bf16.msra.mxu0 %v3568
    %5577 = vmatpush.bf16.msra.mxu0 %v3564
    %5578 = vmatmul.bf16.gmra.mxu0 %v962
    %v5579 = vpop.f32.mrf.mxu0
    %v5580 = vadd.f32 %v5567, %v5579
    %v5581 = vpop.f32.mrf.mxu0
    %5582 = vdwg.mxu0
    %5583 = vmatpush.bf16.msra.mxu0 %v3624
    %5584 = vmatpush.bf16.msra.mxu0 %v3620
    %5585 = vmatpush.bf16.msra.mxu0 %v3616
    %5586 = vmatpush.bf16.msra.mxu0 %v3612
    %5587 = vmatpush.bf16.msra.mxu0 %v3608
    %5588 = vmatpush.bf16.msra.mxu0 %v3604
    %5589 = vmatpush.bf16.msra.mxu0 %v3600
    %5590 = vmatpush.bf16.msra.mxu0 %v3596
    %5591 = vmatmul.bf16.gmra.mxu0 %v963
    %v5592 = vpop.f32.mrf.mxu0
    %v5593 = vadd.f32 %v5580, %v5592
    %v5594 = vpop.f32.mrf.mxu0
    %5595 = vdwg.mxu0
    %5596 = vmatpush.bf16.msra.mxu0 %v3656
    %5597 = vmatpush.bf16.msra.mxu0 %v3652
    %5598 = vmatpush.bf16.msra.mxu0 %v3648
    %5599 = vmatpush.bf16.msra.mxu0 %v3644
    %5600 = vmatpush.bf16.msra.mxu0 %v3640
    %5601 = vmatpush.bf16.msra.mxu0 %v3636
    %5602 = vmatpush.bf16.msra.mxu0 %v3632
    %5603 = vmatpush.bf16.msra.mxu0 %v3628
    %5604 = vmatmul.bf16.gmra.mxu0 %v964
    %v5605 = vpop.f32.mrf.mxu0
    %v5606 = vadd.f32 %v5593, %v5605
    %v5607 = vpop.f32.mrf.mxu0
    %5608 = vdwg.mxu0
    %5609 = vmatpush.bf16.msra.mxu0 %v3688
    %5610 = vmatpush.bf16.msra.mxu0 %v3684
    %5611 = vmatpush.bf16.msra.mxu0 %v3680
    %5612 = vmatpush.bf16.msra.mxu0 %v3676
    %5613 = vmatpush.bf16.msra.mxu0 %v3672
    %5614 = vmatpush.bf16.msra.mxu0 %v3668
    %5615 = vmatpush.bf16.msra.mxu0 %v3664
    %5616 = vmatpush.bf16.msra.mxu0 %v3660
    %5617 = vmatmul.bf16.gmra.mxu0 %v965
    %v5618 = vpop.f32.mrf.mxu0
    %v5619 = vadd.f32 %v5606, %v5618
    %v5620 = vpop.f32.mrf.mxu0
    %5621 = vdwg.mxu0
    %5622 = vmatpush.bf16.msra.mxu0 %v3720
    %5623 = vmatpush.bf16.msra.mxu0 %v3716
    %5624 = vmatpush.bf16.msra.mxu0 %v3712
    %5625 = vmatpush.bf16.msra.mxu0 %v3708
    %5626 = vmatpush.bf16.msra.mxu0 %v3704
    %5627 = vmatpush.bf16.msra.mxu0 %v3700
    %5628 = vmatpush.bf16.msra.mxu0 %v3696
    %5629 = vmatpush.bf16.msra.mxu0 %v3692
    %5630 = vmatmul.bf16.gmra.mxu0 %v966
    %v5631 = vpop.f32.mrf.mxu0
    %v5632 = vadd.f32 %v5619, %v5631
    %v5633 = vpop.f32.mrf.mxu0
    %5634 = vdwg.mxu0
    %5635 = vmatpush.bf16.msra.mxu0 %v3752
    %5636 = vmatpush.bf16.msra.mxu0 %v3748
    %5637 = vmatpush.bf16.msra.mxu0 %v3744
    %5638 = vmatpush.bf16.msra.mxu0 %v3740
    %5639 = vmatpush.bf16.msra.mxu0 %v3736
    %5640 = vmatpush.bf16.msra.mxu0 %v3732
    %5641 = vmatpush.bf16.msra.mxu0 %v3728
    %5642 = vmatpush.bf16.msra.mxu0 %v3724
    %5643 = vmatmul.bf16.gmra.mxu0 %v967
    %v5644 = vpop.f32.mrf.mxu0
    %v5645 = vadd.f32 %v5632, %v5644
    %v5646 = vpop.f32.mrf.mxu0
    %5647 = vdwg.mxu0
    %5648 = vmatpush.bf16.msra.mxu0 %v3784
    %5649 = vmatpush.bf16.msra.mxu0 %v3780
    %5650 = vmatpush.bf16.msra.mxu0 %v3776
    %5651 = vmatpush.bf16.msra.mxu0 %v3772
    %5652 = vmatpush.bf16.msra.mxu0 %v3768
    %5653 = vmatpush.bf16.msra.mxu0 %v3764
    %5654 = vmatpush.bf16.msra.mxu0 %v3760
    %5655 = vmatpush.bf16.msra.mxu0 %v3756
    %5656 = vmatmul.bf16.gmra.mxu0 %v968
    %v5657 = vpop.f32.mrf.mxu0
    %v5658 = vadd.f32 %v5645, %v5657
    %v5659 = vpop.f32.mrf.mxu0
    %5660 = vdwg.mxu0
    %5661 = vmatpush.bf16.msra.mxu0 %v3816
    %5662 = vmatpush.bf16.msra.mxu0 %v3812
    %5663 = vmatpush.bf16.msra.mxu0 %v3808
    %5664 = vmatpush.bf16.msra.mxu0 %v3804
    %5665 = vmatpush.bf16.msra.mxu0 %v3800
    %5666 = vmatpush.bf16.msra.mxu0 %v3796
    %5667 = vmatpush.bf16.msra.mxu0 %v3792
    %5668 = vmatpush.bf16.msra.mxu0 %v3788
    %5669 = vmatmul.bf16.gmra.mxu0 %v969
    %v5670 = vpop.f32.mrf.mxu0
    %v5671 = vadd.f32 %v5658, %v5670
    %v5672 = vpop.f32.mrf.mxu0
    %5673 = vdwg.mxu0
    %5674 = vmatpush.bf16.msra.mxu0 %v3848
    %5675 = vmatpush.bf16.msra.mxu0 %v3844
    %5676 = vmatpush.bf16.msra.mxu0 %v3840
    %5677 = vmatpush.bf16.msra.mxu0 %v3836
    %5678 = vmatpush.bf16.msra.mxu0 %v3832
    %5679 = vmatpush.bf16.msra.mxu0 %v3828
    %5680 = vmatpush.bf16.msra.mxu0 %v3824
    %5681 = vmatpush.bf16.msra.mxu0 %v3820
    %5682 = vmatmul.bf16.gmra.mxu0 %v970
    %v5683 = vpop.f32.mrf.mxu0
    %v5684 = vadd.f32 %v5671, %v5683
    %v5685 = vpop.f32.mrf.mxu0
    %5686 = vdwg.mxu0
    %5687 = vmatpush.bf16.msra.mxu0 %v3880
    %5688 = vmatpush.bf16.msra.mxu0 %v3876
    %5689 = vmatpush.bf16.msra.mxu0 %v3872
    %5690 = vmatpush.bf16.msra.mxu0 %v3868
    %5691 = vmatpush.bf16.msra.mxu0 %v3864
    %5692 = vmatpush.bf16.msra.mxu0 %v3860
    %5693 = vmatpush.bf16.msra.mxu0 %v3856
    %5694 = vmatpush.bf16.msra.mxu0 %v3852
    %5695 = vmatmul.bf16.gmra.mxu0 %v971
    %v5696 = vpop.f32.mrf.mxu0
    %v5697 = vadd.f32 %v5684, %v5696
    %v5698 = vpop.f32.mrf.mxu0
    %5699 = vdwg.mxu0
    %5700 = vmatpush.bf16.msra.mxu0 %v3912
    %5701 = vmatpush.bf16.msra.mxu0 %v3908
    %5702 = vmatpush.bf16.msra.mxu0 %v3904
    %5703 = vmatpush.bf16.msra.mxu0 %v3900
    %5704 = vmatpush.bf16.msra.mxu0 %v3896
    %5705 = vmatpush.bf16.msra.mxu0 %v3892
    %5706 = vmatpush.bf16.msra.mxu0 %v3888
    %5707 = vmatpush.bf16.msra.mxu0 %v3884
    %5708 = vmatmul.bf16.gmra.mxu0 %v972
    %v5709 = vpop.f32.mrf.mxu0
    %v5710 = vadd.f32 %v5697, %v5709
    %v5711 = vpop.f32.mrf.mxu0
    %5712 = vdwg.mxu0
    %5713 = vmatpush.bf16.msra.mxu0 %v3944
    %5714 = vmatpush.bf16.msra.mxu0 %v3940
    %5715 = vmatpush.bf16.msra.mxu0 %v3936
    %5716 = vmatpush.bf16.msra.mxu0 %v3932
    %5717 = vmatpush.bf16.msra.mxu0 %v3928
    %5718 = vmatpush.bf16.msra.mxu0 %v3924
    %5719 = vmatpush.bf16.msra.mxu0 %v3920
    %5720 = vmatpush.bf16.msra.mxu0 %v3916
    %5721 = vmatmul.bf16.gmra.mxu0 %v973
    %v5722 = vpop.f32.mrf.mxu0
    %v5723 = vadd.f32 %v5710, %v5722
    %v5724 = vpop.f32.mrf.mxu0
    %5725 = vdwg.mxu0
    %5726 = vmatpush.bf16.msra.mxu0 %v3976
    %5727 = vmatpush.bf16.msra.mxu0 %v3972
    %5728 = vmatpush.bf16.msra.mxu0 %v3968
    %5729 = vmatpush.bf16.msra.mxu0 %v3964
    %5730 = vmatpush.bf16.msra.mxu0 %v3960
    %5731 = vmatpush.bf16.msra.mxu0 %v3956
    %5732 = vmatpush.bf16.msra.mxu0 %v3952
    %5733 = vmatpush.bf16.msra.mxu0 %v3948
    %5734 = vmatmul.bf16.gmra.mxu0 %v974
    %v5735 = vpop.f32.mrf.mxu0
    %v5736 = vadd.f32 %v5723, %v5735
    %v5737 = vpop.f32.mrf.mxu0
    %5738 = vdwg.mxu0
    %5739 = vmatpush.bf16.msra.mxu0 %v4008
    %5740 = vmatpush.bf16.msra.mxu0 %v4004
    %5741 = vmatpush.bf16.msra.mxu0 %v4000
    %5742 = vmatpush.bf16.msra.mxu0 %v3996
    %5743 = vmatpush.bf16.msra.mxu0 %v3992
    %5744 = vmatpush.bf16.msra.mxu0 %v3988
    %5745 = vmatpush.bf16.msra.mxu0 %v3984
    %5746 = vmatpush.bf16.msra.mxu0 %v3980
    %5747 = vmatmul.bf16.gmra.mxu0 %v975
    %v5748 = vpop.f32.mrf.mxu0
    %v5749 = vadd.f32 %v5736, %v5748
    %v5750 = vpop.f32.mrf.mxu0
    %5751 = vdwg.mxu0
    %5752 = vmatpush.bf16.msra.mxu0 %v4040
    %5753 = vmatpush.bf16.msra.mxu0 %v4036
    %5754 = vmatpush.bf16.msra.mxu0 %v4032
    %5755 = vmatpush.bf16.msra.mxu0 %v4028
    %5756 = vmatpush.bf16.msra.mxu0 %v4024
    %5757 = vmatpush.bf16.msra.mxu0 %v4020
    %5758 = vmatpush.bf16.msra.mxu0 %v4016
    %5759 = vmatpush.bf16.msra.mxu0 %v4012
    %5760 = vmatmul.bf16.gmra.mxu0 %v976
    %v5761 = vpop.f32.mrf.mxu0
    %v5762 = vadd.f32 %v5749, %v5761
    %v5763 = vpop.f32.mrf.mxu0
    %5764 = vdwg.mxu0
    %5765 = vmatpush.bf16.msra.mxu0 %v4072
    %5766 = vmatpush.bf16.msra.mxu0 %v4068
    %5767 = vmatpush.bf16.msra.mxu0 %v4064
    %5768 = vmatpush.bf16.msra.mxu0 %v4060
    %5769 = vmatpush.bf16.msra.mxu0 %v4056
    %5770 = vmatpush.bf16.msra.mxu0 %v4052
    %5771 = vmatpush.bf16.msra.mxu0 %v4048
    %5772 = vmatpush.bf16.msra.mxu0 %v4044
    %5773 = vmatmul.bf16.gmra.mxu0 %v977
    %v5774 = vpop.f32.mrf.mxu0
    %v5775 = vadd.f32 %v5762, %v5774
    %v5776 = vpop.f32.mrf.mxu0
    %5777 = vdwg.mxu0
    %5778 = vmatpush.bf16.msra.mxu0 %v3337
    %5779 = vmatpush.bf16.msra.mxu0 %v3333
    %5780 = vmatpush.bf16.msra.mxu0 %v3329
    %5781 = vmatpush.bf16.msra.mxu0 %v3325
    %5782 = vmatpush.bf16.msra.mxu0 %v3321
    %5783 = vmatpush.bf16.msra.mxu0 %v3317
    %5784 = vmatpush.bf16.msra.mxu0 %v3313
    %5785 = vmatpush.bf16.msra.mxu0 %v3309
    %5786 = vmatmul.bf16.gmra.mxu0 %v954
    %v5787 = vpop.f32.mrf.mxu0
    %v5788 = vadd.f32 %v913, %v5787
    %v5789 = vpop.f32.mrf.mxu0
    %5790 = vdwg.mxu0
    %5791 = vmatpush.bf16.msra.mxu0 %v3369
    %5792 = vmatpush.bf16.msra.mxu0 %v3365
    %5793 = vmatpush.bf16.msra.mxu0 %v3361
    %5794 = vmatpush.bf16.msra.mxu0 %v3357
    %5795 = vmatpush.bf16.msra.mxu0 %v3353
    %5796 = vmatpush.bf16.msra.mxu0 %v3349
    %5797 = vmatpush.bf16.msra.mxu0 %v3345
    %5798 = vmatpush.bf16.msra.mxu0 %v3341
    %5799 = vmatmul.bf16.gmra.mxu0 %v955
    %v5800 = vpop.f32.mrf.mxu0
    %v5801 = vadd.f32 %v5788, %v5800
    %v5802 = vpop.f32.mrf.mxu0
    %5803 = vdwg.mxu0
    %5804 = vmatpush.bf16.msra.mxu0 %v3401
    %5805 = vmatpush.bf16.msra.mxu0 %v3397
    %5806 = vmatpush.bf16.msra.mxu0 %v3393
    %5807 = vmatpush.bf16.msra.mxu0 %v3389
    %5808 = vmatpush.bf16.msra.mxu0 %v3385
    %5809 = vmatpush.bf16.msra.mxu0 %v3381
    %5810 = vmatpush.bf16.msra.mxu0 %v3377
    %5811 = vmatpush.bf16.msra.mxu0 %v3373
    %5812 = vmatmul.bf16.gmra.mxu0 %v956
    %v5813 = vpop.f32.mrf.mxu0
    %v5814 = vadd.f32 %v5801, %v5813
    %v5815 = vpop.f32.mrf.mxu0
    %5816 = vdwg.mxu0
    %5817 = vmatpush.bf16.msra.mxu0 %v3433
    %5818 = vmatpush.bf16.msra.mxu0 %v3429
    %5819 = vmatpush.bf16.msra.mxu0 %v3425
    %5820 = vmatpush.bf16.msra.mxu0 %v3421
    %5821 = vmatpush.bf16.msra.mxu0 %v3417
    %5822 = vmatpush.bf16.msra.mxu0 %v3413
    %5823 = vmatpush.bf16.msra.mxu0 %v3409
    %5824 = vmatpush.bf16.msra.mxu0 %v3405
    %5825 = vmatmul.bf16.gmra.mxu0 %v957
    %v5826 = vpop.f32.mrf.mxu0
    %v5827 = vadd.f32 %v5814, %v5826
    %v5828 = vpop.f32.mrf.mxu0
    %5829 = vdwg.mxu0
    %5830 = vmatpush.bf16.msra.mxu0 %v3465
    %5831 = vmatpush.bf16.msra.mxu0 %v3461
    %5832 = vmatpush.bf16.msra.mxu0 %v3457
    %5833 = vmatpush.bf16.msra.mxu0 %v3453
    %5834 = vmatpush.bf16.msra.mxu0 %v3449
    %5835 = vmatpush.bf16.msra.mxu0 %v3445
    %5836 = vmatpush.bf16.msra.mxu0 %v3441
    %5837 = vmatpush.bf16.msra.mxu0 %v3437
    %5838 = vmatmul.bf16.gmra.mxu0 %v958
    %v5839 = vpop.f32.mrf.mxu0
    %v5840 = vadd.f32 %v5827, %v5839
    %v5841 = vpop.f32.mrf.mxu0
    %5842 = vdwg.mxu0
    %5843 = vmatpush.bf16.msra.mxu0 %v3497
    %5844 = vmatpush.bf16.msra.mxu0 %v3493
    %5845 = vmatpush.bf16.msra.mxu0 %v3489
    %5846 = vmatpush.bf16.msra.mxu0 %v3485
    %5847 = vmatpush.bf16.msra.mxu0 %v3481
    %5848 = vmatpush.bf16.msra.mxu0 %v3477
    %5849 = vmatpush.bf16.msra.mxu0 %v3473
    %5850 = vmatpush.bf16.msra.mxu0 %v3469
    %5851 = vmatmul.bf16.gmra.mxu0 %v959
    %v5852 = vpop.f32.mrf.mxu0
    %v5853 = vadd.f32 %v5840, %v5852
    %v5854 = vpop.f32.mrf.mxu0
    %5855 = vdwg.mxu0
    %5856 = vmatpush.bf16.msra.mxu0 %v3529
    %5857 = vmatpush.bf16.msra.mxu0 %v3525
    %5858 = vmatpush.bf16.msra.mxu0 %v3521
    %5859 = vmatpush.bf16.msra.mxu0 %v3517
    %5860 = vmatpush.bf16.msra.mxu0 %v3513
    %5861 = vmatpush.bf16.msra.mxu0 %v3509
    %5862 = vmatpush.bf16.msra.mxu0 %v3505
    %5863 = vmatpush.bf16.msra.mxu0 %v3501
    %5864 = vmatmul.bf16.gmra.mxu0 %v960
    %v5865 = vpop.f32.mrf.mxu0
    %v5866 = vadd.f32 %v5853, %v5865
    %v5867 = vpop.f32.mrf.mxu0
    %5868 = vdwg.mxu0
    %5869 = vmatpush.bf16.msra.mxu0 %v3561
    %5870 = vmatpush.bf16.msra.mxu0 %v3557
    %5871 = vmatpush.bf16.msra.mxu0 %v3553
    %5872 = vmatpush.bf16.msra.mxu0 %v3549
    %5873 = vmatpush.bf16.msra.mxu0 %v3545
    %5874 = vmatpush.bf16.msra.mxu0 %v3541
    %5875 = vmatpush.bf16.msra.mxu0 %v3537
    %5876 = vmatpush.bf16.msra.mxu0 %v3533
    %5877 = vmatmul.bf16.gmra.mxu0 %v961
    %v5878 = vpop.f32.mrf.mxu0
    %v5879 = vadd.f32 %v5866, %v5878
    %v5880 = vpop.f32.mrf.mxu0
    %5881 = vdwg.mxu0
    %5882 = vmatpush.bf16.msra.mxu0 %v3593
    %5883 = vmatpush.bf16.msra.mxu0 %v3589
    %5884 = vmatpush.bf16.msra.mxu0 %v3585
    %5885 = vmatpush.bf16.msra.mxu0 %v3581
    %5886 = vmatpush.bf16.msra.mxu0 %v3577
    %5887 = vmatpush.bf16.msra.mxu0 %v3573
    %5888 = vmatpush.bf16.msra.mxu0 %v3569
    %5889 = vmatpush.bf16.msra.mxu0 %v3565
    %5890 = vmatmul.bf16.gmra.mxu0 %v962
    %v5891 = vpop.f32.mrf.mxu0
    %v5892 = vadd.f32 %v5879, %v5891
    %v5893 = vpop.f32.mrf.mxu0
    %5894 = vdwg.mxu0
    %5895 = vmatpush.bf16.msra.mxu0 %v3625
    %5896 = vmatpush.bf16.msra.mxu0 %v3621
    %5897 = vmatpush.bf16.msra.mxu0 %v3617
    %5898 = vmatpush.bf16.msra.mxu0 %v3613
    %5899 = vmatpush.bf16.msra.mxu0 %v3609
    %5900 = vmatpush.bf16.msra.mxu0 %v3605
    %5901 = vmatpush.bf16.msra.mxu0 %v3601
    %5902 = vmatpush.bf16.msra.mxu0 %v3597
    %5903 = vmatmul.bf16.gmra.mxu0 %v963
    %v5904 = vpop.f32.mrf.mxu0
    %v5905 = vadd.f32 %v5892, %v5904
    %v5906 = vpop.f32.mrf.mxu0
    %5907 = vdwg.mxu0
    %5908 = vmatpush.bf16.msra.mxu0 %v3657
    %5909 = vmatpush.bf16.msra.mxu0 %v3653
    %5910 = vmatpush.bf16.msra.mxu0 %v3649
    %5911 = vmatpush.bf16.msra.mxu0 %v3645
    %5912 = vmatpush.bf16.msra.mxu0 %v3641
    %5913 = vmatpush.bf16.msra.mxu0 %v3637
    %5914 = vmatpush.bf16.msra.mxu0 %v3633
    %5915 = vmatpush.bf16.msra.mxu0 %v3629
    %5916 = vmatmul.bf16.gmra.mxu0 %v964
    %v5917 = vpop.f32.mrf.mxu0
    %v5918 = vadd.f32 %v5905, %v5917
    %v5919 = vpop.f32.mrf.mxu0
    %5920 = vdwg.mxu0
    %5921 = vmatpush.bf16.msra.mxu0 %v3689
    %5922 = vmatpush.bf16.msra.mxu0 %v3685
    %5923 = vmatpush.bf16.msra.mxu0 %v3681
    %5924 = vmatpush.bf16.msra.mxu0 %v3677
    %5925 = vmatpush.bf16.msra.mxu0 %v3673
    %5926 = vmatpush.bf16.msra.mxu0 %v3669
    %5927 = vmatpush.bf16.msra.mxu0 %v3665
    %5928 = vmatpush.bf16.msra.mxu0 %v3661
    %5929 = vmatmul.bf16.gmra.mxu0 %v965
    %v5930 = vpop.f32.mrf.mxu0
    %v5931 = vadd.f32 %v5918, %v5930
    %v5932 = vpop.f32.mrf.mxu0
    %5933 = vdwg.mxu0
    %5934 = vmatpush.bf16.msra.mxu0 %v3721
    %5935 = vmatpush.bf16.msra.mxu0 %v3717
    %5936 = vmatpush.bf16.msra.mxu0 %v3713
    %5937 = vmatpush.bf16.msra.mxu0 %v3709
    %5938 = vmatpush.bf16.msra.mxu0 %v3705
    %5939 = vmatpush.bf16.msra.mxu0 %v3701
    %5940 = vmatpush.bf16.msra.mxu0 %v3697
    %5941 = vmatpush.bf16.msra.mxu0 %v3693
    %5942 = vmatmul.bf16.gmra.mxu0 %v966
    %v5943 = vpop.f32.mrf.mxu0
    %v5944 = vadd.f32 %v5931, %v5943
    %v5945 = vpop.f32.mrf.mxu0
    %5946 = vdwg.mxu0
    %5947 = vmatpush.bf16.msra.mxu0 %v3753
    %5948 = vmatpush.bf16.msra.mxu0 %v3749
    %5949 = vmatpush.bf16.msra.mxu0 %v3745
    %5950 = vmatpush.bf16.msra.mxu0 %v3741
    %5951 = vmatpush.bf16.msra.mxu0 %v3737
    %5952 = vmatpush.bf16.msra.mxu0 %v3733
    %5953 = vmatpush.bf16.msra.mxu0 %v3729
    %5954 = vmatpush.bf16.msra.mxu0 %v3725
    %5955 = vmatmul.bf16.gmra.mxu0 %v967
    %v5956 = vpop.f32.mrf.mxu0
    %v5957 = vadd.f32 %v5944, %v5956
    %v5958 = vpop.f32.mrf.mxu0
    %5959 = vdwg.mxu0
    %5960 = vmatpush.bf16.msra.mxu0 %v3785
    %5961 = vmatpush.bf16.msra.mxu0 %v3781
    %5962 = vmatpush.bf16.msra.mxu0 %v3777
    %5963 = vmatpush.bf16.msra.mxu0 %v3773
    %5964 = vmatpush.bf16.msra.mxu0 %v3769
    %5965 = vmatpush.bf16.msra.mxu0 %v3765
    %5966 = vmatpush.bf16.msra.mxu0 %v3761
    %5967 = vmatpush.bf16.msra.mxu0 %v3757
    %5968 = vmatmul.bf16.gmra.mxu0 %v968
    %v5969 = vpop.f32.mrf.mxu0
    %v5970 = vadd.f32 %v5957, %v5969
    %v5971 = vpop.f32.mrf.mxu0
    %5972 = vdwg.mxu0
    %5973 = vmatpush.bf16.msra.mxu0 %v3817
    %5974 = vmatpush.bf16.msra.mxu0 %v3813
    %5975 = vmatpush.bf16.msra.mxu0 %v3809
    %5976 = vmatpush.bf16.msra.mxu0 %v3805
    %5977 = vmatpush.bf16.msra.mxu0 %v3801
    %5978 = vmatpush.bf16.msra.mxu0 %v3797
    %5979 = vmatpush.bf16.msra.mxu0 %v3793
    %5980 = vmatpush.bf16.msra.mxu0 %v3789
    %5981 = vmatmul.bf16.gmra.mxu0 %v969
    %v5982 = vpop.f32.mrf.mxu0
    %v5983 = vadd.f32 %v5970, %v5982
    %v5984 = vpop.f32.mrf.mxu0
    %5985 = vdwg.mxu0
    %5986 = vmatpush.bf16.msra.mxu0 %v3849
    %5987 = vmatpush.bf16.msra.mxu0 %v3845
    %5988 = vmatpush.bf16.msra.mxu0 %v3841
    %5989 = vmatpush.bf16.msra.mxu0 %v3837
    %5990 = vmatpush.bf16.msra.mxu0 %v3833
    %5991 = vmatpush.bf16.msra.mxu0 %v3829
    %5992 = vmatpush.bf16.msra.mxu0 %v3825
    %5993 = vmatpush.bf16.msra.mxu0 %v3821
    %5994 = vmatmul.bf16.gmra.mxu0 %v970
    %v5995 = vpop.f32.mrf.mxu0
    %v5996 = vadd.f32 %v5983, %v5995
    %v5997 = vpop.f32.mrf.mxu0
    %5998 = vdwg.mxu0
    %5999 = vmatpush.bf16.msra.mxu0 %v3881
    %6000 = vmatpush.bf16.msra.mxu0 %v3877
    %6001 = vmatpush.bf16.msra.mxu0 %v3873
    %6002 = vmatpush.bf16.msra.mxu0 %v3869
    %6003 = vmatpush.bf16.msra.mxu0 %v3865
    %6004 = vmatpush.bf16.msra.mxu0 %v3861
    %6005 = vmatpush.bf16.msra.mxu0 %v3857
    %6006 = vmatpush.bf16.msra.mxu0 %v3853
    %6007 = vmatmul.bf16.gmra.mxu0 %v971
    %v6008 = vpop.f32.mrf.mxu0
    %v6009 = vadd.f32 %v5996, %v6008
    %v6010 = vpop.f32.mrf.mxu0
    %6011 = vdwg.mxu0
    %6012 = vmatpush.bf16.msra.mxu0 %v3913
    %6013 = vmatpush.bf16.msra.mxu0 %v3909
    %6014 = vmatpush.bf16.msra.mxu0 %v3905
    %6015 = vmatpush.bf16.msra.mxu0 %v3901
    %6016 = vmatpush.bf16.msra.mxu0 %v3897
    %6017 = vmatpush.bf16.msra.mxu0 %v3893
    %6018 = vmatpush.bf16.msra.mxu0 %v3889
    %6019 = vmatpush.bf16.msra.mxu0 %v3885
    %6020 = vmatmul.bf16.gmra.mxu0 %v972
    %v6021 = vpop.f32.mrf.mxu0
    %v6022 = vadd.f32 %v6009, %v6021
    %v6023 = vpop.f32.mrf.mxu0
    %6024 = vdwg.mxu0
    %6025 = vmatpush.bf16.msra.mxu0 %v3945
    %6026 = vmatpush.bf16.msra.mxu0 %v3941
    %6027 = vmatpush.bf16.msra.mxu0 %v3937
    %6028 = vmatpush.bf16.msra.mxu0 %v3933
    %6029 = vmatpush.bf16.msra.mxu0 %v3929
    %6030 = vmatpush.bf16.msra.mxu0 %v3925
    %6031 = vmatpush.bf16.msra.mxu0 %v3921
    %6032 = vmatpush.bf16.msra.mxu0 %v3917
    %6033 = vmatmul.bf16.gmra.mxu0 %v973
    %v6034 = vpop.f32.mrf.mxu0
    %v6035 = vadd.f32 %v6022, %v6034
    %v6036 = vpop.f32.mrf.mxu0
    %6037 = vdwg.mxu0
    %6038 = vmatpush.bf16.msra.mxu0 %v3977
    %6039 = vmatpush.bf16.msra.mxu0 %v3973
    %6040 = vmatpush.bf16.msra.mxu0 %v3969
    %6041 = vmatpush.bf16.msra.mxu0 %v3965
    %6042 = vmatpush.bf16.msra.mxu0 %v3961
    %6043 = vmatpush.bf16.msra.mxu0 %v3957
    %6044 = vmatpush.bf16.msra.mxu0 %v3953
    %6045 = vmatpush.bf16.msra.mxu0 %v3949
    %6046 = vmatmul.bf16.gmra.mxu0 %v974
    %v6047 = vpop.f32.mrf.mxu0
    %v6048 = vadd.f32 %v6035, %v6047
    %v6049 = vpop.f32.mrf.mxu0
    %6050 = vdwg.mxu0
    %6051 = vmatpush.bf16.msra.mxu0 %v4009
    %6052 = vmatpush.bf16.msra.mxu0 %v4005
    %6053 = vmatpush.bf16.msra.mxu0 %v4001
    %6054 = vmatpush.bf16.msra.mxu0 %v3997
    %6055 = vmatpush.bf16.msra.mxu0 %v3993
    %6056 = vmatpush.bf16.msra.mxu0 %v3989
    %6057 = vmatpush.bf16.msra.mxu0 %v3985
    %6058 = vmatpush.bf16.msra.mxu0 %v3981
    %6059 = vmatmul.bf16.gmra.mxu0 %v975
    %v6060 = vpop.f32.mrf.mxu0
    %v6061 = vadd.f32 %v6048, %v6060
    %v6062 = vpop.f32.mrf.mxu0
    %6063 = vdwg.mxu0
    %6064 = vmatpush.bf16.msra.mxu0 %v4041
    %6065 = vmatpush.bf16.msra.mxu0 %v4037
    %6066 = vmatpush.bf16.msra.mxu0 %v4033
    %6067 = vmatpush.bf16.msra.mxu0 %v4029
    %6068 = vmatpush.bf16.msra.mxu0 %v4025
    %6069 = vmatpush.bf16.msra.mxu0 %v4021
    %6070 = vmatpush.bf16.msra.mxu0 %v4017
    %6071 = vmatpush.bf16.msra.mxu0 %v4013
    %6072 = vmatmul.bf16.gmra.mxu0 %v976
    %v6073 = vpop.f32.mrf.mxu0
    %v6074 = vadd.f32 %v6061, %v6073
    %v6075 = vpop.f32.mrf.mxu0
    %6076 = vdwg.mxu0
    %6077 = vmatpush.bf16.msra.mxu0 %v4073
    %6078 = vmatpush.bf16.msra.mxu0 %v4069
    %6079 = vmatpush.bf16.msra.mxu0 %v4065
    %6080 = vmatpush.bf16.msra.mxu0 %v4061
    %6081 = vmatpush.bf16.msra.mxu0 %v4057
    %6082 = vmatpush.bf16.msra.mxu0 %v4053
    %6083 = vmatpush.bf16.msra.mxu0 %v4049
    %6084 = vmatpush.bf16.msra.mxu0 %v4045
    %6085 = vmatmul.bf16.gmra.mxu0 %v977
    %v6086 = vpop.f32.mrf.mxu0
    %v6087 = vadd.f32 %v6074, %v6086
    %v6088 = vpop.f32.mrf.mxu0
    %6089 = vdwg.mxu0
    %v6090 = vmax.f32 %v5151, 0.0
    %v6091 = vmax.f32 %v5463, 0.0
    %v6092 = vmax.f32 %v5775, 0.0
    %v6093 = vmax.f32 %v6087, 0.0
    %v6094 = vpack.c.bf16 %v6090, %v6090
    %v6095 = vpack.c.bf16 %v6091, %v6091
    %v6096 = vpack.c.bf16 %v6092, %v6092
    %v6097 = vpack.c.bf16 %v6093, %v6093
    %v6098 = vld [vmem:[#allocation8] sm:$0xff]
    %v6099 = vld [vmem:[#allocation8 + $0x8] sm:$0xff]
    %v6100 = vld [vmem:[#allocation8 + $0x10] sm:$0xff]
    %v6101 = vld [vmem:[#allocation8 + $0x18] sm:$0xff]
    %v6102 = vld [vmem:[#allocation8 + $0x20] sm:$0xff]
    %v6103 = vld [vmem:[#allocation8 + $0x28] sm:$0xff]
    %v6104 = vld [vmem:[#allocation8 + $0x30] sm:$0xff]
    %v6105 = vld [vmem:[#allocation8 + $0x38] sm:$0xff]
    %v6106 = vld [vmem:[#allocation8 + $0x40] sm:$0xff]
    %v6107 = vld [vmem:[#allocation8 + $0x48] sm:$0xff]
    %v6108 = vld [vmem:[#allocation8 + $0x50] sm:$0xff]
    %v6109 = vld [vmem:[#allocation8 + $0x58] sm:$0xff]
    %v6110 = vld [vmem:[#allocation8 + $0x60] sm:$0xff]
    %v6111 = vld [vmem:[#allocation8 + $0x68] sm:$0xff]
    %v6112 = vld [vmem:[#allocation8 + $0x70] sm:$0xff]
    %v6113 = vld [vmem:[#allocation8 + $0x78] sm:$0xff]
    %v6114 = vld [vmem:[#allocation8 + $0x80] sm:$0xff]
    %v6115 = vld [vmem:[#allocation8 + $0x88] sm:$0xff]
    %v6116 = vld [vmem:[#allocation8 + $0x90] sm:$0xff]
    %v6117 = vld [vmem:[#allocation8 + $0x98] sm:$0xff]
    %v6118 = vld [vmem:[#allocation8 + $0xa0] sm:$0xff]
    %v6119 = vld [vmem:[#allocation8 + $0xa8] sm:$0xff]
    %v6120 = vld [vmem:[#allocation8 + $0xb0] sm:$0xff]
    %v6121 = vld [vmem:[#allocation8 + $0xb8] sm:$0xff]
    %v6122 = vld [vmem:[#allocation8 + $0xc0] sm:$0xff]
    %v6123 = vld [vmem:[#allocation8 + $0xc8] sm:$0xff]
    %v6124 = vld [vmem:[#allocation8 + $0xd0] sm:$0xff]
    %v6125 = vld [vmem:[#allocation8 + $0xd8] sm:$0xff]
    %v6126 = vld [vmem:[#allocation8 + $0xe0] sm:$0xff]
    %v6127 = vld [vmem:[#allocation8 + $0xe8] sm:$0xff]
    %v6128 = vld [vmem:[#allocation8 + $0xf0] sm:$0xff]
    %v6129 = vld [vmem:[#allocation8 + $0xf8] sm:$0xff]
    %v6130 = vld [vmem:[#allocation8 + $0x100] sm:$0xff]
    %v6131 = vld [vmem:[#allocation8 + $0x108] sm:$0xff]
    %v6132 = vld [vmem:[#allocation8 + $0x110] sm:$0xff]
    %v6133 = vld [vmem:[#allocation8 + $0x118] sm:$0xff]
    %v6134 = vld [vmem:[#allocation8 + $0x120] sm:$0xff]
    %v6135 = vld [vmem:[#allocation8 + $0x128] sm:$0xff]
    %v6136 = vld [vmem:[#allocation8 + $0x130] sm:$0xff]
    %v6137 = vld [vmem:[#allocation8 + $0x138] sm:$0xff]
    %v6138 = vld [vmem:[#allocation8 + $0x140] sm:$0xff]
    %v6139 = vld [vmem:[#allocation8 + $0x148] sm:$0xff]
    %v6140 = vld [vmem:[#allocation8 + $0x150] sm:$0xff]
    %v6141 = vld [vmem:[#allocation8 + $0x158] sm:$0xff]
    %v6142 = vld [vmem:[#allocation8 + $0x160] sm:$0xff]
    %v6143 = vld [vmem:[#allocation8 + $0x168] sm:$0xff]
    %v6144 = vld [vmem:[#allocation8 + $0x170] sm:$0xff]
    %v6145 = vld [vmem:[#allocation8 + $0x178] sm:$0xff]
    %v6146 = vld [vmem:[#allocation8 + $0x180] sm:$0xff]
    %v6147 = vld [vmem:[#allocation8 + $0x188] sm:$0xff]
    %v6148 = vld [vmem:[#allocation8 + $0x190] sm:$0xff]
    %v6149 = vld [vmem:[#allocation8 + $0x198] sm:$0xff]
    %v6150 = vld [vmem:[#allocation8 + $0x1a0] sm:$0xff]
    %v6151 = vld [vmem:[#allocation8 + $0x1a8] sm:$0xff]
    %v6152 = vld [vmem:[#allocation8 + $0x1b0] sm:$0xff]
    %v6153 = vld [vmem:[#allocation8 + $0x1b8] sm:$0xff]
    %v6154 = vld [vmem:[#allocation8 + $0x1c0] sm:$0xff]
    %v6155 = vld [vmem:[#allocation8 + $0x1c8] sm:$0xff]
    %v6156 = vld [vmem:[#allocation8 + $0x1d0] sm:$0xff]
    %v6157 = vld [vmem:[#allocation8 + $0x1d8] sm:$0xff]
    %v6158 = vld [vmem:[#allocation8 + $0x1e0] sm:$0xff]
    %v6159 = vld [vmem:[#allocation8 + $0x1e8] sm:$0xff]
    %v6160 = vld [vmem:[#allocation8 + $0x1f0] sm:$0xff]
    %v6161 = vld [vmem:[#allocation8 + $0x1f8] sm:$0xff]
    %v6162 = vld [vmem:[#allocation8 + $0x200] sm:$0xff]
    %v6163 = vld [vmem:[#allocation8 + $0x208] sm:$0xff]
    %v6164 = vld [vmem:[#allocation8 + $0x210] sm:$0xff]
    %v6165 = vld [vmem:[#allocation8 + $0x218] sm:$0xff]
    %v6166 = vld [vmem:[#allocation8 + $0x220] sm:$0xff]
    %v6167 = vld [vmem:[#allocation8 + $0x228] sm:$0xff]
    %v6168 = vld [vmem:[#allocation8 + $0x230] sm:$0xff]
    %v6169 = vld [vmem:[#allocation8 + $0x238] sm:$0xff]
    %v6170 = vld [vmem:[#allocation8 + $0x240] sm:$0xff]
    %v6171 = vld [vmem:[#allocation8 + $0x248] sm:$0xff]
    %v6172 = vld [vmem:[#allocation8 + $0x250] sm:$0xff]
    %v6173 = vld [vmem:[#allocation8 + $0x258] sm:$0xff]
    %v6174 = vld [vmem:[#allocation8 + $0x260] sm:$0xff]
    %v6175 = vld [vmem:[#allocation8 + $0x268] sm:$0xff]
    %v6176 = vld [vmem:[#allocation8 + $0x270] sm:$0xff]
    %v6177 = vld [vmem:[#allocation8 + $0x278] sm:$0xff]
    %v6178 = vld [vmem:[#allocation8 + $0x280] sm:$0xff]
    %v6179 = vld [vmem:[#allocation8 + $0x288] sm:$0xff]
    %v6180 = vld [vmem:[#allocation8 + $0x290] sm:$0xff]
    %v6181 = vld [vmem:[#allocation8 + $0x298] sm:$0xff]
    %v6182 = vld [vmem:[#allocation8 + $0x2a0] sm:$0xff]
    %v6183 = vld [vmem:[#allocation8 + $0x2a8] sm:$0xff]
    %v6184 = vld [vmem:[#allocation8 + $0x2b0] sm:$0xff]
    %v6185 = vld [vmem:[#allocation8 + $0x2b8] sm:$0xff]
    %v6186 = vld [vmem:[#allocation8 + $0x2c0] sm:$0xff]
    %v6187 = vld [vmem:[#allocation8 + $0x2c8] sm:$0xff]
    %v6188 = vld [vmem:[#allocation8 + $0x2d0] sm:$0xff]
    %v6189 = vld [vmem:[#allocation8 + $0x2d8] sm:$0xff]
    %v6190 = vld [vmem:[#allocation8 + $0x2e0] sm:$0xff]
    %v6191 = vld [vmem:[#allocation8 + $0x2e8] sm:$0xff]
    %v6192 = vld [vmem:[#allocation8 + $0x2f0] sm:$0xff]
    %v6193 = vld [vmem:[#allocation8 + $0x2f8] sm:$0xff]
    %v6194 = vld [vmem:[#allocation8 + $0x300] sm:$0xff]
    %v6195 = vld [vmem:[#allocation8 + $0x308] sm:$0xff]
    %v6196 = vld [vmem:[#allocation8 + $0x310] sm:$0xff]
    %v6197 = vld [vmem:[#allocation8 + $0x318] sm:$0xff]
    %v6198 = vld [vmem:[#allocation8 + $0x320] sm:$0xff]
    %v6199 = vld [vmem:[#allocation8 + $0x328] sm:$0xff]
    %v6200 = vld [vmem:[#allocation8 + $0x330] sm:$0xff]
    %v6201 = vld [vmem:[#allocation8 + $0x338] sm:$0xff]
    %v6202 = vld [vmem:[#allocation8 + $0x340] sm:$0xff]
    %v6203 = vld [vmem:[#allocation8 + $0x348] sm:$0xff]
    %v6204 = vld [vmem:[#allocation8 + $0x350] sm:$0xff]
    %v6205 = vld [vmem:[#allocation8 + $0x358] sm:$0xff]
    %v6206 = vld [vmem:[#allocation8 + $0x360] sm:$0xff]
    %v6207 = vld [vmem:[#allocation8 + $0x368] sm:$0xff]
    %v6208 = vld [vmem:[#allocation8 + $0x370] sm:$0xff]
    %v6209 = vld [vmem:[#allocation8 + $0x378] sm:$0xff]
    %v6210 = vld [vmem:[#allocation8 + $0x380] sm:$0xff]
    %v6211 = vld [vmem:[#allocation8 + $0x388] sm:$0xff]
    %v6212 = vld [vmem:[#allocation8 + $0x390] sm:$0xff]
    %v6213 = vld [vmem:[#allocation8 + $0x398] sm:$0xff]
    %v6214 = vld [vmem:[#allocation8 + $0x3a0] sm:$0xff]
    %v6215 = vld [vmem:[#allocation8 + $0x3a8] sm:$0xff]
    %v6216 = vld [vmem:[#allocation8 + $0x3b0] sm:$0xff]
    %v6217 = vld [vmem:[#allocation8 + $0x3b8] sm:$0xff]
    %v6218 = vld [vmem:[#allocation8 + $0x3c0] sm:$0xff]
    %v6219 = vld [vmem:[#allocation8 + $0x3c8] sm:$0xff]
    %v6220 = vld [vmem:[#allocation8 + $0x3d0] sm:$0xff]
    %v6221 = vld [vmem:[#allocation8 + $0x3d8] sm:$0xff]
    %v6222 = vld [vmem:[#allocation8 + $0x3e0] sm:$0xff]
    %v6223 = vld [vmem:[#allocation8 + $0x3e8] sm:$0xff]
    %v6224 = vld [vmem:[#allocation8 + $0x3f0] sm:$0xff]
    %v6225 = vld [vmem:[#allocation8 + $0x3f8] sm:$0xff]
    %v6226 = vld [vmem:[#allocation10] sm:$0xf]
    %v6228 = vperm.slane %v6226, 0
    %v6229 = vperm.slane %v6226, 1
    %v6230 = vperm.slane %v6226, 2
    %v6231 = vperm.slane %v6226, 3
    %v6364 = vunpack.c.l.b16 %v6098
    %v6365 = vunpack.c.h.b16 %v6098
    %v6366 = vunpack.c.l.b16 %v6099
    %v6367 = vunpack.c.h.b16 %v6099
    %v6368 = vunpack.c.l.b16 %v6100
    %v6369 = vunpack.c.h.b16 %v6100
    %v6370 = vunpack.c.l.b16 %v6101
    %v6371 = vunpack.c.h.b16 %v6101
    %v6372 = vunpack.c.l.b16 %v6102
    %v6373 = vunpack.c.h.b16 %v6102
    %v6374 = vunpack.c.l.b16 %v6103
    %v6375 = vunpack.c.h.b16 %v6103
    %v6376 = vunpack.c.l.b16 %v6104
    %v6377 = vunpack.c.h.b16 %v6104
    %v6378 = vunpack.c.l.b16 %v6105
    %v6379 = vunpack.c.h.b16 %v6105
    %v6380 = vunpack.c.l.b16 %v6106
    %v6381 = vunpack.c.h.b16 %v6106
    %v6382 = vunpack.c.l.b16 %v6107
    %v6383 = vunpack.c.h.b16 %v6107
    %v6384 = vunpack.c.l.b16 %v6108
    %v6385 = vunpack.c.h.b16 %v6108
    %v6386 = vunpack.c.l.b16 %v6109
    %v6387 = vunpack.c.h.b16 %v6109
    %v6388 = vunpack.c.l.b16 %v6110
    %v6389 = vunpack.c.h.b16 %v6110
    %v6390 = vunpack.c.l.b16 %v6111
    %v6391 = vunpack.c.h.b16 %v6111
    %v6392 = vunpack.c.l.b16 %v6112
    %v6393 = vunpack.c.h.b16 %v6112
    %v6394 = vunpack.c.l.b16 %v6113
    %v6395 = vunpack.c.h.b16 %v6113
    %v6396 = vunpack.c.l.b16 %v6114
    %v6397 = vunpack.c.h.b16 %v6114
    %v6398 = vunpack.c.l.b16 %v6115
    %v6399 = vunpack.c.h.b16 %v6115
    %v6400 = vunpack.c.l.b16 %v6116
    %v6401 = vunpack.c.h.b16 %v6116
    %v6402 = vunpack.c.l.b16 %v6117
    %v6403 = vunpack.c.h.b16 %v6117
    %v6404 = vunpack.c.l.b16 %v6118
    %v6405 = vunpack.c.h.b16 %v6118
    %v6406 = vunpack.c.l.b16 %v6119
    %v6407 = vunpack.c.h.b16 %v6119
    %v6408 = vunpack.c.l.b16 %v6120
    %v6409 = vunpack.c.h.b16 %v6120
    %v6410 = vunpack.c.l.b16 %v6121
    %v6411 = vunpack.c.h.b16 %v6121
    %v6412 = vunpack.c.l.b16 %v6122
    %v6413 = vunpack.c.h.b16 %v6122
    %v6414 = vunpack.c.l.b16 %v6123
    %v6415 = vunpack.c.h.b16 %v6123
    %v6416 = vunpack.c.l.b16 %v6124
    %v6417 = vunpack.c.h.b16 %v6124
    %v6418 = vunpack.c.l.b16 %v6125
    %v6419 = vunpack.c.h.b16 %v6125
    %v6420 = vunpack.c.l.b16 %v6126
    %v6421 = vunpack.c.h.b16 %v6126
    %v6422 = vunpack.c.l.b16 %v6127
    %v6423 = vunpack.c.h.b16 %v6127
    %v6424 = vunpack.c.l.b16 %v6128
    %v6425 = vunpack.c.h.b16 %v6128
    %v6426 = vunpack.c.l.b16 %v6129
    %v6427 = vunpack.c.h.b16 %v6129
    %v6428 = vunpack.c.l.b16 %v6130
    %v6429 = vunpack.c.h.b16 %v6130
    %v6430 = vunpack.c.l.b16 %v6131
    %v6431 = vunpack.c.h.b16 %v6131
    %v6432 = vunpack.c.l.b16 %v6132
    %v6433 = vunpack.c.h.b16 %v6132
    %v6434 = vunpack.c.l.b16 %v6133
    %v6435 = vunpack.c.h.b16 %v6133
    %v6436 = vunpack.c.l.b16 %v6134
    %v6437 = vunpack.c.h.b16 %v6134
    %v6438 = vunpack.c.l.b16 %v6135
    %v6439 = vunpack.c.h.b16 %v6135
    %v6440 = vunpack.c.l.b16 %v6136
    %v6441 = vunpack.c.h.b16 %v6136
    %v6442 = vunpack.c.l.b16 %v6137
    %v6443 = vunpack.c.h.b16 %v6137
    %v6444 = vunpack.c.l.b16 %v6138
    %v6445 = vunpack.c.h.b16 %v6138
    %v6446 = vunpack.c.l.b16 %v6139
    %v6447 = vunpack.c.h.b16 %v6139
    %v6448 = vunpack.c.l.b16 %v6140
    %v6449 = vunpack.c.h.b16 %v6140
    %v6450 = vunpack.c.l.b16 %v6141
    %v6451 = vunpack.c.h.b16 %v6141
    %v6452 = vunpack.c.l.b16 %v6142
    %v6453 = vunpack.c.h.b16 %v6142
    %v6454 = vunpack.c.l.b16 %v6143
    %v6455 = vunpack.c.h.b16 %v6143
    %v6456 = vunpack.c.l.b16 %v6144
    %v6457 = vunpack.c.h.b16 %v6144
    %v6458 = vunpack.c.l.b16 %v6145
    %v6459 = vunpack.c.h.b16 %v6145
    %v6460 = vunpack.c.l.b16 %v6146
    %v6461 = vunpack.c.h.b16 %v6146
    %v6462 = vunpack.c.l.b16 %v6147
    %v6463 = vunpack.c.h.b16 %v6147
    %v6464 = vunpack.c.l.b16 %v6148
    %v6465 = vunpack.c.h.b16 %v6148
    %v6466 = vunpack.c.l.b16 %v6149
    %v6467 = vunpack.c.h.b16 %v6149
    %v6468 = vunpack.c.l.b16 %v6150
    %v6469 = vunpack.c.h.b16 %v6150
    %v6470 = vunpack.c.l.b16 %v6151
    %v6471 = vunpack.c.h.b16 %v6151
    %v6472 = vunpack.c.l.b16 %v6152
    %v6473 = vunpack.c.h.b16 %v6152
    %v6474 = vunpack.c.l.b16 %v6153
    %v6475 = vunpack.c.h.b16 %v6153
    %v6476 = vunpack.c.l.b16 %v6154
    %v6477 = vunpack.c.h.b16 %v6154
    %v6478 = vunpack.c.l.b16 %v6155
    %v6479 = vunpack.c.h.b16 %v6155
    %v6480 = vunpack.c.l.b16 %v6156
    %v6481 = vunpack.c.h.b16 %v6156
    %v6482 = vunpack.c.l.b16 %v6157
    %v6483 = vunpack.c.h.b16 %v6157
    %v6484 = vunpack.c.l.b16 %v6158
    %v6485 = vunpack.c.h.b16 %v6158
    %v6486 = vunpack.c.l.b16 %v6159
    %v6487 = vunpack.c.h.b16 %v6159
    %v6488 = vunpack.c.l.b16 %v6160
    %v6489 = vunpack.c.h.b16 %v6160
    %v6490 = vunpack.c.l.b16 %v6161
    %v6491 = vunpack.c.h.b16 %v6161
    %v6492 = vunpack.c.l.b16 %v6162
    %v6493 = vunpack.c.h.b16 %v6162
    %v6494 = vunpack.c.l.b16 %v6163
    %v6495 = vunpack.c.h.b16 %v6163
    %v6496 = vunpack.c.l.b16 %v6164
    %v6497 = vunpack.c.h.b16 %v6164
    %v6498 = vunpack.c.l.b16 %v6165
    %v6499 = vunpack.c.h.b16 %v6165
    %v6500 = vunpack.c.l.b16 %v6166
    %v6501 = vunpack.c.h.b16 %v6166
    %v6502 = vunpack.c.l.b16 %v6167
    %v6503 = vunpack.c.h.b16 %v6167
    %v6504 = vunpack.c.l.b16 %v6168
    %v6505 = vunpack.c.h.b16 %v6168
    %v6506 = vunpack.c.l.b16 %v6169
    %v6507 = vunpack.c.h.b16 %v6169
    %v6508 = vunpack.c.l.b16 %v6170
    %v6509 = vunpack.c.h.b16 %v6170
    %v6510 = vunpack.c.l.b16 %v6171
    %v6511 = vunpack.c.h.b16 %v6171
    %v6512 = vunpack.c.l.b16 %v6172
    %v6513 = vunpack.c.h.b16 %v6172
    %v6514 = vunpack.c.l.b16 %v6173
    %v6515 = vunpack.c.h.b16 %v6173
    %v6516 = vunpack.c.l.b16 %v6174
    %v6517 = vunpack.c.h.b16 %v6174
    %v6518 = vunpack.c.l.b16 %v6175
    %v6519 = vunpack.c.h.b16 %v6175
    %v6520 = vunpack.c.l.b16 %v6176
    %v6521 = vunpack.c.h.b16 %v6176
    %v6522 = vunpack.c.l.b16 %v6177
    %v6523 = vunpack.c.h.b16 %v6177
    %v6524 = vunpack.c.l.b16 %v6178
    %v6525 = vunpack.c.h.b16 %v6178
    %v6526 = vunpack.c.l.b16 %v6179
    %v6527 = vunpack.c.h.b16 %v6179
    %v6528 = vunpack.c.l.b16 %v6180
    %v6529 = vunpack.c.h.b16 %v6180
    %v6530 = vunpack.c.l.b16 %v6181
    %v6531 = vunpack.c.h.b16 %v6181
    %v6532 = vunpack.c.l.b16 %v6182
    %v6533 = vunpack.c.h.b16 %v6182
    %v6534 = vunpack.c.l.b16 %v6183
    %v6535 = vunpack.c.h.b16 %v6183
    %v6536 = vunpack.c.l.b16 %v6184
    %v6537 = vunpack.c.h.b16 %v6184
    %v6538 = vunpack.c.l.b16 %v6185
    %v6539 = vunpack.c.h.b16 %v6185
    %v6540 = vunpack.c.l.b16 %v6186
    %v6541 = vunpack.c.h.b16 %v6186
    %v6542 = vunpack.c.l.b16 %v6187
    %v6543 = vunpack.c.h.b16 %v6187
    %v6544 = vunpack.c.l.b16 %v6188
    %v6545 = vunpack.c.h.b16 %v6188
    %v6546 = vunpack.c.l.b16 %v6189
    %v6547 = vunpack.c.h.b16 %v6189
    %v6548 = vunpack.c.l.b16 %v6190
    %v6549 = vunpack.c.h.b16 %v6190
    %v6550 = vunpack.c.l.b16 %v6191
    %v6551 = vunpack.c.h.b16 %v6191
    %v6552 = vunpack.c.l.b16 %v6192
    %v6553 = vunpack.c.h.b16 %v6192
    %v6554 = vunpack.c.l.b16 %v6193
    %v6555 = vunpack.c.h.b16 %v6193
    %v6556 = vunpack.c.l.b16 %v6194
    %v6557 = vunpack.c.h.b16 %v6194
    %v6558 = vunpack.c.l.b16 %v6195
    %v6559 = vunpack.c.h.b16 %v6195
    %v6560 = vunpack.c.l.b16 %v6196
    %v6561 = vunpack.c.h.b16 %v6196
    %v6562 = vunpack.c.l.b16 %v6197
    %v6563 = vunpack.c.h.b16 %v6197
    %v6564 = vunpack.c.l.b16 %v6198
    %v6565 = vunpack.c.h.b16 %v6198
    %v6566 = vunpack.c.l.b16 %v6199
    %v6567 = vunpack.c.h.b16 %v6199
    %v6568 = vunpack.c.l.b16 %v6200
    %v6569 = vunpack.c.h.b16 %v6200
    %v6570 = vunpack.c.l.b16 %v6201
    %v6571 = vunpack.c.h.b16 %v6201
    %v6572 = vunpack.c.l.b16 %v6202
    %v6573 = vunpack.c.h.b16 %v6202
    %v6574 = vunpack.c.l.b16 %v6203
    %v6575 = vunpack.c.h.b16 %v6203
    %v6576 = vunpack.c.l.b16 %v6204
    %v6577 = vunpack.c.h.b16 %v6204
    %v6578 = vunpack.c.l.b16 %v6205
    %v6579 = vunpack.c.h.b16 %v6205
    %v6580 = vunpack.c.l.b16 %v6206
    %v6581 = vunpack.c.h.b16 %v6206
    %v6582 = vunpack.c.l.b16 %v6207
    %v6583 = vunpack.c.h.b16 %v6207
    %v6584 = vunpack.c.l.b16 %v6208
    %v6585 = vunpack.c.h.b16 %v6208
    %v6586 = vunpack.c.l.b16 %v6209
    %v6587 = vunpack.c.h.b16 %v6209
    %v6588 = vunpack.c.l.b16 %v6210
    %v6589 = vunpack.c.h.b16 %v6210
    %v6590 = vunpack.c.l.b16 %v6211
    %v6591 = vunpack.c.h.b16 %v6211
    %v6592 = vunpack.c.l.b16 %v6212
    %v6593 = vunpack.c.h.b16 %v6212
    %v6594 = vunpack.c.l.b16 %v6213
    %v6595 = vunpack.c.h.b16 %v6213
    %v6596 = vunpack.c.l.b16 %v6214
    %v6597 = vunpack.c.h.b16 %v6214
    %v6598 = vunpack.c.l.b16 %v6215
    %v6599 = vunpack.c.h.b16 %v6215
    %v6600 = vunpack.c.l.b16 %v6216
    %v6601 = vunpack.c.h.b16 %v6216
    %v6602 = vunpack.c.l.b16 %v6217
    %v6603 = vunpack.c.h.b16 %v6217
    %v6604 = vunpack.c.l.b16 %v6218
    %v6605 = vunpack.c.h.b16 %v6218
    %v6606 = vunpack.c.l.b16 %v6219
    %v6607 = vunpack.c.h.b16 %v6219
    %v6608 = vunpack.c.l.b16 %v6220
    %v6609 = vunpack.c.h.b16 %v6220
    %v6610 = vunpack.c.l.b16 %v6221
    %v6611 = vunpack.c.h.b16 %v6221
    %v6612 = vunpack.c.l.b16 %v6222
    %v6613 = vunpack.c.h.b16 %v6222
    %v6614 = vunpack.c.l.b16 %v6223
    %v6615 = vunpack.c.h.b16 %v6223
    %v6616 = vunpack.c.l.b16 %v6224
    %v6617 = vunpack.c.h.b16 %v6224
    %v6618 = vunpack.c.l.b16 %v6225
    %v6619 = vunpack.c.h.b16 %v6225
    %v6620 = vpack.c.b16 %v6368, %v6364
    %v6621 = vpack.c.b16 %v6369, %v6365
    %v6622 = vpack.c.b16 %v6370, %v6366
    %v6623 = vpack.c.b16 %v6371, %v6367
    %v6624 = vpack.c.b16 %v6376, %v6372
    %v6625 = vpack.c.b16 %v6377, %v6373
    %v6626 = vpack.c.b16 %v6378, %v6374
    %v6627 = vpack.c.b16 %v6379, %v6375
    %v6628 = vpack.c.b16 %v6384, %v6380
    %v6629 = vpack.c.b16 %v6385, %v6381
    %v6630 = vpack.c.b16 %v6386, %v6382
    %v6631 = vpack.c.b16 %v6387, %v6383
    %v6632 = vpack.c.b16 %v6392, %v6388
    %v6633 = vpack.c.b16 %v6393, %v6389
    %v6634 = vpack.c.b16 %v6394, %v6390
    %v6635 = vpack.c.b16 %v6395, %v6391
    %v6636 = vpack.c.b16 %v6400, %v6396
    %v6637 = vpack.c.b16 %v6401, %v6397
    %v6638 = vpack.c.b16 %v6402, %v6398
    %v6639 = vpack.c.b16 %v6403, %v6399
    %v6640 = vpack.c.b16 %v6408, %v6404
    %v6641 = vpack.c.b16 %v6409, %v6405
    %v6642 = vpack.c.b16 %v6410, %v6406
    %v6643 = vpack.c.b16 %v6411, %v6407
    %v6644 = vpack.c.b16 %v6416, %v6412
    %v6645 = vpack.c.b16 %v6417, %v6413
    %v6646 = vpack.c.b16 %v6418, %v6414
    %v6647 = vpack.c.b16 %v6419, %v6415
    %v6648 = vpack.c.b16 %v6424, %v6420
    %v6649 = vpack.c.b16 %v6425, %v6421
    %v6650 = vpack.c.b16 %v6426, %v6422
    %v6651 = vpack.c.b16 %v6427, %v6423
    %v6652 = vpack.c.b16 %v6432, %v6428
    %v6653 = vpack.c.b16 %v6433, %v6429
    %v6654 = vpack.c.b16 %v6434, %v6430
    %v6655 = vpack.c.b16 %v6435, %v6431
    %v6656 = vpack.c.b16 %v6440, %v6436
    %v6657 = vpack.c.b16 %v6441, %v6437
    %v6658 = vpack.c.b16 %v6442, %v6438
    %v6659 = vpack.c.b16 %v6443, %v6439
    %v6660 = vpack.c.b16 %v6448, %v6444
    %v6661 = vpack.c.b16 %v6449, %v6445
    %v6662 = vpack.c.b16 %v6450, %v6446
    %v6663 = vpack.c.b16 %v6451, %v6447
    %v6664 = vpack.c.b16 %v6456, %v6452
    %v6665 = vpack.c.b16 %v6457, %v6453
    %v6666 = vpack.c.b16 %v6458, %v6454
    %v6667 = vpack.c.b16 %v6459, %v6455
    %v6668 = vpack.c.b16 %v6464, %v6460
    %v6669 = vpack.c.b16 %v6465, %v6461
    %v6670 = vpack.c.b16 %v6466, %v6462
    %v6671 = vpack.c.b16 %v6467, %v6463
    %v6672 = vpack.c.b16 %v6472, %v6468
    %v6673 = vpack.c.b16 %v6473, %v6469
    %v6674 = vpack.c.b16 %v6474, %v6470
    %v6675 = vpack.c.b16 %v6475, %v6471
    %v6676 = vpack.c.b16 %v6480, %v6476
    %v6677 = vpack.c.b16 %v6481, %v6477
    %v6678 = vpack.c.b16 %v6482, %v6478
    %v6679 = vpack.c.b16 %v6483, %v6479
    %v6680 = vpack.c.b16 %v6488, %v6484
    %v6681 = vpack.c.b16 %v6489, %v6485
    %v6682 = vpack.c.b16 %v6490, %v6486
    %v6683 = vpack.c.b16 %v6491, %v6487
    %v6684 = vpack.c.b16 %v6496, %v6492
    %v6685 = vpack.c.b16 %v6497, %v6493
    %v6686 = vpack.c.b16 %v6498, %v6494
    %v6687 = vpack.c.b16 %v6499, %v6495
    %v6688 = vpack.c.b16 %v6504, %v6500
    %v6689 = vpack.c.b16 %v6505, %v6501
    %v6690 = vpack.c.b16 %v6506, %v6502
    %v6691 = vpack.c.b16 %v6507, %v6503
    %v6692 = vpack.c.b16 %v6512, %v6508
    %v6693 = vpack.c.b16 %v6513, %v6509
    %v6694 = vpack.c.b16 %v6514, %v6510
    %v6695 = vpack.c.b16 %v6515, %v6511
    %v6696 = vpack.c.b16 %v6520, %v6516
    %v6697 = vpack.c.b16 %v6521, %v6517
    %v6698 = vpack.c.b16 %v6522, %v6518
    %v6699 = vpack.c.b16 %v6523, %v6519
    %v6700 = vpack.c.b16 %v6528, %v6524
    %v6701 = vpack.c.b16 %v6529, %v6525
    %v6702 = vpack.c.b16 %v6530, %v6526
    %v6703 = vpack.c.b16 %v6531, %v6527
    %v6704 = vpack.c.b16 %v6536, %v6532
    %v6705 = vpack.c.b16 %v6537, %v6533
    %v6706 = vpack.c.b16 %v6538, %v6534
    %v6707 = vpack.c.b16 %v6539, %v6535
    %v6708 = vpack.c.b16 %v6544, %v6540
    %v6709 = vpack.c.b16 %v6545, %v6541
    %v6710 = vpack.c.b16 %v6546, %v6542
    %v6711 = vpack.c.b16 %v6547, %v6543
    %v6712 = vpack.c.b16 %v6552, %v6548
    %v6713 = vpack.c.b16 %v6553, %v6549
    %v6714 = vpack.c.b16 %v6554, %v6550
    %v6715 = vpack.c.b16 %v6555, %v6551
    %v6716 = vpack.c.b16 %v6560, %v6556
    %v6717 = vpack.c.b16 %v6561, %v6557
    %v6718 = vpack.c.b16 %v6562, %v6558
    %v6719 = vpack.c.b16 %v6563, %v6559
    %v6720 = vpack.c.b16 %v6568, %v6564
    %v6721 = vpack.c.b16 %v6569, %v6565
    %v6722 = vpack.c.b16 %v6570, %v6566
    %v6723 = vpack.c.b16 %v6571, %v6567
    %v6724 = vpack.c.b16 %v6576, %v6572
    %v6725 = vpack.c.b16 %v6577, %v6573
    %v6726 = vpack.c.b16 %v6578, %v6574
    %v6727 = vpack.c.b16 %v6579, %v6575
    %v6728 = vpack.c.b16 %v6584, %v6580
    %v6729 = vpack.c.b16 %v6585, %v6581
    %v6730 = vpack.c.b16 %v6586, %v6582
    %v6731 = vpack.c.b16 %v6587, %v6583
    %v6732 = vpack.c.b16 %v6592, %v6588
    %v6733 = vpack.c.b16 %v6593, %v6589
    %v6734 = vpack.c.b16 %v6594, %v6590
    %v6735 = vpack.c.b16 %v6595, %v6591
    %v6736 = vpack.c.b16 %v6600, %v6596
    %v6737 = vpack.c.b16 %v6601, %v6597
    %v6738 = vpack.c.b16 %v6602, %v6598
    %v6739 = vpack.c.b16 %v6603, %v6599
    %v6740 = vpack.c.b16 %v6608, %v6604
    %v6741 = vpack.c.b16 %v6609, %v6605
    %v6742 = vpack.c.b16 %v6610, %v6606
    %v6743 = vpack.c.b16 %v6611, %v6607
    %v6744 = vpack.c.b16 %v6616, %v6612
    %v6745 = vpack.c.b16 %v6617, %v6613
    %v6746 = vpack.c.b16 %v6618, %v6614
    %v6747 = vpack.c.b16 %v6619, %v6615
    %6876 = vmatpush.bf16.msra.mxu0 %v6648
    %6877 = vmatpush.bf16.msra.mxu0 %v6644
    %6878 = vmatpush.bf16.msra.mxu0 %v6640
    %6879 = vmatpush.bf16.msra.mxu0 %v6636
    %6880 = vmatpush.bf16.msra.mxu0 %v6632
    %6881 = vmatpush.bf16.msra.mxu0 %v6628
    %6882 = vmatpush.bf16.msra.mxu0 %v6624
    %6883 = vmatpush.bf16.msra.mxu0 %v6620
    %6884 = vmatmul.bf16.gmra.mxu0 %v6094
    %v6885 = vpop.f32.mrf.mxu0
    %v6886 = vadd.f32 %v6228, %v6885
    %v6887 = vpop.f32.mrf.mxu0
    %6888 = vdwg.mxu0
    %6889 = vmatpush.bf16.msra.mxu0 %v6680
    %6890 = vmatpush.bf16.msra.mxu0 %v6676
    %6891 = vmatpush.bf16.msra.mxu0 %v6672
    %6892 = vmatpush.bf16.msra.mxu0 %v6668
    %6893 = vmatpush.bf16.msra.mxu0 %v6664
    %6894 = vmatpush.bf16.msra.mxu0 %v6660
    %6895 = vmatpush.bf16.msra.mxu0 %v6656
    %6896 = vmatpush.bf16.msra.mxu0 %v6652
    %6897 = vmatmul.bf16.gmra.mxu0 %v6095
    %v6898 = vpop.f32.mrf.mxu0
    %v6899 = vadd.f32 %v6886, %v6898
    %v6900 = vpop.f32.mrf.mxu0
    %6901 = vdwg.mxu0
    %6902 = vmatpush.bf16.msra.mxu0 %v6712
    %6903 = vmatpush.bf16.msra.mxu0 %v6708
    %6904 = vmatpush.bf16.msra.mxu0 %v6704
    %6905 = vmatpush.bf16.msra.mxu0 %v6700
    %6906 = vmatpush.bf16.msra.mxu0 %v6696
    %6907 = vmatpush.bf16.msra.mxu0 %v6692
    %6908 = vmatpush.bf16.msra.mxu0 %v6688
    %6909 = vmatpush.bf16.msra.mxu0 %v6684
    %6910 = vmatmul.bf16.gmra.mxu0 %v6096
    %v6911 = vpop.f32.mrf.mxu0
    %v6912 = vadd.f32 %v6899, %v6911
    %v6913 = vpop.f32.mrf.mxu0
    %6914 = vdwg.mxu0
    %6915 = vmatpush.bf16.msra.mxu0 %v6744
    %6916 = vmatpush.bf16.msra.mxu0 %v6740
    %6917 = vmatpush.bf16.msra.mxu0 %v6736
    %6918 = vmatpush.bf16.msra.mxu0 %v6732
    %6919 = vmatpush.bf16.msra.mxu0 %v6728
    %6920 = vmatpush.bf16.msra.mxu0 %v6724
    %6921 = vmatpush.bf16.msra.mxu0 %v6720
    %6922 = vmatpush.bf16.msra.mxu0 %v6716
    %6923 = vmatmul.bf16.gmra.mxu0 %v6097
    %v6924 = vpop.f32.mrf.mxu0
    %v6925 = vadd.f32 %v6912, %v6924
    %v6926 = vpop.f32.mrf.mxu0
    %6927 = vdwg.mxu0
    %6928 = vmatpush.bf16.msra.mxu0 %v6649
    %6929 = vmatpush.bf16.msra.mxu0 %v6645
    %6930 = vmatpush.bf16.msra.mxu0 %v6641
    %6931 = vmatpush.bf16.msra.mxu0 %v6637
    %6932 = vmatpush.bf16.msra.mxu0 %v6633
    %6933 = vmatpush.bf16.msra.mxu0 %v6629
    %6934 = vmatpush.bf16.msra.mxu0 %v6625
    %6935 = vmatpush.bf16.msra.mxu0 %v6621
    %6936 = vmatmul.bf16.gmra.mxu0 %v6094
    %v6937 = vpop.f32.mrf.mxu0
    %v6938 = vadd.f32 %v6229, %v6937
    %v6939 = vpop.f32.mrf.mxu0
    %6940 = vdwg.mxu0
    %6941 = vmatpush.bf16.msra.mxu0 %v6681
    %6942 = vmatpush.bf16.msra.mxu0 %v6677
    %6943 = vmatpush.bf16.msra.mxu0 %v6673
    %6944 = vmatpush.bf16.msra.mxu0 %v6669
    %6945 = vmatpush.bf16.msra.mxu0 %v6665
    %6946 = vmatpush.bf16.msra.mxu0 %v6661
    %6947 = vmatpush.bf16.msra.mxu0 %v6657
    %6948 = vmatpush.bf16.msra.mxu0 %v6653
    %6949 = vmatmul.bf16.gmra.mxu0 %v6095
    %v6950 = vpop.f32.mrf.mxu0
    %v6951 = vadd.f32 %v6938, %v6950
    %v6952 = vpop.f32.mrf.mxu0
    %6953 = vdwg.mxu0
    %6954 = vmatpush.bf16.msra.mxu0 %v6713
    %6955 = vmatpush.bf16.msra.mxu0 %v6709
    %6956 = vmatpush.bf16.msra.mxu0 %v6705
    %6957 = vmatpush.bf16.msra.mxu0 %v6701
    %6958 = vmatpush.bf16.msra.mxu0 %v6697
    %6959 = vmatpush.bf16.msra.mxu0 %v6693
    %6960 = vmatpush.bf16.msra.mxu0 %v6689
    %6961 = vmatpush.bf16.msra.mxu0 %v6685
    %6962 = vmatmul.bf16.gmra.mxu0 %v6096
    %v6963 = vpop.f32.mrf.mxu0
    %v6964 = vadd.f32 %v6951, %v6963
    %v6965 = vpop.f32.mrf.mxu0
    %6966 = vdwg.mxu0
    %6967 = vmatpush.bf16.msra.mxu0 %v6745
    %6968 = vmatpush.bf16.msra.mxu0 %v6741
    %6969 = vmatpush.bf16.msra.mxu0 %v6737
    %6970 = vmatpush.bf16.msra.mxu0 %v6733
    %6971 = vmatpush.bf16.msra.mxu0 %v6729
    %6972 = vmatpush.bf16.msra.mxu0 %v6725
    %6973 = vmatpush.bf16.msra.mxu0 %v6721
    %6974 = vmatpush.bf16.msra.mxu0 %v6717
    %6975 = vmatmul.bf16.gmra.mxu0 %v6097
    %v6976 = vpop.f32.mrf.mxu0
    %v6977 = vadd.f32 %v6964, %v6976
    %v6978 = vpop.f32.mrf.mxu0
    %6979 = vdwg.mxu0
    %6980 = vmatpush.bf16.msra.mxu0 %v6650
    %6981 = vmatpush.bf16.msra.mxu0 %v6646
    %6982 = vmatpush.bf16.msra.mxu0 %v6642
    %6983 = vmatpush.bf16.msra.mxu0 %v6638
    %6984 = vmatpush.bf16.msra.mxu0 %v6634
    %6985 = vmatpush.bf16.msra.mxu0 %v6630
    %6986 = vmatpush.bf16.msra.mxu0 %v6626
    %6987 = vmatpush.bf16.msra.mxu0 %v6622
    %6988 = vmatmul.bf16.gmra.mxu0 %v6094
    %v6989 = vpop.f32.mrf.mxu0
    %v6990 = vadd.f32 %v6230, %v6989
    %v6991 = vpop.f32.mrf.mxu0
    %6992 = vdwg.mxu0
    %6993 = vmatpush.bf16.msra.mxu0 %v6682
    %6994 = vmatpush.bf16.msra.mxu0 %v6678
    %6995 = vmatpush.bf16.msra.mxu0 %v6674
    %6996 = vmatpush.bf16.msra.mxu0 %v6670
    %6997 = vmatpush.bf16.msra.mxu0 %v6666
    %6998 = vmatpush.bf16.msra.mxu0 %v6662
    %6999 = vmatpush.bf16.msra.mxu0 %v6658
    %7000 = vmatpush.bf16.msra.mxu0 %v6654
    %7001 = vmatmul.bf16.gmra.mxu0 %v6095
    %v7002 = vpop.f32.mrf.mxu0
    %v7003 = vadd.f32 %v6990, %v7002
    %v7004 = vpop.f32.mrf.mxu0
    %7005 = vdwg.mxu0
    %7006 = vmatpush.bf16.msra.mxu0 %v6714
    %7007 = vmatpush.bf16.msra.mxu0 %v6710
    %7008 = vmatpush.bf16.msra.mxu0 %v6706
    %7009 = vmatpush.bf16.msra.mxu0 %v6702
    %7010 = vmatpush.bf16.msra.mxu0 %v6698
    %7011 = vmatpush.bf16.msra.mxu0 %v6694
    %7012 = vmatpush.bf16.msra.mxu0 %v6690
    %7013 = vmatpush.bf16.msra.mxu0 %v6686
    %7014 = vmatmul.bf16.gmra.mxu0 %v6096
    %v7015 = vpop.f32.mrf.mxu0
    %v7016 = vadd.f32 %v7003, %v7015
    %v7017 = vpop.f32.mrf.mxu0
    %7018 = vdwg.mxu0
    %7019 = vmatpush.bf16.msra.mxu0 %v6746
    %7020 = vmatpush.bf16.msra.mxu0 %v6742
    %7021 = vmatpush.bf16.msra.mxu0 %v6738
    %7022 = vmatpush.bf16.msra.mxu0 %v6734
    %7023 = vmatpush.bf16.msra.mxu0 %v6730
    %7024 = vmatpush.bf16.msra.mxu0 %v6726
    %7025 = vmatpush.bf16.msra.mxu0 %v6722
    %7026 = vmatpush.bf16.msra.mxu0 %v6718
    %7027 = vmatmul.bf16.gmra.mxu0 %v6097
    %v7028 = vpop.f32.mrf.mxu0
    %v7029 = vadd.f32 %v7016, %v7028
    %v7030 = vpop.f32.mrf.mxu0
    %7031 = vdwg.mxu0
    %7032 = vmatpush.bf16.msra.mxu0 %v6651
    %7033 = vmatpush.bf16.msra.mxu0 %v6647
    %7034 = vmatpush.bf16.msra.mxu0 %v6643
    %7035 = vmatpush.bf16.msra.mxu0 %v6639
    %7036 = vmatpush.bf16.msra.mxu0 %v6635
    %7037 = vmatpush.bf16.msra.mxu0 %v6631
    %7038 = vmatpush.bf16.msra.mxu0 %v6627
    %7039 = vmatpush.bf16.msra.mxu0 %v6623
    %7040 = vmatmul.bf16.gmra.mxu0 %v6094
    %v7041 = vpop.f32.mrf.mxu0
    %v7042 = vadd.f32 %v6231, %v7041
    %v7043 = vpop.f32.mrf.mxu0
    %7044 = vdwg.mxu0
    %7045 = vmatpush.bf16.msra.mxu0 %v6683
    %7046 = vmatpush.bf16.msra.mxu0 %v6679
    %7047 = vmatpush.bf16.msra.mxu0 %v6675
    %7048 = vmatpush.bf16.msra.mxu0 %v6671
    %7049 = vmatpush.bf16.msra.mxu0 %v6667
    %7050 = vmatpush.bf16.msra.mxu0 %v6663
    %7051 = vmatpush.bf16.msra.mxu0 %v6659
    %7052 = vmatpush.bf16.msra.mxu0 %v6655
    %7053 = vmatmul.bf16.gmra.mxu0 %v6095
    %v7054 = vpop.f32.mrf.mxu0
    %v7055 = vadd.f32 %v7042, %v7054
    %v7056 = vpop.f32.mrf.mxu0
    %7057 = vdwg.mxu0
    %7058 = vmatpush.bf16.msra.mxu0 %v6715
    %7059 = vmatpush.bf16.msra.mxu0 %v6711
    %7060 = vmatpush.bf16.msra.mxu0 %v6707
    %7061 = vmatpush.bf16.msra.mxu0 %v6703
    %7062 = vmatpush.bf16.msra.mxu0 %v6699
    %7063 = vmatpush.bf16.msra.mxu0 %v6695
    %7064 = vmatpush.bf16.msra.mxu0 %v6691
    %7065 = vmatpush.bf16.msra.mxu0 %v6687
    %7066 = vmatmul.bf16.gmra.mxu0 %v6096
    %v7067 = vpop.f32.mrf.mxu0
    %v7068 = vadd.f32 %v7055, %v7067
    %v7069 = vpop.f32.mrf.mxu0
    %7070 = vdwg.mxu0
    %7071 = vmatpush.bf16.msra.mxu0 %v6747
    %7072 = vmatpush.bf16.msra.mxu0 %v6743
    %7073 = vmatpush.bf16.msra.mxu0 %v6739
    %7074 = vmatpush.bf16.msra.mxu0 %v6735
    %7075 = vmatpush.bf16.msra.mxu0 %v6731
    %7076 = vmatpush.bf16.msra.mxu0 %v6727
    %7077 = vmatpush.bf16.msra.mxu0 %v6723
    %7078 = vmatpush.bf16.msra.mxu0 %v6719
    %7079 = vmatmul.bf16.gmra.mxu0 %v6097
    %v7080 = vpop.f32.mrf.mxu0
    %v7081 = vadd.f32 %v7068, %v7080
    %v7082 = vpop.f32.mrf.mxu0
    %7083 = vdwg.mxu0
    %v7084 = vmax.f32 %v6925, 0.0
    %v7085 = vmax.f32 %v6977, 0.0
    %v7086 = vmax.f32 %v7029, 0.0
    %v7087 = vmax.f32 %v7081, 0.0
    %v7088 = vpack.c.bf16 %v7084, %v7084
    %v7089 = vpack.c.bf16 %v7085, %v7085
    %v7090 = vpack.c.bf16 %v7086, %v7086
    %v7091 = vpack.c.bf16 %v7087, %v7087
    %v7092 = vld [vmem:[#allocation11] sm:$0xf]
    %v7093 = vld [vmem:[#allocation11 + $0x4] sm:$0xf]
    %v7094 = vld [vmem:[#allocation11 + $0x8] sm:$0xf]
    %v7095 = vld [vmem:[#allocation11 + $0xc] sm:$0xf]
    %v7096 = vld [vmem:[#allocation11 + $0x10] sm:$0xf]
    %v7097 = vld [vmem:[#allocation11 + $0x14] sm:$0xf]
    %v7098 = vld [vmem:[#allocation11 + $0x18] sm:$0xf]
    %v7099 = vld [vmem:[#allocation11 + $0x1c] sm:$0xf]
    %v7100 = vld [vmem:[#allocation11 + $0x20] sm:$0xf]
    %v7101 = vld [vmem:[#allocation11 + $0x24] sm:$0xf]
    %v7102 = vld [vmem:[#allocation11 + $0x28] sm:$0xf]
    %v7103 = vld [vmem:[#allocation11 + $0x2c] sm:$0xf]
    %v7104 = vld [vmem:[#allocation11 + $0x30] sm:$0xf]
    %v7105 = vld [vmem:[#allocation11 + $0x34] sm:$0xf]
    %v7106 = vld [vmem:[#allocation11 + $0x38] sm:$0xf]
    %v7107 = vld [vmem:[#allocation11 + $0x3c] sm:$0xf]
    %v7108 = vld [vmem:[#allocation11 + $0x40] sm:$0xf]
    %v7109 = vld [vmem:[#allocation11 + $0x44] sm:$0xf]
    %v7110 = vld [vmem:[#allocation11 + $0x48] sm:$0xf]
    %v7111 = vld [vmem:[#allocation11 + $0x4c] sm:$0xf]
    %v7112 = vld [vmem:[#allocation11 + $0x50] sm:$0xf]
    %v7113 = vld [vmem:[#allocation11 + $0x54] sm:$0xf]
    %v7114 = vld [vmem:[#allocation11 + $0x58] sm:$0xf]
    %v7115 = vld [vmem:[#allocation11 + $0x5c] sm:$0xf]
    %v7116 = vld [vmem:[#allocation11 + $0x60] sm:$0xf]
    %v7117 = vld [vmem:[#allocation11 + $0x64] sm:$0xf]
    %v7118 = vld [vmem:[#allocation11 + $0x68] sm:$0xf]
    %v7119 = vld [vmem:[#allocation11 + $0x6c] sm:$0xf]
    %v7120 = vld [vmem:[#allocation11 + $0x70] sm:$0xf]
    %v7121 = vld [vmem:[#allocation11 + $0x74] sm:$0xf]
    %v7122 = vld [vmem:[#allocation11 + $0x78] sm:$0xf]
    %v7123 = vld [vmem:[#allocation11 + $0x7c] sm:$0xf]
    %v7124 = vld [vmem:[#allocation11 + $0x80] sm:$0xf]
    %v7125 = vld [vmem:[#allocation11 + $0x84] sm:$0xf]
    %v7126 = vld [vmem:[#allocation11 + $0x88] sm:$0xf]
    %v7127 = vld [vmem:[#allocation11 + $0x8c] sm:$0xf]
    %v7128 = vld [vmem:[#allocation11 + $0x90] sm:$0xf]
    %v7129 = vld [vmem:[#allocation11 + $0x94] sm:$0xf]
    %v7130 = vld [vmem:[#allocation11 + $0x98] sm:$0xf]
    %v7131 = vld [vmem:[#allocation11 + $0x9c] sm:$0xf]
    %v7132 = vld [vmem:[#allocation11 + $0xa0] sm:$0xf]
    %v7133 = vld [vmem:[#allocation11 + $0xa4] sm:$0xf]
    %v7134 = vld [vmem:[#allocation11 + $0xa8] sm:$0xf]
    %v7135 = vld [vmem:[#allocation11 + $0xac] sm:$0xf]
    %v7136 = vld [vmem:[#allocation11 + $0xb0] sm:$0xf]
    %v7137 = vld [vmem:[#allocation11 + $0xb4] sm:$0xf]
    %v7138 = vld [vmem:[#allocation11 + $0xb8] sm:$0xf]
    %v7139 = vld [vmem:[#allocation11 + $0xbc] sm:$0xf]
    %v7140 = vld [vmem:[#allocation11 + $0xc0] sm:$0xf]
    %v7141 = vld [vmem:[#allocation11 + $0xc4] sm:$0xf]
    %v7142 = vld [vmem:[#allocation11 + $0xc8] sm:$0xf]
    %v7143 = vld [vmem:[#allocation11 + $0xcc] sm:$0xf]
    %v7144 = vld [vmem:[#allocation11 + $0xd0] sm:$0xf]
    %v7145 = vld [vmem:[#allocation11 + $0xd4] sm:$0xf]
    %v7146 = vld [vmem:[#allocation11 + $0xd8] sm:$0xf]
    %v7147 = vld [vmem:[#allocation11 + $0xdc] sm:$0xf]
    %v7148 = vld [vmem:[#allocation11 + $0xe0] sm:$0xf]
    %v7149 = vld [vmem:[#allocation11 + $0xe4] sm:$0xf]
    %v7150 = vld [vmem:[#allocation11 + $0xe8] sm:$0xf]
    %v7151 = vld [vmem:[#allocation11 + $0xec] sm:$0xf]
    %v7152 = vld [vmem:[#allocation11 + $0xf0] sm:$0xf]
    %v7153 = vld [vmem:[#allocation11 + $0xf4] sm:$0xf]
    %v7154 = vld [vmem:[#allocation11 + $0xf8] sm:$0xf]
    %v7155 = vld [vmem:[#allocation11 + $0xfc] sm:$0xf]
    %v7156 = vld [vmem:[#allocation13] sm:$0x1]
    %v7158 = vperm.slane %v7156, 0
    %v7224 = vunpack.c.l.b16 %v7092
    %v7225 = vunpack.c.l.b16 %v7093
    %v7226 = vunpack.c.l.b16 %v7094
    %v7227 = vunpack.c.l.b16 %v7095
    %v7228 = vunpack.c.l.b16 %v7096
    %v7229 = vunpack.c.l.b16 %v7097
    %v7230 = vunpack.c.l.b16 %v7098
    %v7231 = vunpack.c.l.b16 %v7099
    %v7232 = vunpack.c.l.b16 %v7100
    %v7233 = vunpack.c.l.b16 %v7101
    %v7234 = vunpack.c.l.b16 %v7102
    %v7235 = vunpack.c.l.b16 %v7103
    %v7236 = vunpack.c.l.b16 %v7104
    %v7237 = vunpack.c.l.b16 %v7105
    %v7238 = vunpack.c.l.b16 %v7106
    %v7239 = vunpack.c.l.b16 %v7107
    %v7240 = vunpack.c.l.b16 %v7108
    %v7241 = vunpack.c.l.b16 %v7109
    %v7242 = vunpack.c.l.b16 %v7110
    %v7243 = vunpack.c.l.b16 %v7111
    %v7244 = vunpack.c.l.b16 %v7112
    %v7245 = vunpack.c.l.b16 %v7113
    %v7246 = vunpack.c.l.b16 %v7114
    %v7247 = vunpack.c.l.b16 %v7115
    %v7248 = vunpack.c.l.b16 %v7116
    %v7249 = vunpack.c.l.b16 %v7117
    %v7250 = vunpack.c.l.b16 %v7118
    %v7251 = vunpack.c.l.b16 %v7119
    %v7252 = vunpack.c.l.b16 %v7120
    %v7253 = vunpack.c.l.b16 %v7121
    %v7254 = vunpack.c.l.b16 %v7122
    %v7255 = vunpack.c.l.b16 %v7123
    %v7256 = vunpack.c.l.b16 %v7124
    %v7257 = vunpack.c.l.b16 %v7125
    %v7258 = vunpack.c.l.b16 %v7126
    %v7259 = vunpack.c.l.b16 %v7127
    %v7260 = vunpack.c.l.b16 %v7128
    %v7261 = vunpack.c.l.b16 %v7129
    %v7262 = vunpack.c.l.b16 %v7130
    %v7263 = vunpack.c.l.b16 %v7131
    %v7264 = vunpack.c.l.b16 %v7132
    %v7265 = vunpack.c.l.b16 %v7133
    %v7266 = vunpack.c.l.b16 %v7134
    %v7267 = vunpack.c.l.b16 %v7135
    %v7268 = vunpack.c.l.b16 %v7136
    %v7269 = vunpack.c.l.b16 %v7137
    %v7270 = vunpack.c.l.b16 %v7138
    %v7271 = vunpack.c.l.b16 %v7139
    %v7272 = vunpack.c.l.b16 %v7140
    %v7273 = vunpack.c.l.b16 %v7141
    %v7274 = vunpack.c.l.b16 %v7142
    %v7275 = vunpack.c.l.b16 %v7143
    %v7276 = vunpack.c.l.b16 %v7144
    %v7277 = vunpack.c.l.b16 %v7145
    %v7278 = vunpack.c.l.b16 %v7146
    %v7279 = vunpack.c.l.b16 %v7147
    %v7280 = vunpack.c.l.b16 %v7148
    %v7281 = vunpack.c.l.b16 %v7149
    %v7282 = vunpack.c.l.b16 %v7150
    %v7283 = vunpack.c.l.b16 %v7151
    %v7284 = vunpack.c.l.b16 %v7152
    %v7285 = vunpack.c.l.b16 %v7153
    %v7286 = vunpack.c.l.b16 %v7154
    %v7287 = vunpack.c.l.b16 %v7155
    %v7288 = vpack.c.b16 %v7225, %v7224
    %v7289 = vpack.c.b16 %v7227, %v7226
    %v7290 = vpack.c.b16 %v7229, %v7228
    %v7291 = vpack.c.b16 %v7231, %v7230
    %v7292 = vpack.c.b16 %v7233, %v7232
    %v7293 = vpack.c.b16 %v7235, %v7234
    %v7294 = vpack.c.b16 %v7237, %v7236
    %v7295 = vpack.c.b16 %v7239, %v7238
    %v7296 = vpack.c.b16 %v7241, %v7240
    %v7297 = vpack.c.b16 %v7243, %v7242
    %v7298 = vpack.c.b16 %v7245, %v7244
    %v7299 = vpack.c.b16 %v7247, %v7246
    %v7300 = vpack.c.b16 %v7249, %v7248
    %v7301 = vpack.c.b16 %v7251, %v7250
    %v7302 = vpack.c.b16 %v7253, %v7252
    %v7303 = vpack.c.b16 %v7255, %v7254
    %v7304 = vpack.c.b16 %v7257, %v7256
    %v7305 = vpack.c.b16 %v7259, %v7258
    %v7306 = vpack.c.b16 %v7261, %v7260
    %v7307 = vpack.c.b16 %v7263, %v7262
    %v7308 = vpack.c.b16 %v7265, %v7264
    %v7309 = vpack.c.b16 %v7267, %v7266
    %v7310 = vpack.c.b16 %v7269, %v7268
    %v7311 = vpack.c.b16 %v7271, %v7270
    %v7312 = vpack.c.b16 %v7273, %v7272
    %v7313 = vpack.c.b16 %v7275, %v7274
    %v7314 = vpack.c.b16 %v7277, %v7276
    %v7315 = vpack.c.b16 %v7279, %v7278
    %v7316 = vpack.c.b16 %v7281, %v7280
    %v7317 = vpack.c.b16 %v7283, %v7282
    %v7318 = vpack.c.b16 %v7285, %v7284
    %v7319 = vpack.c.b16 %v7287, %v7286
    %7352 = vmatpush.bf16.msra.mxu0 %v7295
    %7353 = vmatpush.bf16.msra.mxu0 %v7294
    %7354 = vmatpush.bf16.msra.mxu0 %v7293
    %7355 = vmatpush.bf16.msra.mxu0 %v7292
    %7356 = vmatpush.bf16.msra.mxu0 %v7291
    %7357 = vmatpush.bf16.msra.mxu0 %v7290
    %7358 = vmatpush.bf16.msra.mxu0 %v7289
    %7359 = vmatpush.bf16.msra.mxu0 %v7288
    %7360 = vmatmul.bf16.gmra.mxu0 %v7088
    %v7361 = vpop.f32.mrf.mxu0
    %v7362 = vadd.f32 %v7158, %v7361
    %v7363 = vpop.f32.mrf.mxu0
    %7364 = vdwg.mxu0
    %7365 = vmatpush.bf16.msra.mxu0 %v7303
    %7366 = vmatpush.bf16.msra.mxu0 %v7302
    %7367 = vmatpush.bf16.msra.mxu0 %v7301
    %7368 = vmatpush.bf16.msra.mxu0 %v7300
    %7369 = vmatpush.bf16.msra.mxu0 %v7299
    %7370 = vmatpush.bf16.msra.mxu0 %v7298
    %7371 = vmatpush.bf16.msra.mxu0 %v7297
    %7372 = vmatpush.bf16.msra.mxu0 %v7296
    %7373 = vmatmul.bf16.gmra.mxu0 %v7089
    %v7374 = vpop.f32.mrf.mxu0
    %v7375 = vadd.f32 %v7362, %v7374
    %v7376 = vpop.f32.mrf.mxu0
    %7377 = vdwg.mxu0
    %7378 = vmatpush.bf16.msra.mxu0 %v7311
    %7379 = vmatpush.bf16.msra.mxu0 %v7310
    %7380 = vmatpush.bf16.msra.mxu0 %v7309
    %7381 = vmatpush.bf16.msra.mxu0 %v7308
    %7382 = vmatpush.bf16.msra.mxu0 %v7307
    %7383 = vmatpush.bf16.msra.mxu0 %v7306
    %7384 = vmatpush.bf16.msra.mxu0 %v7305
    %7385 = vmatpush.bf16.msra.mxu0 %v7304
    %7386 = vmatmul.bf16.gmra.mxu0 %v7090
    %v7387 = vpop.f32.mrf.mxu0
    %v7388 = vadd.f32 %v7375, %v7387
    %v7389 = vpop.f32.mrf.mxu0
    %7390 = vdwg.mxu0
    %7391 = vmatpush.bf16.msra.mxu0 %v7319
    %7392 = vmatpush.bf16.msra.mxu0 %v7318
    %7393 = vmatpush.bf16.msra.mxu0 %v7317
    %7394 = vmatpush.bf16.msra.mxu0 %v7316
    %7395 = vmatpush.bf16.msra.mxu0 %v7315
    %7396 = vmatpush.bf16.msra.mxu0 %v7314
    %7397 = vmatpush.bf16.msra.mxu0 %v7313
    %7398 = vmatpush.bf16.msra.mxu0 %v7312
    %7399 = vmatmul.bf16.gmra.mxu0 %v7091
    %v7400 = vpop.f32.mrf.mxu0
    %v7401 = vadd.f32 %v7388, %v7400
    %v7402 = vpop.f32.mrf.mxu0
    %7403 = vdwg.mxu0
    %7404 = vst [vmem:[#allocation14] sm:$0xff] %v7401
    // Predicated region
    $region58: #{tpu_custom_call.1} parent=1 // pred_check
      _
    $region59: #{tpu_custom_call.1} parent=1 // pred_check_branch
      %7406 = sbr.rel (0) target = $region61
    $region60: #{tpu_custom_call.1} parent=1 // pred_region
      %7408 = vsyncadd [#allocation4], 0
      %s7410 = sshll.u32 [#allocation14], 4
      %s7411 = int_to_ptr.vmem [resolvable:$true] %s7410
      %s7412 = sshll.u32 %s7, 4
      %s7413 = int_to_ptr.hbm [resolvable:$true] %s7412
      %7415 = dma.vmem_to_hbm [thread:$0]  %s7411, 128, %s7413, [#allocation4]
    $region61: #{tpu_custom_call.1} parent=1 // pred_fallthru
      _
    // Predicated region
    $region62: #{tpu_custom_call.1} parent=1 // pred_check
      _
    $region63: #{tpu_custom_call.1} parent=1 // pred_check_branch
      %7417 = sbr.rel (0) target = $region65
    $region64: #{tpu_custom_call.1} parent=1 // pred_region
      %7419 = dma.done [#allocation4], 128
    $region65: #{tpu_custom_call.1} parent=1 // pred_fallthru
      _
    %7420 = vsyncpa [#allocation3], 1
    %7421 = vsyncpa [#allocation6], 1
    %7422 = vsyncpa [#allocation9], 1
    %7423 = vsyncpa [#allocation12], 1
    %7424 = vsyncpa [#allocation4], 1

</llo_original>
